<compile_context>
chip_gen: v5e
topology: v5e:2x2
jax: 0.10.0
libtpu: 0.0.40
codegen_flags: <defaults>
</compile_context>

<pallas_src>
import functools
import math

import jax
import jax.numpy as jnp
from jax import lax
from jax.experimental import pallas as pl
from jax.experimental.pallas import tpu as pltpu

NEG_INF = -1e30  # safe in fp32 score path; masking happens before exp


def _pick_tile(total, target, align):
    """Largest multiple of `align` that divides `total` and is <= max(target, align)."""
    target = max(align, min(target, total))
    t = (target // align) * align
    while t >= align:
        if total % t == 0:
            return t
        t -= align
    return total


# ----------------------------------------------------------------------------
# Stage 1: K-streamed QKV projection + RoPE (+ q scaling)
# ----------------------------------------------------------------------------
def _qkv_rope_kernel(hid_ref, w_ref, cos_ref, sin_ref,
                     q_ref, k_ref, v_ref, acc_ref, *,
                     num_heads, num_kv_heads, head_dim, scaling):
    q_size = num_heads * head_dim
    kv_size = num_kv_heads * head_dim
    half = head_dim // 2
    kk = pl.program_id(1)

    @pl.when(kk == 0)
    def _init():
        acc_ref[...] = jnp.zeros_like(acc_ref)

    acc_ref[...] += jnp.dot(hid_ref[...], w_ref[...],
                            preferred_element_type=jnp.float32)

    @pl.when(kk == pl.num_programs(1) - 1)
    def _finalize():
        cos = cos_ref[...]          # [T, d]  fp32  (= [cos, cos])
        sin = sin_ref[...]          # [T, d]  fp32  (= [-sin, sin])
        acc = acc_ref[...]          # [T, q_size + 2*kv_size]  fp32

        # neox rotate-half as a single 128-lane rotation per head (XLU), done on
        # the flat layout via aligned lane slices -> no relayouts.
        def rope(seg):
            return seg * cos + pltpu.roll(seg, half, 1) * sin

        for h in range(num_heads):
            seg = acc[:, h * head_dim:(h + 1) * head_dim]
            q_ref[:, pl.ds(h * head_dim, head_dim)] = (
                rope(seg) * scaling).astype(q_ref.dtype)
        for h in range(num_kv_heads):
            seg = acc[:, q_size + h * head_dim:q_size + (h + 1) * head_dim]
            k_ref[:, pl.ds(h * head_dim, head_dim)] = rope(seg).astype(k_ref.dtype)
        v_ref[...] = acc[:, q_size + kv_size:].astype(v_ref.dtype)


# ----------------------------------------------------------------------------
# Stage 2: causal GQA flash attention (online softmax), seq-major flat layout
# ----------------------------------------------------------------------------
def _flash_attn_kernel(q_ref, k_ref, v_ref, o_ref,
                       m_ref, l_ref, acc_ref, *,
                       q_tile, kv_tile, rep, head_dim):
    qi = pl.program_id(1)
    ki = pl.program_id(2)
    n_kv_tiles = pl.num_programs(2)

    @pl.when(ki == 0)
    def _init():
        m_ref[...] = jnp.full(m_ref.shape, NEG_INF, dtype=jnp.float32)
        l_ref[...] = jnp.zeros(l_ref.shape, dtype=jnp.float32)
        acc_ref[...] = jnp.zeros(acc_ref.shape, dtype=jnp.float32)

    q_start = qi * q_tile
    k_start = ki * kv_tile
    q_last = q_start + (q_tile - 1)
    k_last = k_start + (kv_tile - 1)

    def update(masked):
        k = k_ref[...]                        # [Tk, d] bf16
        v = v_ref[...]                        # [Tk, d] bf16
        if masked:
            q_pos = q_start + lax.broadcasted_iota(jnp.int32, (q_tile, kv_tile), 0)
            k_pos = k_start + lax.broadcasted_iota(jnp.int32, (q_tile, kv_tile), 1)
            mask = k_pos <= q_pos             # shared across the rep heads
        for r in range(rep):
            qh = q_ref[:, pl.ds(r * head_dim, head_dim)]          # [Tq, d]
            s = lax.dot_general(qh, k, (((1,), (1,)), ((), ())),
                                preferred_element_type=jnp.float32)  # [Tq, Tk]
            if masked:
                s = jnp.where(mask, s, NEG_INF)
            rows = pl.ds(r * q_tile, q_tile)
            cols = pl.ds(r * head_dim, head_dim)
            m_prev = m_ref[rows, :]
            m_new = jnp.maximum(m_prev, jnp.max(s, axis=-1, keepdims=True))
            alpha = jnp.exp(m_prev - m_new)
            p = jnp.exp(s - m_new)
            l_ref[rows, :] = alpha * l_ref[rows, :] + jnp.sum(p, axis=-1,
                                                              keepdims=True)
            acc_ref[:, cols] = alpha * acc_ref[:, cols] + jnp.dot(
                p.astype(v.dtype), v, preferred_element_type=jnp.float32)
            m_ref[rows, :] = m_new

    # Diagonal tiles need the causal mask ...
    @pl.when((k_start <= q_last) & (k_last > q_start))
    def _diag_tile():
        update(masked=True)

    # ... fully-below-diagonal tiles skip the iota / compare / where entirely.
    @pl.when(k_last <= q_start)
    def _full_tile():
        update(masked=False)

    # Fully-masked tiles (k_start > q_last) do no compute; their DMA is also
    # skipped by the clamped KV index_map in the wrapper.

    @pl.when(ki == n_kv_tiles - 1)
    def _finalize():
        for r in range(rep):
            rows = pl.ds(r * q_tile, q_tile)
            cols = pl.ds(r * head_dim, head_dim)
            inv = pl.reciprocal(l_ref[rows, :], approx=True)
            o_ref[:, cols] = (acc_ref[:, cols] * inv).astype(o_ref.dtype)


# ----------------------------------------------------------------------------
# Stage 3: K-streamed output projection
# ----------------------------------------------------------------------------
def _out_proj_kernel(x_ref, w_ref, o_ref, acc_ref):
    kk = pl.program_id(1)

    @pl.when(kk == 0)
    def _init():
        acc_ref[...] = jnp.zeros_like(acc_ref)

    acc_ref[...] += jnp.dot(x_ref[...], w_ref[...],
                            preferred_element_type=jnp.float32)

    @pl.when(kk == pl.num_programs(1) - 1)
    def _finalize():
        o_ref[...] = acc_ref[...].astype(o_ref.dtype)


# ----------------------------------------------------------------------------
# Wrapper
# ----------------------------------------------------------------------------
def llama_attention_forward(positions, hidden_states, wqkv, wo, *,
                            num_heads, num_kv_heads, rope_theta=10000.0,
                            q_tile=128, kv_tile=256, tok_tile=512, k_tile=512,
                            vmem_limit_bytes=None):
    seq_len, hidden_size = hidden_states.shape
    head_dim = hidden_size // num_heads
    q_size = num_heads * head_dim
    kv_size = num_kv_heads * head_dim
    assert num_heads % num_kv_heads == 0
    rep = num_heads // num_kv_heads
    half = head_dim // 2
    qkv_out = q_size + 2 * kv_size
    dtype = hidden_states.dtype
    scaling = head_dim ** -0.5

    # Per-stage tile choices (decoupled: bigger token tiles for the bandwidth-
    # bound projections, MXU-friendly q/kv tiles for the attention).
    q_tile = _pick_tile(seq_len, q_tile, 128)
    kv_tile = _pick_tile(seq_len, kv_tile, 128)
    tok_tile = _pick_tile(seq_len, tok_tile, 128)
    k_tile1 = _pick_tile(hidden_size, k_tile, 128)
    k_tile3 = _pick_tile(q_size, k_tile, 128)
    n_q_tiles = seq_len // q_tile
    n_kv_tiles = seq_len // kv_tile
    n_tok_tiles = seq_len // tok_tile
    n_k1 = hidden_size // k_tile1
    n_k3 = q_size // k_tile3

    # RoPE tables, pre-expanded to the full head_dim so the kernel never slices
    # a half-lane: cos_full = [cos, cos], sin_signed = [-sin, sin].
    inv_freq = 1.0 / (rope_theta ** (jnp.arange(0, half, dtype=jnp.float32)
                                     * 2.0 / head_dim))
    ang = positions.astype(jnp.float32)[:, None] * inv_freq[None, :]   # [S, half]
    cos_full = jnp.concatenate([jnp.cos(ang), jnp.cos(ang)], axis=-1)  # [S, d]
    sin_signed = jnp.concatenate([-jnp.sin(ang), jnp.sin(ang)], axis=-1)

    # Pre-transpose weights to [in, out] (lane-dense MXU operands / outputs).
    wqkv_t = wqkv.T            # [H, qkv_out]
    wo_t = wo.T                # [q_size, H]

    cparams_proj = pltpu.CompilerParams(
        dimension_semantics=("parallel", "arbitrary"),
        vmem_limit_bytes=vmem_limit_bytes)

    # ---------------- Stage 1: QKV projection + RoPE ----------------
    qkv_kernel = functools.partial(
        _qkv_rope_kernel, num_heads=num_heads, num_kv_heads=num_kv_heads,
        head_dim=head_dim, scaling=scaling)
    q2, k2, v2 = pl.pallas_call(
        qkv_kernel,
        grid=(n_tok_tiles, n_k1),
        in_specs=[
            pl.BlockSpec((tok_tile, k_tile1), lambda i, k: (i, k)),
            pl.BlockSpec((k_tile1, qkv_out), lambda i, k: (k, 0)),     # streamed
            pl.BlockSpec((tok_tile, head_dim), lambda i, k: (i, 0)),
            pl.BlockSpec((tok_tile, head_dim), lambda i, k: (i, 0)),
        ],
        out_specs=(
            pl.BlockSpec((tok_tile, q_size), lambda i, k: (i, 0)),
            pl.BlockSpec((tok_tile, kv_size), lambda i, k: (i, 0)),
            pl.BlockSpec((tok_tile, kv_size), lambda i, k: (i, 0)),
        ),
        out_shape=(
            jax.ShapeDtypeStruct((seq_len, q_size), dtype),
            jax.ShapeDtypeStruct((seq_len, kv_size), dtype),
            jax.ShapeDtypeStruct((seq_len, kv_size), dtype),
        ),
        scratch_shapes=[pltpu.VMEM((tok_tile, qkv_out), jnp.float32)],
        compiler_params=cparams_proj,
    )(hidden_states, wqkv_t, cos_full, sin_signed)

    # ---------------- Stage 2: causal GQA flash attention ----------------
    # Seq-major flat layouts are indexed directly by the BlockSpecs — no HBM
    # transposes before or after the attention kernel.
    def q_map(g, qi, ki):
        return (qi, g)

    def kv_map(g, qi, ki):
        # Clamp causally-dead kv tiles onto the last contributing tile so the
        # pipeline sees a repeated block index and skips the DMA.
        last_ki = (qi * q_tile + (q_tile - 1)) // kv_tile
        return (jnp.minimum(ki, last_ki), g)

    flash_kernel = functools.partial(
        _flash_attn_kernel, q_tile=q_tile, kv_tile=kv_tile, rep=rep,
        head_dim=head_dim)
    cost = pl.CostEstimate(
        flops=2 * num_heads * seq_len * seq_len * head_dim,        # causal ~ 1/2
        transcendentals=num_heads * seq_len * seq_len // 2,
        bytes_accessed=2 * (2 * seq_len * q_size + 2 * seq_len * kv_size))
    attn = pl.pallas_call(
        flash_kernel,
        grid=(num_kv_heads, n_q_tiles, n_kv_tiles),
        in_specs=[
            pl.BlockSpec((q_tile, rep * head_dim), q_map),
            pl.BlockSpec((kv_tile, head_dim), kv_map),
            pl.BlockSpec((kv_tile, head_dim), kv_map),
        ],
        out_specs=pl.BlockSpec((q_tile, rep * head_dim), q_map),
        out_shape=jax.ShapeDtypeStruct((seq_len, q_size), dtype),
        scratch_shapes=[
            pltpu.VMEM((rep * q_tile, 1), jnp.float32),            # m
            pltpu.VMEM((rep * q_tile, 1), jnp.float32),            # l
            pltpu.VMEM((q_tile, rep * head_dim), jnp.float32),     # acc
        ],
        compiler_params=pltpu.CompilerParams(
            dimension_semantics=("parallel", "parallel", "arbitrary"),
            vmem_limit_bytes=vmem_limit_bytes),
        cost_estimate=cost,
    )(q2, k2, v2)

    # ---------------- Stage 3: output projection ----------------
    out = pl.pallas_call(
        _out_proj_kernel,
        grid=(n_tok_tiles, n_k3),
        in_specs=[
            pl.BlockSpec((tok_tile, k_tile3), lambda i, k: (i, k)),
            pl.BlockSpec((k_tile3, hidden_size), lambda i, k: (k, 0)),  # streamed
        ],
        out_specs=pl.BlockSpec((tok_tile, hidden_size), lambda i, k: (i, 0)),
        out_shape=jax.ShapeDtypeStruct((seq_len, hidden_size), dtype),
        scratch_shapes=[pltpu.VMEM((tok_tile, hidden_size), jnp.float32)],
        compiler_params=cparams_proj,
    )(attn, wo_t)
    return out


# ----------------------------------------------------------------------------
# Pure-JAX reference (mirrors the bf16 rounding points of the kernel path)
# ----------------------------------------------------------------------------
def _reference(positions, hidden_states, wqkv, wo, *, num_heads, num_kv_heads,
               rope_theta=10000.0):
    f32 = jnp.float32
    seq_len, hidden_size = hidden_states.shape
    head_dim = hidden_size // num_heads
    q_size = num_heads * head_dim
    kv_size = num_kv_heads * head_dim
    rep = num_heads // num_kv_heads
    half = head_dim // 2
    scaling = head_dim ** -0.5

    x = hidden_states.astype(f32)
    qkv = x @ wqkv.astype(f32).T
    q = qkv[:, :q_size].reshape(seq_len, num_heads, head_dim)
    k = qkv[:, q_size:q_size + kv_size].reshape(seq_len, num_kv_heads, head_dim)
    v = qkv[:, q_size + kv_size:].reshape(seq_len, num_kv_heads, head_dim)

    inv_freq = 1.0 / (rope_theta ** (jnp.arange(0, half, dtype=f32) * 2.0 / head_dim))
    ang = positions.astype(f32)[:, None] * inv_freq[None, :]
    cos, sin = jnp.cos(ang)[:, None, :], jnp.sin(ang)[:, None, :]

    def rope(t):
        t1, t2 = t[..., :half], t[..., half:]
        return jnp.concatenate([t1 * cos - t2 * sin, t2 * cos + t1 * sin], axis=-1)

    q = (rope(q) * scaling).astype(jnp.bfloat16).astype(f32)
    k = rope(k).astype(jnp.bfloat16).astype(f32)
    v = v.astype(jnp.bfloat16).astype(f32)

    k = jnp.repeat(k, rep, axis=1)
    v = jnp.repeat(v, rep, axis=1)
    scores = jnp.einsum('qhd,khd->hqk', q, k)
    mask = jnp.tril(jnp.ones((seq_len, seq_len), bool))
    scores = jnp.where(mask[None], scores, NEG_INF)
    p = jax.nn.softmax(scores, axis=-1)
    p = p.astype(jnp.bfloat16).astype(f32)
    attn = jnp.einsum('hqk,khd->qhd', p, v).reshape(seq_len, q_size)
    attn = attn.astype(jnp.bfloat16).astype(f32)
    return attn @ wo.astype(f32).T


if __name__ == "__main__":
    # Small but TPU-lane-aligned Llama-like config (GQA: 2 q heads per kv head).
    hidden_size = 256
    num_heads = 2
    num_kv_heads = 1
    head_dim = hidden_size // num_heads          # 128
    seq_len = 256

    key = jax.random.PRNGKey(0)
    k1, k2, k3 = jax.random.split(key, 3)

    hidden_states = jax.random.normal(
        k1, (seq_len, hidden_size), dtype=jnp.float32).astype(jnp.bfloat16)
    positions = jnp.arange(seq_len, dtype=jnp.int32)

    qkv_out = (num_heads + 2 * num_kv_heads) * head_dim
    wqkv = (jax.random.normal(k2, (qkv_out, hidden_size), dtype=jnp.float32)
            / math.sqrt(hidden_size)).astype(jnp.bfloat16)
    wo = (jax.random.normal(k3, (hidden_size, num_heads * head_dim), dtype=jnp.float32)
          / math.sqrt(num_heads * head_dim)).astype(jnp.bfloat16)

    out = llama_attention_forward(positions, hidden_states, wqkv, wo,
                                  num_heads=num_heads, num_kv_heads=num_kv_heads)
    out = jax.block_until_ready(out)

    ref = _reference(positions, hidden_states, wqkv, wo,
                     num_heads=num_heads, num_kv_heads=num_kv_heads)
    assert out.shape == (seq_len, hidden_size)
    max_err = float(jnp.max(jnp.abs(out.astype(jnp.float32) - ref)))
    assert jnp.allclose(out.astype(jnp.float32), ref, atol=5e-2, rtol=5e-2), \
        f"mismatch vs reference (max abs err {max_err})"

    print("KERNEL_OK")
</pallas_src>

<mosaic_0001>
module attributes {stable_mosaic.version = 11 : i64} {
  func.func @_qkv_rope_kernel(%arg0: i32, %arg1: i32, %arg2: memref<256x256xbf16, #tpu.memory_space<vmem>>, %arg3: memref<256x512xbf16, #tpu.memory_space<vmem>>, %arg4: memref<256x128xf32, #tpu.memory_space<vmem>>, %arg5: memref<256x128xf32, #tpu.memory_space<vmem>>, %arg6: memref<256x256xbf16, #tpu.memory_space<vmem>>, %arg7: memref<256x128xbf16, #tpu.memory_space<vmem>>, %arg8: memref<256x128xbf16, #tpu.memory_space<vmem>>, %arg9: memref<256x512xf32, #tpu.memory_space<vmem>>) attributes {dimension_semantics = [#tpu.dimension_semantics<parallel>, #tpu.dimension_semantics<arbitrary>], iteration_bounds = array<i64: 1, 1>, scalar_prefetch = 0 : i64, scratch_operands = 1 : i64, tpu.core_type = #tpu.core_type<tc>, window_params = [{transform_indices = @transform_0, window_bounds = array<i64: 256, 256>}, {transform_indices = @transform_1, window_bounds = array<i64: 256, 512>}, {transform_indices = @transform_2, window_bounds = array<i64: 256, 128>}, {transform_indices = @transform_3, window_bounds = array<i64: 256, 128>}, {transform_indices = @transform_4, window_bounds = array<i64: 256, 256>}, {transform_indices = @transform_5, window_bounds = array<i64: 256, 128>}, {transform_indices = @transform_6, window_bounds = array<i64: 256, 128>}]} {
    %c0_i32 = arith.constant 0 : i32
    %0 = arith.cmpi eq, %arg1, %c0_i32 : i32
    %1 = arith.extui %0 : i1 to i32
    %c0_i32_0 = arith.constant 0 : i32
    %2 = arith.cmpi ne, %1, %c0_i32_0 : i32
    scf.if %2 {
      %cst_10 = arith.constant 0.000000e+00 : f32
      %12 = vector.broadcast %cst_10 : f32 to vector<256x512xf32>
      %c0_11 = arith.constant 0 : index
      %c0_12 = arith.constant 0 : index
      %13 = vector.load %arg9[%c0_11, %c0_12] : memref<256x512xf32, #tpu.memory_space<vmem>>, vector<256x512xf32>
      tpu.vector_store %arg9[%c0_11, %c0_12], %12 {strides = array<i32>} : memref<256x512xf32, #tpu.memory_space<vmem>>, vector<256x512xf32>,
    } else {
    }
    %c0 = arith.constant 0 : index
    %c0_1 = arith.constant 0 : index
    %3 = vector.load %arg9[%c0, %c0_1] : memref<256x512xf32, #tpu.memory_space<vmem>>, vector<256x512xf32>
    %c0_2 = arith.constant 0 : index
    %c0_3 = arith.constant 0 : index
    %4 = vector.load %arg2[%c0_2, %c0_3] : memref<256x256xbf16, #tpu.memory_space<vmem>>, vector<256x256xbf16>
    %c0_4 = arith.constant 0 : index
    %c0_5 = arith.constant 0 : index
    %5 = vector.load %arg3[%c0_4, %c0_5] : memref<256x512xbf16, #tpu.memory_space<vmem>>, vector<256x512xbf16>
    %cst = arith.constant dense<0.000000e+00> : vector<256x512xf32>
    %6 = tpu.matmul %4, %5, %cst {dimension_numbers = #tpu.dot_dimension_numbers<[1], [0], [0], [1], [0, 0, 1, 1], [], []>} : vector<256x256xbf16>, vector<256x512xbf16>, vector<256x512xf32> -> vector<256x512xf32>
    %7 = arith.addf %3, %6 : vector<256x512xf32>
    %c0_6 = arith.constant 0 : index
    %c0_7 = arith.constant 0 : index
    %8 = vector.load %arg9[%c0_6, %c0_7] : memref<256x512xf32, #tpu.memory_space<vmem>>, vector<256x512xf32>
    tpu.vector_store %arg9[%c0_6, %c0_7], %7 {strides = array<i32>} : memref<256x512xf32, #tpu.memory_space<vmem>>, vector<256x512xf32>,
    %c0_i32_8 = arith.constant 0 : i32
    %9 = arith.cmpi eq, %arg1, %c0_i32_8 : i32
    %10 = arith.extui %9 : i1 to i32
    %c0_i32_9 = arith.constant 0 : i32
    %11 = arith.cmpi ne, %10, %c0_i32_9 : i32
    scf.if %11 {
      %c0_10 = arith.constant 0 : index
      %c0_11 = arith.constant 0 : index
      %12 = vector.load %arg4[%c0_10, %c0_11] : memref<256x128xf32, #tpu.memory_space<vmem>>, vector<256x128xf32>
      %c0_12 = arith.constant 0 : index
      %c0_13 = arith.constant 0 : index
      %13 = vector.load %arg5[%c0_12, %c0_13] : memref<256x128xf32, #tpu.memory_space<vmem>>, vector<256x128xf32>
      %c0_14 = arith.constant 0 : index
      %c0_15 = arith.constant 0 : index
      %14 = vector.load %arg9[%c0_14, %c0_15] : memref<256x512xf32, #tpu.memory_space<vmem>>, vector<256x512xf32>
      %15 = vector.extract_strided_slice %14 {offsets = [0, 0], sizes = [256, 128], strides = [1, 1]} : vector<256x512xf32> to vector<256x128xf32>
      %16 = arith.mulf %15, %12 : vector<256x128xf32>
      %c64_i32 = arith.constant 64 : i32
      %17 = tpu.dynamic_rotate %15 by %c64_i32 dim 1 : vector<256x128xf32>, i32 -> vector<256x128xf32>
      %18 = arith.mulf %17, %13 : vector<256x128xf32>
      %19 = arith.addf %16, %18 : vector<256x128xf32>
      %cst_16 = arith.constant 0.0883883461 : f32
      %20 = vector.broadcast %cst_16 : f32 to vector<256x128xf32>
      %21 = arith.mulf %19, %20 : vector<256x128xf32>
      %22 = arith.truncf %21 : vector<256x128xf32> to vector<256x128xbf16>
      %c0_17 = arith.constant 0 : index
      %c0_18 = arith.constant 0 : index
      %23 = vector.load %arg6[%c0_17, %c0_18] : memref<256x256xbf16, #tpu.memory_space<vmem>>, vector<256x128xbf16>
      tpu.vector_store %arg6[%c0_17, %c0_18], %22 {strides = array<i32>} : memref<256x256xbf16, #tpu.memory_space<vmem>>, vector<256x128xbf16>,
      %24 = vector.extract_strided_slice %14 {offsets = [0, 128], sizes = [256, 128], strides = [1, 1]} : vector<256x512xf32> to vector<256x128xf32>
      %25 = arith.mulf %24, %12 : vector<256x128xf32>
      %c64_i32_19 = arith.constant 64 : i32
      %26 = tpu.dynamic_rotate %24 by %c64_i32_19 dim 1 : vector<256x128xf32>, i32 -> vector<256x128xf32>
      %27 = arith.mulf %26, %13 : vector<256x128xf32>
      %28 = arith.addf %25, %27 : vector<256x128xf32>
      %cst_20 = arith.constant 0.0883883461 : f32
      %29 = vector.broadcast %cst_20 : f32 to vector<256x128xf32>
      %30 = arith.mulf %28, %29 : vector<256x128xf32>
      %31 = arith.truncf %30 : vector<256x128xf32> to vector<256x128xbf16>
      %c0_21 = arith.constant 0 : index
      %c128 = arith.constant 128 : index
      %32 = vector.load %arg6[%c0_21, %c128] : memref<256x256xbf16, #tpu.memory_space<vmem>>, vector<256x128xbf16>
      tpu.vector_store %arg6[%c0_21, %c128], %31 {strides = array<i32>} : memref<256x256xbf16, #tpu.memory_space<vmem>>, vector<256x128xbf16>,
      %33 = vector.extract_strided_slice %14 {offsets = [0, 256], sizes = [256, 128], strides = [1, 1]} : vector<256x512xf32> to vector<256x128xf32>
      %34 = arith.mulf %33, %12 : vector<256x128xf32>
      %c64_i32_22 = arith.constant 64 : i32
      %35 = tpu.dynamic_rotate %33 by %c64_i32_22 dim 1 : vector<256x128xf32>, i32 -> vector<256x128xf32>
      %36 = arith.mulf %35, %13 : vector<256x128xf32>
      %37 = arith.addf %34, %36 : vector<256x128xf32>
      %38 = arith.truncf %37 : vector<256x128xf32> to vector<256x128xbf16>
      %c0_23 = arith.constant 0 : index
      %c0_24 = arith.constant 0 : index
      %39 = vector.load %arg7[%c0_23, %c0_24] : memref<256x128xbf16, #tpu.memory_space<vmem>>, vector<256x128xbf16>
      tpu.vector_store %arg7[%c0_23, %c0_24], %38 {strides = array<i32>} : memref<256x128xbf16, #tpu.memory_space<vmem>>, vector<256x128xbf16>,
      %40 = vector.extract_strided_slice %14 {offsets = [0, 384], sizes = [256, 128], strides = [1, 1]} : vector<256x512xf32> to vector<256x128xf32>
      %41 = arith.truncf %40 : vector<256x128xf32> to vector<256x128xbf16>
      %c0_25 = arith.constant 0 : index
      %c0_26 = arith.constant 0 : index
      %42 = vector.load %arg8[%c0_25, %c0_26] : memref<256x128xbf16, #tpu.memory_space<vmem>>, vector<256x128xbf16>
      tpu.vector_store %arg8[%c0_25, %c0_26], %41 {strides = array<i32>} : memref<256x128xbf16, #tpu.memory_space<vmem>>, vector<256x128xbf16>,
    } else {
    }
    return
  }
  func.func @transform_0(%arg0: i32, %arg1: i32) -> (i32, i32) {
    %c0_i32 = arith.constant 0 : i32
    return %arg0, %arg1 : i32, i32
  }
  func.func @transform_1(%arg0: i32, %arg1: i32) -> (i32, i32) {
    %c0_i32 = arith.constant 0 : i32
    %c0_i32_0 = arith.constant 0 : i32
    return %arg1, %c0_i32 : i32, i32
  }
  func.func @transform_2(%arg0: i32, %arg1: i32) -> (i32, i32) {
    %c0_i32 = arith.constant 0 : i32
    %c0_i32_0 = arith.constant 0 : i32
    return %arg0, %c0_i32 : i32, i32
  }
  func.func @transform_3(%arg0: i32, %arg1: i32) -> (i32, i32) {
    %c0_i32 = arith.constant 0 : i32
    %c0_i32_0 = arith.constant 0 : i32
    return %arg0, %c0_i32 : i32, i32
  }
  func.func @transform_4(%arg0: i32, %arg1: i32) -> (i32, i32) {
    %c0_i32 = arith.constant 0 : i32
    %c0_i32_0 = arith.constant 0 : i32
    return %arg0, %c0_i32 : i32, i32
  }
  func.func @transform_5(%arg0: i32, %arg1: i32) -> (i32, i32) {
    %c0_i32 = arith.constant 0 : i32
    %c0_i32_0 = arith.constant 0 : i32
    return %arg0, %c0_i32 : i32, i32
  }
  func.func @transform_6(%arg0: i32, %arg1: i32) -> (i32, i32) {
    %c0_i32 = arith.constant 0 : i32
    %c0_i32_0 = arith.constant 0 : i32
    return %arg0, %c0_i32 : i32, i32
  }
}

</mosaic_0001>

<llo_original>
// kernel: tpu_custom_call.1
$region0: #{tpu_custom_call.1}
  #allocation0 [shape = 'u32[]', space=smem, size = 0x4, offset = 0x4, fixed_abs, tag = 'smem constant byte address 0x4 - core index']
  #allocation1 [shape = 'u32[72,128]{1,0:T(1,128)}', space=vmem, size = 0x9000, scoped, tag = 'internal scratch']
  #allocation2 [shape = 'f32[256,512]{1,0:T(8,128)}', space=vmem, size = 0x80000, scoped, tag = 'scratch operand']
  %s0 = inlined_call_operand.hbm [shape: bf16[256,256], index: 0, kind: input, shape index: {}]
  %s1 = inlined_call_operand.hbm [shape: bf16[256,512], index: 1, kind: input, shape index: {}]
  %s2 = inlined_call_operand.hbm [shape: f32[256,128], index: 2, kind: input, shape index: {}]
  %s3 = inlined_call_operand.hbm [shape: f32[256,128], index: 3, kind: input, shape index: {}]
  %s4 = inlined_call_operand.hbm [shape: bf16[256,256], index: 4, kind: output, shape index: {0}]
  %s5 = inlined_call_operand.hbm [shape: bf16[256,128], index: 5, kind: output, shape index: {1}]
  %s6 = inlined_call_operand.hbm [shape: bf16[256,128], index: 6, kind: output, shape index: {2}]
  %7 = xla_tuple %s4, %s5, %s6
  %s8 = sld [smem:[#allocation0]]
  $region66: #{tpu_custom_call.1} parent=0
    _
  %s10 = ssub.s32 1, %s8
  %s11 = scalar_select 0, %s10, %s8
  $region1: #{tpu_custom_call.1} parent=0
    #allocation3 [shape = 'u8[131072]{0}', space=vmem, size = 0x20000, scoped, tag = 'input window, operand 0, single buffered']
    #allocation4 [shape = 's32[1]{0}', space=sflag, size = 0x4, scoped, tag = 'scoped memory for tpu_custom_call.1']
    #allocation5 [shape = 's32[1]{0}', space=sflag, size = 0x4, scoped, tag = 'scoped memory for tpu_custom_call.1']
    #allocation6 [shape = 'u8[262144]{0}', space=vmem, size = 0x40000, scoped, tag = 'input window, operand 1, single buffered']
    #allocation7 [shape = 's32[1]{0}', space=sflag, size = 0x4, scoped, tag = 'scoped memory for tpu_custom_call.1']
    #allocation8 [shape = 'u8[131072]{0}', space=vmem, size = 0x20000, scoped, tag = 'input window, operand 2, single buffered']
    #allocation9 [shape = 'u8[131072]{0}', space=vmem, size = 0x20000, scoped, tag = 'input window, operand 3, single buffered']
    #allocation10 [shape = 's32[1]{0}', space=sflag, size = 0x4, scoped, tag = 'scoped memory for tpu_custom_call.1']
    #allocation11 [shape = 'u8[131072]{0}', space=vmem, size = 0x20000, scoped, tag = 'output window, operand 0, single buffered']
    #allocation12 [shape = 'u8[65536]{0}', space=vmem, size = 0x10000, scoped, tag = 'output window, operand 1, single buffered']
    #allocation13 [shape = 's32[1]{0}', space=sflag, size = 0x4, scoped, tag = 'scoped memory for tpu_custom_call.1']
    #allocation14 [shape = 'u8[65536]{0}', space=vmem, size = 0x10000, scoped, tag = 'output window, operand 2, single buffered']
    %12 = vsyncpa [#allocation4], 0
    %13 = vsyncpa [#allocation7], 0
    %14 = vsyncpa [#allocation10], 0
    %15 = vsyncpa [#allocation5], 0
    %16 = vsyncpa [#allocation13], 0
    // Predicated region
    $region2: #{tpu_custom_call.1} parent=1 // pred_check
      _
    $region3: #{tpu_custom_call.1} parent=1 // pred_check_branch
      %18 = sbr.rel (0) target = $region5
    $region4: #{tpu_custom_call.1} parent=1 // pred_region
      %20 = vsyncadd [#allocation4], 0
      %s21 = sshll.u32 %s0, 4
      %s22 = int_to_ptr.hbm [resolvable:$true] %s21
      %s23 = sshll.u32 [#allocation3], 4
      %s24 = int_to_ptr.vmem [resolvable:$true] %s23
      %29 = dma.hbm_to_vmem [thread:$0]  %s22, 4096, %s24, [#allocation4], 128, 128, 8
    $region5: #{tpu_custom_call.1} parent=1 // pred_fallthru
      _
    // Predicated region
    $region6: #{tpu_custom_call.1} parent=1 // pred_check
      _
    $region7: #{tpu_custom_call.1} parent=1 // pred_check_branch
      %31 = sbr.rel (0) target = $region9
    $region8: #{tpu_custom_call.1} parent=1 // pred_region
      %33 = vsyncadd [#allocation7], 0
      %s34 = sshll.u32 %s1, 4
      %s35 = int_to_ptr.hbm [resolvable:$true] %s34
      %s36 = sshll.u32 [#allocation6], 4
      %s37 = int_to_ptr.vmem [resolvable:$true] %s36
      %42 = dma.hbm_to_vmem [thread:$0]  %s35, 8192, %s37, [#allocation7], 256, 256, 16
    $region9: #{tpu_custom_call.1} parent=1 // pred_fallthru
      _
    // Predicated region
    $region10: #{tpu_custom_call.1} parent=1 // pred_check
      _
    $region11: #{tpu_custom_call.1} parent=1 // pred_check_branch
      %44 = sbr.rel (0) target = $region13
    $region12: #{tpu_custom_call.1} parent=1 // pred_region
      %46 = vsyncadd [#allocation7], 0
      %s47 = sshll.u32 %s2, 4
      %s48 = int_to_ptr.hbm [resolvable:$true] %s47
      %s49 = sshll.u32 [#allocation8], 4
      %s50 = int_to_ptr.vmem [resolvable:$true] %s49
      %55 = dma.hbm_to_vmem [thread:$0]  %s48, 4096, %s50, [#allocation7], 128, 128, 8
    $region13: #{tpu_custom_call.1} parent=1 // pred_fallthru
      _
    // Predicated region
    $region14: #{tpu_custom_call.1} parent=1 // pred_check
      _
    $region15: #{tpu_custom_call.1} parent=1 // pred_check_branch
      %57 = sbr.rel (0) target = $region17
    $region16: #{tpu_custom_call.1} parent=1 // pred_region
      %59 = vsyncadd [#allocation10], 0
      %s60 = sshll.u32 %s3, 4
      %s61 = int_to_ptr.hbm [resolvable:$true] %s60
      %s62 = sshll.u32 [#allocation9], 4
      %s63 = int_to_ptr.vmem [resolvable:$true] %s62
      %68 = dma.hbm_to_vmem [thread:$0]  %s61, 4096, %s63, [#allocation10], 128, 128, 8
    $region17: #{tpu_custom_call.1} parent=1 // pred_fallthru
      _
    // Predicated region
    $region18: #{tpu_custom_call.1} parent=1 // pred_check
      _
    $region19: #{tpu_custom_call.1} parent=1 // pred_check_branch
      %70 = sbr.rel (0) target = $region21
    $region20: #{tpu_custom_call.1} parent=1 // pred_region
      %72 = dma.done [#allocation4], 4096
    $region21: #{tpu_custom_call.1} parent=1 // pred_fallthru
      _
    // Predicated region
    $region22: #{tpu_custom_call.1} parent=1 // pred_check
      _
    $region23: #{tpu_custom_call.1} parent=1 // pred_check_branch
      %74 = sbr.rel (0) target = $region25
    $region24: #{tpu_custom_call.1} parent=1 // pred_region
      %76 = dma.done [#allocation7], 8192
    $region25: #{tpu_custom_call.1} parent=1 // pred_fallthru
      _
    // Predicated region
    $region26: #{tpu_custom_call.1} parent=1 // pred_check
      _
    $region27: #{tpu_custom_call.1} parent=1 // pred_check_branch
      %78 = sbr.rel (0) target = $region29
    $region28: #{tpu_custom_call.1} parent=1 // pred_region
      %80 = dma.done [#allocation7], 4096
    $region29: #{tpu_custom_call.1} parent=1 // pred_fallthru
      _
    // Predicated region
    $region30: #{tpu_custom_call.1} parent=1 // pred_check
      _
    $region31: #{tpu_custom_call.1} parent=1 // pred_check_branch
      %82 = sbr.rel (0) target = $region33
    $region32: #{tpu_custom_call.1} parent=1 // pred_region
      %84 = dma.done [#allocation10], 4096
    $region33: #{tpu_custom_call.1} parent=1 // pred_fallthru
      _
    %p85 = scmp.eq.s32.totalorder 0, 0
    // Predicated region
    $region34: #{tpu_custom_call.1} parent=1 // pred_check
      %p86 = pneg %p85
    $region35: #{tpu_custom_call.1} parent=1 // pred_check_branch
      %88 = sbr.rel (%p86) target = $region37
    $region36: #{tpu_custom_call.1} parent=1 // pred_region
      %89 = vst [vmem:[#allocation2] sm:$0xff] 0.0
      %90 = vst [vmem:[#allocation2 + $0x8] sm:$0xff] 0.0
      %91 = vst [vmem:[#allocation2 + $0x10] sm:$0xff] 0.0
      %92 = vst [vmem:[#allocation2 + $0x18] sm:$0xff] 0.0
      %93 = vst [vmem:[#allocation2 + $0x20] sm:$0xff] 0.0
      %94 = vst [vmem:[#allocation2 + $0x28] sm:$0xff] 0.0
      %95 = vst [vmem:[#allocation2 + $0x30] sm:$0xff] 0.0
      %96 = vst [vmem:[#allocation2 + $0x38] sm:$0xff] 0.0
      %97 = vst [vmem:[#allocation2 + $0x40] sm:$0xff] 0.0
      %98 = vst [vmem:[#allocation2 + $0x48] sm:$0xff] 0.0
      %99 = vst [vmem:[#allocation2 + $0x50] sm:$0xff] 0.0
      %100 = vst [vmem:[#allocation2 + $0x58] sm:$0xff] 0.0
      %101 = vst [vmem:[#allocation2 + $0x60] sm:$0xff] 0.0
      %102 = vst [vmem:[#allocation2 + $0x68] sm:$0xff] 0.0
      %103 = vst [vmem:[#allocation2 + $0x70] sm:$0xff] 0.0
      %104 = vst [vmem:[#allocation2 + $0x78] sm:$0xff] 0.0
      %105 = vst [vmem:[#allocation2 + $0x80] sm:$0xff] 0.0
      %106 = vst [vmem:[#allocation2 + $0x88] sm:$0xff] 0.0
      %107 = vst [vmem:[#allocation2 + $0x90] sm:$0xff] 0.0
      %108 = vst [vmem:[#allocation2 + $0x98] sm:$0xff] 0.0
      %109 = vst [vmem:[#allocation2 + $0xa0] sm:$0xff] 0.0
      %110 = vst [vmem:[#allocation2 + $0xa8] sm:$0xff] 0.0
      %111 = vst [vmem:[#allocation2 + $0xb0] sm:$0xff] 0.0
      %112 = vst [vmem:[#allocation2 + $0xb8] sm:$0xff] 0.0
      %113 = vst [vmem:[#allocation2 + $0xc0] sm:$0xff] 0.0
      %114 = vst [vmem:[#allocation2 + $0xc8] sm:$0xff] 0.0
      %115 = vst [vmem:[#allocation2 + $0xd0] sm:$0xff] 0.0
      %116 = vst [vmem:[#allocation2 + $0xd8] sm:$0xff] 0.0
      %117 = vst [vmem:[#allocation2 + $0xe0] sm:$0xff] 0.0
      %118 = vst [vmem:[#allocation2 + $0xe8] sm:$0xff] 0.0
      %119 = vst [vmem:[#allocation2 + $0xf0] sm:$0xff] 0.0
      %120 = vst [vmem:[#allocation2 + $0xf8] sm:$0xff] 0.0
      %121 = vst [vmem:[#allocation2 + $0x100] sm:$0xff] 0.0
      %122 = vst [vmem:[#allocation2 + $0x108] sm:$0xff] 0.0
      %123 = vst [vmem:[#allocation2 + $0x110] sm:$0xff] 0.0
      %124 = vst [vmem:[#allocation2 + $0x118] sm:$0xff] 0.0
      %125 = vst [vmem:[#allocation2 + $0x120] sm:$0xff] 0.0
      %126 = vst [vmem:[#allocation2 + $0x128] sm:$0xff] 0.0
      %127 = vst [vmem:[#allocation2 + $0x130] sm:$0xff] 0.0
      %128 = vst [vmem:[#allocation2 + $0x138] sm:$0xff] 0.0
      %129 = vst [vmem:[#allocation2 + $0x140] sm:$0xff] 0.0
      %130 = vst [vmem:[#allocation2 + $0x148] sm:$0xff] 0.0
      %131 = vst [vmem:[#allocation2 + $0x150] sm:$0xff] 0.0
      %132 = vst [vmem:[#allocation2 + $0x158] sm:$0xff] 0.0
      %133 = vst [vmem:[#allocation2 + $0x160] sm:$0xff] 0.0
      %134 = vst [vmem:[#allocation2 + $0x168] sm:$0xff] 0.0
      %135 = vst [vmem:[#allocation2 + $0x170] sm:$0xff] 0.0
      %136 = vst [vmem:[#allocation2 + $0x178] sm:$0xff] 0.0
      %137 = vst [vmem:[#allocation2 + $0x180] sm:$0xff] 0.0
      %138 = vst [vmem:[#allocation2 + $0x188] sm:$0xff] 0.0
      %139 = vst [vmem:[#allocation2 + $0x190] sm:$0xff] 0.0
      %140 = vst [vmem:[#allocation2 + $0x198] sm:$0xff] 0.0
      %141 = vst [vmem:[#allocation2 + $0x1a0] sm:$0xff] 0.0
      %142 = vst [vmem:[#allocation2 + $0x1a8] sm:$0xff] 0.0
      %143 = vst [vmem:[#allocation2 + $0x1b0] sm:$0xff] 0.0
      %144 = vst [vmem:[#allocation2 + $0x1b8] sm:$0xff] 0.0
      %145 = vst [vmem:[#allocation2 + $0x1c0] sm:$0xff] 0.0
      %146 = vst [vmem:[#allocation2 + $0x1c8] sm:$0xff] 0.0
      %147 = vst [vmem:[#allocation2 + $0x1d0] sm:$0xff] 0.0
      %148 = vst [vmem:[#allocation2 + $0x1d8] sm:$0xff] 0.0
      %149 = vst [vmem:[#allocation2 + $0x1e0] sm:$0xff] 0.0
      %150 = vst [vmem:[#allocation2 + $0x1e8] sm:$0xff] 0.0
      %151 = vst [vmem:[#allocation2 + $0x1f0] sm:$0xff] 0.0
      %152 = vst [vmem:[#allocation2 + $0x1f8] sm:$0xff] 0.0
      %153 = vst [vmem:[#allocation2 + $0x200] sm:$0xff] 0.0
      %154 = vst [vmem:[#allocation2 + $0x208] sm:$0xff] 0.0
      %155 = vst [vmem:[#allocation2 + $0x210] sm:$0xff] 0.0
      %156 = vst [vmem:[#allocation2 + $0x218] sm:$0xff] 0.0
      %157 = vst [vmem:[#allocation2 + $0x220] sm:$0xff] 0.0
      %158 = vst [vmem:[#allocation2 + $0x228] sm:$0xff] 0.0
      %159 = vst [vmem:[#allocation2 + $0x230] sm:$0xff] 0.0
      %160 = vst [vmem:[#allocation2 + $0x238] sm:$0xff] 0.0
      %161 = vst [vmem:[#allocation2 + $0x240] sm:$0xff] 0.0
      %162 = vst [vmem:[#allocation2 + $0x248] sm:$0xff] 0.0
      %163 = vst [vmem:[#allocation2 + $0x250] sm:$0xff] 0.0
      %164 = vst [vmem:[#allocation2 + $0x258] sm:$0xff] 0.0
      %165 = vst [vmem:[#allocation2 + $0x260] sm:$0xff] 0.0
      %166 = vst [vmem:[#allocation2 + $0x268] sm:$0xff] 0.0
      %167 = vst [vmem:[#allocation2 + $0x270] sm:$0xff] 0.0
      %168 = vst [vmem:[#allocation2 + $0x278] sm:$0xff] 0.0
      %169 = vst [vmem:[#allocation2 + $0x280] sm:$0xff] 0.0
      %170 = vst [vmem:[#allocation2 + $0x288] sm:$0xff] 0.0
      %171 = vst [vmem:[#allocation2 + $0x290] sm:$0xff] 0.0
      %172 = vst [vmem:[#allocation2 + $0x298] sm:$0xff] 0.0
      %173 = vst [vmem:[#allocation2 + $0x2a0] sm:$0xff] 0.0
      %174 = vst [vmem:[#allocation2 + $0x2a8] sm:$0xff] 0.0
      %175 = vst [vmem:[#allocation2 + $0x2b0] sm:$0xff] 0.0
      %176 = vst [vmem:[#allocation2 + $0x2b8] sm:$0xff] 0.0
      %177 = vst [vmem:[#allocation2 + $0x2c0] sm:$0xff] 0.0
      %178 = vst [vmem:[#allocation2 + $0x2c8] sm:$0xff] 0.0
      %179 = vst [vmem:[#allocation2 + $0x2d0] sm:$0xff] 0.0
      %180 = vst [vmem:[#allocation2 + $0x2d8] sm:$0xff] 0.0
      %181 = vst [vmem:[#allocation2 + $0x2e0] sm:$0xff] 0.0
      %182 = vst [vmem:[#allocation2 + $0x2e8] sm:$0xff] 0.0
      %183 = vst [vmem:[#allocation2 + $0x2f0] sm:$0xff] 0.0
      %184 = vst [vmem:[#allocation2 + $0x2f8] sm:$0xff] 0.0
      %185 = vst [vmem:[#allocation2 + $0x300] sm:$0xff] 0.0
      %186 = vst [vmem:[#allocation2 + $0x308] sm:$0xff] 0.0
      %187 = vst [vmem:[#allocation2 + $0x310] sm:$0xff] 0.0
      %188 = vst [vmem:[#allocation2 + $0x318] sm:$0xff] 0.0
      %189 = vst [vmem:[#allocation2 + $0x320] sm:$0xff] 0.0
      %190 = vst [vmem:[#allocation2 + $0x328] sm:$0xff] 0.0
      %191 = vst [vmem:[#allocation2 + $0x330] sm:$0xff] 0.0
      %192 = vst [vmem:[#allocation2 + $0x338] sm:$0xff] 0.0
      %193 = vst [vmem:[#allocation2 + $0x340] sm:$0xff] 0.0
      %194 = vst [vmem:[#allocation2 + $0x348] sm:$0xff] 0.0
      %195 = vst [vmem:[#allocation2 + $0x350] sm:$0xff] 0.0
      %196 = vst [vmem:[#allocation2 + $0x358] sm:$0xff] 0.0
      %197 = vst [vmem:[#allocation2 + $0x360] sm:$0xff] 0.0
      %198 = vst [vmem:[#allocation2 + $0x368] sm:$0xff] 0.0
      %199 = vst [vmem:[#allocation2 + $0x370] sm:$0xff] 0.0
      %200 = vst [vmem:[#allocation2 + $0x378] sm:$0xff] 0.0
      %201 = vst [vmem:[#allocation2 + $0x380] sm:$0xff] 0.0
      %202 = vst [vmem:[#allocation2 + $0x388] sm:$0xff] 0.0
      %203 = vst [vmem:[#allocation2 + $0x390] sm:$0xff] 0.0
      %204 = vst [vmem:[#allocation2 + $0x398] sm:$0xff] 0.0
      %205 = vst [vmem:[#allocation2 + $0x3a0] sm:$0xff] 0.0
      %206 = vst [vmem:[#allocation2 + $0x3a8] sm:$0xff] 0.0
      %207 = vst [vmem:[#allocation2 + $0x3b0] sm:$0xff] 0.0
      %208 = vst [vmem:[#allocation2 + $0x3b8] sm:$0xff] 0.0
      %209 = vst [vmem:[#allocation2 + $0x3c0] sm:$0xff] 0.0
      %210 = vst [vmem:[#allocation2 + $0x3c8] sm:$0xff] 0.0
      %211 = vst [vmem:[#allocation2 + $0x3d0] sm:$0xff] 0.0
      %212 = vst [vmem:[#allocation2 + $0x3d8] sm:$0xff] 0.0
      %213 = vst [vmem:[#allocation2 + $0x3e0] sm:$0xff] 0.0
      %214 = vst [vmem:[#allocation2 + $0x3e8] sm:$0xff] 0.0
      %215 = vst [vmem:[#allocation2 + $0x3f0] sm:$0xff] 0.0
      %216 = vst [vmem:[#allocation2 + $0x3f8] sm:$0xff] 0.0
    $region37: #{tpu_custom_call.1} parent=1 // pred_fallthru
      _
    %v217 = vld [vmem:[#allocation2] sm:$0xff]
    %v218 = vld [vmem:[#allocation2 + $0x8] sm:$0xff]
    %v219 = vld [vmem:[#allocation2 + $0x10] sm:$0xff]
    %v220 = vld [vmem:[#allocation2 + $0x18] sm:$0xff]
    %v221 = vld [vmem:[#allocation2 + $0x20] sm:$0xff]
    %v222 = vld [vmem:[#allocation2 + $0x28] sm:$0xff]
    %v223 = vld [vmem:[#allocation2 + $0x30] sm:$0xff]
    %v224 = vld [vmem:[#allocation2 + $0x38] sm:$0xff]
    %v225 = vld [vmem:[#allocation2 + $0x40] sm:$0xff]
    %v226 = vld [vmem:[#allocation2 + $0x48] sm:$0xff]
    %v227 = vld [vmem:[#allocation2 + $0x50] sm:$0xff]
    %v228 = vld [vmem:[#allocation2 + $0x58] sm:$0xff]
    %v229 = vld [vmem:[#allocation2 + $0x60] sm:$0xff]
    %v230 = vld [vmem:[#allocation2 + $0x68] sm:$0xff]
    %v231 = vld [vmem:[#allocation2 + $0x70] sm:$0xff]
    %v232 = vld [vmem:[#allocation2 + $0x78] sm:$0xff]
    %v233 = vld [vmem:[#allocation2 + $0x80] sm:$0xff]
    %v234 = vld [vmem:[#allocation2 + $0x88] sm:$0xff]
    %v235 = vld [vmem:[#allocation2 + $0x90] sm:$0xff]
    %v236 = vld [vmem:[#allocation2 + $0x98] sm:$0xff]
    %v237 = vld [vmem:[#allocation2 + $0xa0] sm:$0xff]
    %v238 = vld [vmem:[#allocation2 + $0xa8] sm:$0xff]
    %v239 = vld [vmem:[#allocation2 + $0xb0] sm:$0xff]
    %v240 = vld [vmem:[#allocation2 + $0xb8] sm:$0xff]
    %v241 = vld [vmem:[#allocation2 + $0xc0] sm:$0xff]
    %v242 = vld [vmem:[#allocation2 + $0xc8] sm:$0xff]
    %v243 = vld [vmem:[#allocation2 + $0xd0] sm:$0xff]
    %v244 = vld [vmem:[#allocation2 + $0xd8] sm:$0xff]
    %v245 = vld [vmem:[#allocation2 + $0xe0] sm:$0xff]
    %v246 = vld [vmem:[#allocation2 + $0xe8] sm:$0xff]
    %v247 = vld [vmem:[#allocation2 + $0xf0] sm:$0xff]
    %v248 = vld [vmem:[#allocation2 + $0xf8] sm:$0xff]
    %v249 = vld [vmem:[#allocation2 + $0x100] sm:$0xff]
    %v250 = vld [vmem:[#allocation2 + $0x108] sm:$0xff]
    %v251 = vld [vmem:[#allocation2 + $0x110] sm:$0xff]
    %v252 = vld [vmem:[#allocation2 + $0x118] sm:$0xff]
    %v253 = vld [vmem:[#allocation2 + $0x120] sm:$0xff]
    %v254 = vld [vmem:[#allocation2 + $0x128] sm:$0xff]
    %v255 = vld [vmem:[#allocation2 + $0x130] sm:$0xff]
    %v256 = vld [vmem:[#allocation2 + $0x138] sm:$0xff]
    %v257 = vld [vmem:[#allocation2 + $0x140] sm:$0xff]
    %v258 = vld [vmem:[#allocation2 + $0x148] sm:$0xff]
    %v259 = vld [vmem:[#allocation2 + $0x150] sm:$0xff]
    %v260 = vld [vmem:[#allocation2 + $0x158] sm:$0xff]
    %v261 = vld [vmem:[#allocation2 + $0x160] sm:$0xff]
    %v262 = vld [vmem:[#allocation2 + $0x168] sm:$0xff]
    %v263 = vld [vmem:[#allocation2 + $0x170] sm:$0xff]
    %v264 = vld [vmem:[#allocation2 + $0x178] sm:$0xff]
    %v265 = vld [vmem:[#allocation2 + $0x180] sm:$0xff]
    %v266 = vld [vmem:[#allocation2 + $0x188] sm:$0xff]
    %v267 = vld [vmem:[#allocation2 + $0x190] sm:$0xff]
    %v268 = vld [vmem:[#allocation2 + $0x198] sm:$0xff]
    %v269 = vld [vmem:[#allocation2 + $0x1a0] sm:$0xff]
    %v270 = vld [vmem:[#allocation2 + $0x1a8] sm:$0xff]
    %v271 = vld [vmem:[#allocation2 + $0x1b0] sm:$0xff]
    %v272 = vld [vmem:[#allocation2 + $0x1b8] sm:$0xff]
    %v273 = vld [vmem:[#allocation2 + $0x1c0] sm:$0xff]
    %v274 = vld [vmem:[#allocation2 + $0x1c8] sm:$0xff]
    %v275 = vld [vmem:[#allocation2 + $0x1d0] sm:$0xff]
    %v276 = vld [vmem:[#allocation2 + $0x1d8] sm:$0xff]
    %v277 = vld [vmem:[#allocation2 + $0x1e0] sm:$0xff]
    %v278 = vld [vmem:[#allocation2 + $0x1e8] sm:$0xff]
    %v279 = vld [vmem:[#allocation2 + $0x1f0] sm:$0xff]
    %v280 = vld [vmem:[#allocation2 + $0x1f8] sm:$0xff]
    %v281 = vld [vmem:[#allocation2 + $0x200] sm:$0xff]
    %v282 = vld [vmem:[#allocation2 + $0x208] sm:$0xff]
    %v283 = vld [vmem:[#allocation2 + $0x210] sm:$0xff]
    %v284 = vld [vmem:[#allocation2 + $0x218] sm:$0xff]
    %v285 = vld [vmem:[#allocation2 + $0x220] sm:$0xff]
    %v286 = vld [vmem:[#allocation2 + $0x228] sm:$0xff]
    %v287 = vld [vmem:[#allocation2 + $0x230] sm:$0xff]
    %v288 = vld [vmem:[#allocation2 + $0x238] sm:$0xff]
    %v289 = vld [vmem:[#allocation2 + $0x240] sm:$0xff]
    %v290 = vld [vmem:[#allocation2 + $0x248] sm:$0xff]
    %v291 = vld [vmem:[#allocation2 + $0x250] sm:$0xff]
    %v292 = vld [vmem:[#allocation2 + $0x258] sm:$0xff]
    %v293 = vld [vmem:[#allocation2 + $0x260] sm:$0xff]
    %v294 = vld [vmem:[#allocation2 + $0x268] sm:$0xff]
    %v295 = vld [vmem:[#allocation2 + $0x270] sm:$0xff]
    %v296 = vld [vmem:[#allocation2 + $0x278] sm:$0xff]
    %v297 = vld [vmem:[#allocation2 + $0x280] sm:$0xff]
    %v298 = vld [vmem:[#allocation2 + $0x288] sm:$0xff]
    %v299 = vld [vmem:[#allocation2 + $0x290] sm:$0xff]
    %v300 = vld [vmem:[#allocation2 + $0x298] sm:$0xff]
    %v301 = vld [vmem:[#allocation2 + $0x2a0] sm:$0xff]
    %v302 = vld [vmem:[#allocation2 + $0x2a8] sm:$0xff]
    %v303 = vld [vmem:[#allocation2 + $0x2b0] sm:$0xff]
    %v304 = vld [vmem:[#allocation2 + $0x2b8] sm:$0xff]
    %v305 = vld [vmem:[#allocation2 + $0x2c0] sm:$0xff]
    %v306 = vld [vmem:[#allocation2 + $0x2c8] sm:$0xff]
    %v307 = vld [vmem:[#allocation2 + $0x2d0] sm:$0xff]
    %v308 = vld [vmem:[#allocation2 + $0x2d8] sm:$0xff]
    %v309 = vld [vmem:[#allocation2 + $0x2e0] sm:$0xff]
    %v310 = vld [vmem:[#allocation2 + $0x2e8] sm:$0xff]
    %v311 = vld [vmem:[#allocation2 + $0x2f0] sm:$0xff]
    %v312 = vld [vmem:[#allocation2 + $0x2f8] sm:$0xff]
    %v313 = vld [vmem:[#allocation2 + $0x300] sm:$0xff]
    %v314 = vld [vmem:[#allocation2 + $0x308] sm:$0xff]
    %v315 = vld [vmem:[#allocation2 + $0x310] sm:$0xff]
    %v316 = vld [vmem:[#allocation2 + $0x318] sm:$0xff]
    %v317 = vld [vmem:[#allocation2 + $0x320] sm:$0xff]
    %v318 = vld [vmem:[#allocation2 + $0x328] sm:$0xff]
    %v319 = vld [vmem:[#allocation2 + $0x330] sm:$0xff]
    %v320 = vld [vmem:[#allocation2 + $0x338] sm:$0xff]
    %v321 = vld [vmem:[#allocation2 + $0x340] sm:$0xff]
    %v322 = vld [vmem:[#allocation2 + $0x348] sm:$0xff]
    %v323 = vld [vmem:[#allocation2 + $0x350] sm:$0xff]
    %v324 = vld [vmem:[#allocation2 + $0x358] sm:$0xff]
    %v325 = vld [vmem:[#allocation2 + $0x360] sm:$0xff]
    %v326 = vld [vmem:[#allocation2 + $0x368] sm:$0xff]
    %v327 = vld [vmem:[#allocation2 + $0x370] sm:$0xff]
    %v328 = vld [vmem:[#allocation2 + $0x378] sm:$0xff]
    %v329 = vld [vmem:[#allocation2 + $0x380] sm:$0xff]
    %v330 = vld [vmem:[#allocation2 + $0x388] sm:$0xff]
    %v331 = vld [vmem:[#allocation2 + $0x390] sm:$0xff]
    %v332 = vld [vmem:[#allocation2 + $0x398] sm:$0xff]
    %v333 = vld [vmem:[#allocation2 + $0x3a0] sm:$0xff]
    %v334 = vld [vmem:[#allocation2 + $0x3a8] sm:$0xff]
    %v335 = vld [vmem:[#allocation2 + $0x3b0] sm:$0xff]
    %v336 = vld [vmem:[#allocation2 + $0x3b8] sm:$0xff]
    %v337 = vld [vmem:[#allocation2 + $0x3c0] sm:$0xff]
    %v338 = vld [vmem:[#allocation2 + $0x3c8] sm:$0xff]
    %v339 = vld [vmem:[#allocation2 + $0x3d0] sm:$0xff]
    %v340 = vld [vmem:[#allocation2 + $0x3d8] sm:$0xff]
    %v341 = vld [vmem:[#allocation2 + $0x3e0] sm:$0xff]
    %v342 = vld [vmem:[#allocation2 + $0x3e8] sm:$0xff]
    %v343 = vld [vmem:[#allocation2 + $0x3f0] sm:$0xff]
    %v344 = vld [vmem:[#allocation2 + $0x3f8] sm:$0xff]
    %v345 = vld [vmem:[#allocation3] sm:$0xff]
    %v346 = vld [vmem:[#allocation3 + $0x8] sm:$0xff]
    %v347 = vld [vmem:[#allocation3 + $0x10] sm:$0xff]
    %v348 = vld [vmem:[#allocation3 + $0x18] sm:$0xff]
    %v349 = vld [vmem:[#allocation3 + $0x20] sm:$0xff]
    %v350 = vld [vmem:[#allocation3 + $0x28] sm:$0xff]
    %v351 = vld [vmem:[#allocation3 + $0x30] sm:$0xff]
    %v352 = vld [vmem:[#allocation3 + $0x38] sm:$0xff]
    %v353 = vld [vmem:[#allocation3 + $0x40] sm:$0xff]
    %v354 = vld [vmem:[#allocation3 + $0x48] sm:$0xff]
    %v355 = vld [vmem:[#allocation3 + $0x50] sm:$0xff]
    %v356 = vld [vmem:[#allocation3 + $0x58] sm:$0xff]
    %v357 = vld [vmem:[#allocation3 + $0x60] sm:$0xff]
    %v358 = vld [vmem:[#allocation3 + $0x68] sm:$0xff]
    %v359 = vld [vmem:[#allocation3 + $0x70] sm:$0xff]
    %v360 = vld [vmem:[#allocation3 + $0x78] sm:$0xff]
    %v361 = vld [vmem:[#allocation3 + $0x80] sm:$0xff]
    %v362 = vld [vmem:[#allocation3 + $0x88] sm:$0xff]
    %v363 = vld [vmem:[#allocation3 + $0x90] sm:$0xff]
    %v364 = vld [vmem:[#allocation3 + $0x98] sm:$0xff]
    %v365 = vld [vmem:[#allocation3 + $0xa0] sm:$0xff]
    %v366 = vld [vmem:[#allocation3 + $0xa8] sm:$0xff]
    %v367 = vld [vmem:[#allocation3 + $0xb0] sm:$0xff]
    %v368 = vld [vmem:[#allocation3 + $0xb8] sm:$0xff]
    %v369 = vld [vmem:[#allocation3 + $0xc0] sm:$0xff]
    %v370 = vld [vmem:[#allocation3 + $0xc8] sm:$0xff]
    %v371 = vld [vmem:[#allocation3 + $0xd0] sm:$0xff]
    %v372 = vld [vmem:[#allocation3 + $0xd8] sm:$0xff]
    %v373 = vld [vmem:[#allocation3 + $0xe0] sm:$0xff]
    %v374 = vld [vmem:[#allocation3 + $0xe8] sm:$0xff]
    %v375 = vld [vmem:[#allocation3 + $0xf0] sm:$0xff]
    %v376 = vld [vmem:[#allocation3 + $0xf8] sm:$0xff]
    %v377 = vld [vmem:[#allocation6] sm:$0xff]
    %v378 = vld [vmem:[#allocation6 + $0x8] sm:$0xff]
    %v379 = vld [vmem:[#allocation6 + $0x10] sm:$0xff]
    %v380 = vld [vmem:[#allocation6 + $0x18] sm:$0xff]
    %v381 = vld [vmem:[#allocation6 + $0x20] sm:$0xff]
    %v382 = vld [vmem:[#allocation6 + $0x28] sm:$0xff]
    %v383 = vld [vmem:[#allocation6 + $0x30] sm:$0xff]
    %v384 = vld [vmem:[#allocation6 + $0x38] sm:$0xff]
    %v385 = vld [vmem:[#allocation6 + $0x40] sm:$0xff]
    %v386 = vld [vmem:[#allocation6 + $0x48] sm:$0xff]
    %v387 = vld [vmem:[#allocation6 + $0x50] sm:$0xff]
    %v388 = vld [vmem:[#allocation6 + $0x58] sm:$0xff]
    %v389 = vld [vmem:[#allocation6 + $0x60] sm:$0xff]
    %v390 = vld [vmem:[#allocation6 + $0x68] sm:$0xff]
    %v391 = vld [vmem:[#allocation6 + $0x70] sm:$0xff]
    %v392 = vld [vmem:[#allocation6 + $0x78] sm:$0xff]
    %v393 = vld [vmem:[#allocation6 + $0x80] sm:$0xff]
    %v394 = vld [vmem:[#allocation6 + $0x88] sm:$0xff]
    %v395 = vld [vmem:[#allocation6 + $0x90] sm:$0xff]
    %v396 = vld [vmem:[#allocation6 + $0x98] sm:$0xff]
    %v397 = vld [vmem:[#allocation6 + $0xa0] sm:$0xff]
    %v398 = vld [vmem:[#allocation6 + $0xa8] sm:$0xff]
    %v399 = vld [vmem:[#allocation6 + $0xb0] sm:$0xff]
    %v400 = vld [vmem:[#allocation6 + $0xb8] sm:$0xff]
    %v401 = vld [vmem:[#allocation6 + $0xc0] sm:$0xff]
    %v402 = vld [vmem:[#allocation6 + $0xc8] sm:$0xff]
    %v403 = vld [vmem:[#allocation6 + $0xd0] sm:$0xff]
    %v404 = vld [vmem:[#allocation6 + $0xd8] sm:$0xff]
    %v405 = vld [vmem:[#allocation6 + $0xe0] sm:$0xff]
    %v406 = vld [vmem:[#allocation6 + $0xe8] sm:$0xff]
    %v407 = vld [vmem:[#allocation6 + $0xf0] sm:$0xff]
    %v408 = vld [vmem:[#allocation6 + $0xf8] sm:$0xff]
    %v409 = vld [vmem:[#allocation6 + $0x100] sm:$0xff]
    %v410 = vld [vmem:[#allocation6 + $0x108] sm:$0xff]
    %v411 = vld [vmem:[#allocation6 + $0x110] sm:$0xff]
    %v412 = vld [vmem:[#allocation6 + $0x118] sm:$0xff]
    %v413 = vld [vmem:[#allocation6 + $0x120] sm:$0xff]
    %v414 = vld [vmem:[#allocation6 + $0x128] sm:$0xff]
    %v415 = vld [vmem:[#allocation6 + $0x130] sm:$0xff]
    %v416 = vld [vmem:[#allocation6 + $0x138] sm:$0xff]
    %v417 = vld [vmem:[#allocation6 + $0x140] sm:$0xff]
    %v418 = vld [vmem:[#allocation6 + $0x148] sm:$0xff]
    %v419 = vld [vmem:[#allocation6 + $0x150] sm:$0xff]
    %v420 = vld [vmem:[#allocation6 + $0x158] sm:$0xff]
    %v421 = vld [vmem:[#allocation6 + $0x160] sm:$0xff]
    %v422 = vld [vmem:[#allocation6 + $0x168] sm:$0xff]
    %v423 = vld [vmem:[#allocation6 + $0x170] sm:$0xff]
    %v424 = vld [vmem:[#allocation6 + $0x178] sm:$0xff]
    %v425 = vld [vmem:[#allocation6 + $0x180] sm:$0xff]
    %v426 = vld [vmem:[#allocation6 + $0x188] sm:$0xff]
    %v427 = vld [vmem:[#allocation6 + $0x190] sm:$0xff]
    %v428 = vld [vmem:[#allocation6 + $0x198] sm:$0xff]
    %v429 = vld [vmem:[#allocation6 + $0x1a0] sm:$0xff]
    %v430 = vld [vmem:[#allocation6 + $0x1a8] sm:$0xff]
    %v431 = vld [vmem:[#allocation6 + $0x1b0] sm:$0xff]
    %v432 = vld [vmem:[#allocation6 + $0x1b8] sm:$0xff]
    %v433 = vld [vmem:[#allocation6 + $0x1c0] sm:$0xff]
    %v434 = vld [vmem:[#allocation6 + $0x1c8] sm:$0xff]
    %v435 = vld [vmem:[#allocation6 + $0x1d0] sm:$0xff]
    %v436 = vld [vmem:[#allocation6 + $0x1d8] sm:$0xff]
    %v437 = vld [vmem:[#allocation6 + $0x1e0] sm:$0xff]
    %v438 = vld [vmem:[#allocation6 + $0x1e8] sm:$0xff]
    %v439 = vld [vmem:[#allocation6 + $0x1f0] sm:$0xff]
    %v440 = vld [vmem:[#allocation6 + $0x1f8] sm:$0xff]
    %v473 = vunpack.c.l.b16 %v345
    %v474 = vunpack.c.h.b16 %v345
    %v475 = vunpack.c.l.b16 %v346
    %v476 = vunpack.c.h.b16 %v346
    %v477 = vunpack.c.l.b16 %v347
    %v478 = vunpack.c.h.b16 %v347
    %v479 = vunpack.c.l.b16 %v348
    %v480 = vunpack.c.h.b16 %v348
    %v481 = vunpack.c.l.b16 %v349
    %v482 = vunpack.c.h.b16 %v349
    %v483 = vunpack.c.l.b16 %v350
    %v484 = vunpack.c.h.b16 %v350
    %v485 = vunpack.c.l.b16 %v351
    %v486 = vunpack.c.h.b16 %v351
    %v487 = vunpack.c.l.b16 %v352
    %v488 = vunpack.c.h.b16 %v352
    %v489 = vunpack.c.l.b16 %v353
    %v490 = vunpack.c.h.b16 %v353
    %v491 = vunpack.c.l.b16 %v354
    %v492 = vunpack.c.h.b16 %v354
    %v493 = vunpack.c.l.b16 %v355
    %v494 = vunpack.c.h.b16 %v355
    %v495 = vunpack.c.l.b16 %v356
    %v496 = vunpack.c.h.b16 %v356
    %v497 = vunpack.c.l.b16 %v357
    %v498 = vunpack.c.h.b16 %v357
    %v499 = vunpack.c.l.b16 %v358
    %v500 = vunpack.c.h.b16 %v358
    %v501 = vunpack.c.l.b16 %v359
    %v502 = vunpack.c.h.b16 %v359
    %v503 = vunpack.c.l.b16 %v360
    %v504 = vunpack.c.h.b16 %v360
    %v505 = vunpack.c.l.b16 %v361
    %v506 = vunpack.c.h.b16 %v361
    %v507 = vunpack.c.l.b16 %v362
    %v508 = vunpack.c.h.b16 %v362
    %v509 = vunpack.c.l.b16 %v363
    %v510 = vunpack.c.h.b16 %v363
    %v511 = vunpack.c.l.b16 %v364
    %v512 = vunpack.c.h.b16 %v364
    %v513 = vunpack.c.l.b16 %v365
    %v514 = vunpack.c.h.b16 %v365
    %v515 = vunpack.c.l.b16 %v366
    %v516 = vunpack.c.h.b16 %v366
    %v517 = vunpack.c.l.b16 %v367
    %v518 = vunpack.c.h.b16 %v367
    %v519 = vunpack.c.l.b16 %v368
    %v520 = vunpack.c.h.b16 %v368
    %v521 = vunpack.c.l.b16 %v369
    %v522 = vunpack.c.h.b16 %v369
    %v523 = vunpack.c.l.b16 %v370
    %v524 = vunpack.c.h.b16 %v370
    %v525 = vunpack.c.l.b16 %v371
    %v526 = vunpack.c.h.b16 %v371
    %v527 = vunpack.c.l.b16 %v372
    %v528 = vunpack.c.h.b16 %v372
    %v529 = vunpack.c.l.b16 %v373
    %v530 = vunpack.c.h.b16 %v373
    %v531 = vunpack.c.l.b16 %v374
    %v532 = vunpack.c.h.b16 %v374
    %v533 = vunpack.c.l.b16 %v375
    %v534 = vunpack.c.h.b16 %v375
    %v535 = vunpack.c.l.b16 %v376
    %v536 = vunpack.c.h.b16 %v376
    %v537 = vpack.c.b16 %v475, %v473
    %v538 = vpack.c.b16 %v476, %v474
    %v539 = vpack.c.b16 %v479, %v477
    %v540 = vpack.c.b16 %v480, %v478
    %v541 = vpack.c.b16 %v483, %v481
    %v542 = vpack.c.b16 %v484, %v482
    %v543 = vpack.c.b16 %v487, %v485
    %v544 = vpack.c.b16 %v488, %v486
    %v545 = vpack.c.b16 %v491, %v489
    %v546 = vpack.c.b16 %v492, %v490
    %v547 = vpack.c.b16 %v495, %v493
    %v548 = vpack.c.b16 %v496, %v494
    %v549 = vpack.c.b16 %v499, %v497
    %v550 = vpack.c.b16 %v500, %v498
    %v551 = vpack.c.b16 %v503, %v501
    %v552 = vpack.c.b16 %v504, %v502
    %v553 = vpack.c.b16 %v507, %v505
    %v554 = vpack.c.b16 %v508, %v506
    %v555 = vpack.c.b16 %v511, %v509
    %v556 = vpack.c.b16 %v512, %v510
    %v557 = vpack.c.b16 %v515, %v513
    %v558 = vpack.c.b16 %v516, %v514
    %v559 = vpack.c.b16 %v519, %v517
    %v560 = vpack.c.b16 %v520, %v518
    %v561 = vpack.c.b16 %v523, %v521
    %v562 = vpack.c.b16 %v524, %v522
    %v563 = vpack.c.b16 %v527, %v525
    %v564 = vpack.c.b16 %v528, %v526
    %v565 = vpack.c.b16 %v531, %v529
    %v566 = vpack.c.b16 %v532, %v530
    %v567 = vpack.c.b16 %v535, %v533
    %v568 = vpack.c.b16 %v536, %v534
    %v665 = vunpack.c.l.b16 %v377
    %v666 = vunpack.c.h.b16 %v377
    %v667 = vunpack.c.l.b16 %v378
    %v668 = vunpack.c.h.b16 %v378
    %v669 = vunpack.c.l.b16 %v379
    %v670 = vunpack.c.h.b16 %v379
    %v671 = vunpack.c.l.b16 %v380
    %v672 = vunpack.c.h.b16 %v380
    %v673 = vunpack.c.l.b16 %v381
    %v674 = vunpack.c.h.b16 %v381
    %v675 = vunpack.c.l.b16 %v382
    %v676 = vunpack.c.h.b16 %v382
    %v677 = vunpack.c.l.b16 %v383
    %v678 = vunpack.c.h.b16 %v383
    %v679 = vunpack.c.l.b16 %v384
    %v680 = vunpack.c.h.b16 %v384
    %v681 = vunpack.c.l.b16 %v385
    %v682 = vunpack.c.h.b16 %v385
    %v683 = vunpack.c.l.b16 %v386
    %v684 = vunpack.c.h.b16 %v386
    %v685 = vunpack.c.l.b16 %v387
    %v686 = vunpack.c.h.b16 %v387
    %v687 = vunpack.c.l.b16 %v388
    %v688 = vunpack.c.h.b16 %v388
    %v689 = vunpack.c.l.b16 %v389
    %v690 = vunpack.c.h.b16 %v389
    %v691 = vunpack.c.l.b16 %v390
    %v692 = vunpack.c.h.b16 %v390
    %v693 = vunpack.c.l.b16 %v391
    %v694 = vunpack.c.h.b16 %v391
    %v695 = vunpack.c.l.b16 %v392
    %v696 = vunpack.c.h.b16 %v392
    %v697 = vunpack.c.l.b16 %v393
    %v698 = vunpack.c.h.b16 %v393
    %v699 = vunpack.c.l.b16 %v394
    %v700 = vunpack.c.h.b16 %v394
    %v701 = vunpack.c.l.b16 %v395
    %v702 = vunpack.c.h.b16 %v395
    %v703 = vunpack.c.l.b16 %v396
    %v704 = vunpack.c.h.b16 %v396
    %v705 = vunpack.c.l.b16 %v397
    %v706 = vunpack.c.h.b16 %v397
    %v707 = vunpack.c.l.b16 %v398
    %v708 = vunpack.c.h.b16 %v398
    %v709 = vunpack.c.l.b16 %v399
    %v710 = vunpack.c.h.b16 %v399
    %v711 = vunpack.c.l.b16 %v400
    %v712 = vunpack.c.h.b16 %v400
    %v713 = vunpack.c.l.b16 %v401
    %v714 = vunpack.c.h.b16 %v401
    %v715 = vunpack.c.l.b16 %v402
    %v716 = vunpack.c.h.b16 %v402
    %v717 = vunpack.c.l.b16 %v403
    %v718 = vunpack.c.h.b16 %v403
    %v719 = vunpack.c.l.b16 %v404
    %v720 = vunpack.c.h.b16 %v404
    %v721 = vunpack.c.l.b16 %v405
    %v722 = vunpack.c.h.b16 %v405
    %v723 = vunpack.c.l.b16 %v406
    %v724 = vunpack.c.h.b16 %v406
    %v725 = vunpack.c.l.b16 %v407
    %v726 = vunpack.c.h.b16 %v407
    %v727 = vunpack.c.l.b16 %v408
    %v728 = vunpack.c.h.b16 %v408
    %v729 = vunpack.c.l.b16 %v409
    %v730 = vunpack.c.h.b16 %v409
    %v731 = vunpack.c.l.b16 %v410
    %v732 = vunpack.c.h.b16 %v410
    %v733 = vunpack.c.l.b16 %v411
    %v734 = vunpack.c.h.b16 %v411
    %v735 = vunpack.c.l.b16 %v412
    %v736 = vunpack.c.h.b16 %v412
    %v737 = vunpack.c.l.b16 %v413
    %v738 = vunpack.c.h.b16 %v413
    %v739 = vunpack.c.l.b16 %v414
    %v740 = vunpack.c.h.b16 %v414
    %v741 = vunpack.c.l.b16 %v415
    %v742 = vunpack.c.h.b16 %v415
    %v743 = vunpack.c.l.b16 %v416
    %v744 = vunpack.c.h.b16 %v416
    %v745 = vunpack.c.l.b16 %v417
    %v746 = vunpack.c.h.b16 %v417
    %v747 = vunpack.c.l.b16 %v418
    %v748 = vunpack.c.h.b16 %v418
    %v749 = vunpack.c.l.b16 %v419
    %v750 = vunpack.c.h.b16 %v419
    %v751 = vunpack.c.l.b16 %v420
    %v752 = vunpack.c.h.b16 %v420
    %v753 = vunpack.c.l.b16 %v421
    %v754 = vunpack.c.h.b16 %v421
    %v755 = vunpack.c.l.b16 %v422
    %v756 = vunpack.c.h.b16 %v422
    %v757 = vunpack.c.l.b16 %v423
    %v758 = vunpack.c.h.b16 %v423
    %v759 = vunpack.c.l.b16 %v424
    %v760 = vunpack.c.h.b16 %v424
    %v761 = vunpack.c.l.b16 %v425
    %v762 = vunpack.c.h.b16 %v425
    %v763 = vunpack.c.l.b16 %v426
    %v764 = vunpack.c.h.b16 %v426
    %v765 = vunpack.c.l.b16 %v427
    %v766 = vunpack.c.h.b16 %v427
    %v767 = vunpack.c.l.b16 %v428
    %v768 = vunpack.c.h.b16 %v428
    %v769 = vunpack.c.l.b16 %v429
    %v770 = vunpack.c.h.b16 %v429
    %v771 = vunpack.c.l.b16 %v430
    %v772 = vunpack.c.h.b16 %v430
    %v773 = vunpack.c.l.b16 %v431
    %v774 = vunpack.c.h.b16 %v431
    %v775 = vunpack.c.l.b16 %v432
    %v776 = vunpack.c.h.b16 %v432
    %v777 = vunpack.c.l.b16 %v433
    %v778 = vunpack.c.h.b16 %v433
    %v779 = vunpack.c.l.b16 %v434
    %v780 = vunpack.c.h.b16 %v434
    %v781 = vunpack.c.l.b16 %v435
    %v782 = vunpack.c.h.b16 %v435
    %v783 = vunpack.c.l.b16 %v436
    %v784 = vunpack.c.h.b16 %v436
    %v785 = vunpack.c.l.b16 %v437
    %v786 = vunpack.c.h.b16 %v437
    %v787 = vunpack.c.l.b16 %v438
    %v788 = vunpack.c.h.b16 %v438
    %v789 = vunpack.c.l.b16 %v439
    %v790 = vunpack.c.h.b16 %v439
    %v791 = vunpack.c.l.b16 %v440
    %v792 = vunpack.c.h.b16 %v440
    %v793 = vpack.c.b16 %v669, %v665
    %v794 = vpack.c.b16 %v670, %v666
    %v795 = vpack.c.b16 %v671, %v667
    %v796 = vpack.c.b16 %v672, %v668
    %v797 = vpack.c.b16 %v677, %v673
    %v798 = vpack.c.b16 %v678, %v674
    %v799 = vpack.c.b16 %v679, %v675
    %v800 = vpack.c.b16 %v680, %v676
    %v801 = vpack.c.b16 %v685, %v681
    %v802 = vpack.c.b16 %v686, %v682
    %v803 = vpack.c.b16 %v687, %v683
    %v804 = vpack.c.b16 %v688, %v684
    %v805 = vpack.c.b16 %v693, %v689
    %v806 = vpack.c.b16 %v694, %v690
    %v807 = vpack.c.b16 %v695, %v691
    %v808 = vpack.c.b16 %v696, %v692
    %v809 = vpack.c.b16 %v701, %v697
    %v810 = vpack.c.b16 %v702, %v698
    %v811 = vpack.c.b16 %v703, %v699
    %v812 = vpack.c.b16 %v704, %v700
    %v813 = vpack.c.b16 %v709, %v705
    %v814 = vpack.c.b16 %v710, %v706
    %v815 = vpack.c.b16 %v711, %v707
    %v816 = vpack.c.b16 %v712, %v708
    %v817 = vpack.c.b16 %v717, %v713
    %v818 = vpack.c.b16 %v718, %v714
    %v819 = vpack.c.b16 %v719, %v715
    %v820 = vpack.c.b16 %v720, %v716
    %v821 = vpack.c.b16 %v725, %v721
    %v822 = vpack.c.b16 %v726, %v722
    %v823 = vpack.c.b16 %v727, %v723
    %v824 = vpack.c.b16 %v728, %v724
    %v825 = vpack.c.b16 %v733, %v729
    %v826 = vpack.c.b16 %v734, %v730
    %v827 = vpack.c.b16 %v735, %v731
    %v828 = vpack.c.b16 %v736, %v732
    %v829 = vpack.c.b16 %v741, %v737
    %v830 = vpack.c.b16 %v742, %v738
    %v831 = vpack.c.b16 %v743, %v739
    %v832 = vpack.c.b16 %v744, %v740
    %v833 = vpack.c.b16 %v749, %v745
    %v834 = vpack.c.b16 %v750, %v746
    %v835 = vpack.c.b16 %v751, %v747
    %v836 = vpack.c.b16 %v752, %v748
    %v837 = vpack.c.b16 %v757, %v753
    %v838 = vpack.c.b16 %v758, %v754
    %v839 = vpack.c.b16 %v759, %v755
    %v840 = vpack.c.b16 %v760, %v756
    %v841 = vpack.c.b16 %v765, %v761
    %v842 = vpack.c.b16 %v766, %v762
    %v843 = vpack.c.b16 %v767, %v763
    %v844 = vpack.c.b16 %v768, %v764
    %v845 = vpack.c.b16 %v773, %v769
    %v846 = vpack.c.b16 %v774, %v770
    %v847 = vpack.c.b16 %v775, %v771
    %v848 = vpack.c.b16 %v776, %v772
    %v849 = vpack.c.b16 %v781, %v777
    %v850 = vpack.c.b16 %v782, %v778
    %v851 = vpack.c.b16 %v783, %v779
    %v852 = vpack.c.b16 %v784, %v780
    %v853 = vpack.c.b16 %v789, %v785
    %v854 = vpack.c.b16 %v790, %v786
    %v855 = vpack.c.b16 %v791, %v787
    %v856 = vpack.c.b16 %v792, %v788
    %921 = vmatpush.bf16.msra.mxu0 %v821
    %922 = vmatpush.bf16.msra.mxu0 %v817
    %923 = vmatpush.bf16.msra.mxu0 %v813
    %924 = vmatpush.bf16.msra.mxu0 %v809
    %925 = vmatpush.bf16.msra.mxu0 %v805
    %926 = vmatpush.bf16.msra.mxu0 %v801
    %927 = vmatpush.bf16.msra.mxu0 %v797
    %928 = vmatpush.bf16.msra.mxu0 %v793
    %929 = vmatmul.bf16.gmra.mxu0 %v537
    %v930 = vpop.f32.mrf.mxu0
    %v931 = vadd.f32 0.0, %v930
    %v932 = vpop.f32.mrf.mxu0
    %v933 = vadd.f32 0.0, %v932
    %934 = vmatmul.bf16.gmra.mxu0 %v539
    %v935 = vpop.f32.mrf.mxu0
    %v936 = vadd.f32 0.0, %v935
    %v937 = vpop.f32.mrf.mxu0
    %v938 = vadd.f32 0.0, %v937
    %939 = vmatmul.bf16.gmra.mxu0 %v541
    %v940 = vpop.f32.mrf.mxu0
    %v941 = vadd.f32 0.0, %v940
    %v942 = vpop.f32.mrf.mxu0
    %v943 = vadd.f32 0.0, %v942
    %944 = vmatmul.bf16.gmra.mxu0 %v543
    %v945 = vpop.f32.mrf.mxu0
    %v946 = vadd.f32 0.0, %v945
    %v947 = vpop.f32.mrf.mxu0
    %v948 = vadd.f32 0.0, %v947
    %949 = vmatmul.bf16.gmra.mxu0 %v545
    %v950 = vpop.f32.mrf.mxu0
    %v951 = vadd.f32 0.0, %v950
    %v952 = vpop.f32.mrf.mxu0
    %v953 = vadd.f32 0.0, %v952
    %954 = vmatmul.bf16.gmra.mxu0 %v547
    %v955 = vpop.f32.mrf.mxu0
    %v956 = vadd.f32 0.0, %v955
    %v957 = vpop.f32.mrf.mxu0
    %v958 = vadd.f32 0.0, %v957
    %959 = vmatmul.bf16.gmra.mxu0 %v549
    %v960 = vpop.f32.mrf.mxu0
    %v961 = vadd.f32 0.0, %v960
    %v962 = vpop.f32.mrf.mxu0
    %v963 = vadd.f32 0.0, %v962
    %964 = vmatmul.bf16.gmra.mxu0 %v551
    %v965 = vpop.f32.mrf.mxu0
    %v966 = vadd.f32 0.0, %v965
    %v967 = vpop.f32.mrf.mxu0
    %v968 = vadd.f32 0.0, %v967
    %969 = vmatmul.bf16.gmra.mxu0 %v553
    %v970 = vpop.f32.mrf.mxu0
    %v971 = vadd.f32 0.0, %v970
    %v972 = vpop.f32.mrf.mxu0
    %v973 = vadd.f32 0.0, %v972
    %974 = vmatmul.bf16.gmra.mxu0 %v555
    %v975 = vpop.f32.mrf.mxu0
    %v976 = vadd.f32 0.0, %v975
    %v977 = vpop.f32.mrf.mxu0
    %v978 = vadd.f32 0.0, %v977
    %979 = vmatmul.bf16.gmra.mxu0 %v557
    %v980 = vpop.f32.mrf.mxu0
    %v981 = vadd.f32 0.0, %v980
    %v982 = vpop.f32.mrf.mxu0
    %v983 = vadd.f32 0.0, %v982
    %984 = vmatmul.bf16.gmra.mxu0 %v559
    %v985 = vpop.f32.mrf.mxu0
    %v986 = vadd.f32 0.0, %v985
    %v987 = vpop.f32.mrf.mxu0
    %v988 = vadd.f32 0.0, %v987
    %989 = vmatmul.bf16.gmra.mxu0 %v561
    %v990 = vpop.f32.mrf.mxu0
    %v991 = vadd.f32 0.0, %v990
    %v992 = vpop.f32.mrf.mxu0
    %v993 = vadd.f32 0.0, %v992
    %994 = vmatmul.bf16.gmra.mxu0 %v563
    %v995 = vpop.f32.mrf.mxu0
    %v996 = vadd.f32 0.0, %v995
    %v997 = vpop.f32.mrf.mxu0
    %v998 = vadd.f32 0.0, %v997
    %999 = vmatmul.bf16.gmra.mxu0 %v565
    %v1000 = vpop.f32.mrf.mxu0
    %v1001 = vadd.f32 0.0, %v1000
    %v1002 = vpop.f32.mrf.mxu0
    %v1003 = vadd.f32 0.0, %v1002
    %1004 = vmatmul.bf16.gmra.mxu0 %v567
    %v1005 = vpop.f32.mrf.mxu0
    %v1006 = vadd.f32 0.0, %v1005
    %v1007 = vpop.f32.mrf.mxu0
    %v1008 = vadd.f32 0.0, %v1007
    %1009 = vdwg.mxu0
    %1010 = vmatpush.bf16.msra.mxu0 %v853
    %1011 = vmatpush.bf16.msra.mxu0 %v849
    %1012 = vmatpush.bf16.msra.mxu0 %v845
    %1013 = vmatpush.bf16.msra.mxu0 %v841
    %1014 = vmatpush.bf16.msra.mxu0 %v837
    %1015 = vmatpush.bf16.msra.mxu0 %v833
    %1016 = vmatpush.bf16.msra.mxu0 %v829
    %1017 = vmatpush.bf16.msra.mxu0 %v825
    %1018 = vmatmul.bf16.gmra.mxu0 %v538
    %v1019 = vpop.f32.mrf.mxu0
    %v1020 = vadd.f32 %v931, %v1019
    %v1021 = vpop.f32.mrf.mxu0
    %v1022 = vadd.f32 %v933, %v1021
    %1023 = vmatmul.bf16.gmra.mxu0 %v540
    %v1024 = vpop.f32.mrf.mxu0
    %v1025 = vadd.f32 %v936, %v1024
    %v1026 = vpop.f32.mrf.mxu0
    %v1027 = vadd.f32 %v938, %v1026
    %1028 = vmatmul.bf16.gmra.mxu0 %v542
    %v1029 = vpop.f32.mrf.mxu0
    %v1030 = vadd.f32 %v941, %v1029
    %v1031 = vpop.f32.mrf.mxu0
    %v1032 = vadd.f32 %v943, %v1031
    %1033 = vmatmul.bf16.gmra.mxu0 %v544
    %v1034 = vpop.f32.mrf.mxu0
    %v1035 = vadd.f32 %v946, %v1034
    %v1036 = vpop.f32.mrf.mxu0
    %v1037 = vadd.f32 %v948, %v1036
    %1038 = vmatmul.bf16.gmra.mxu0 %v546
    %v1039 = vpop.f32.mrf.mxu0
    %v1040 = vadd.f32 %v951, %v1039
    %v1041 = vpop.f32.mrf.mxu0
    %v1042 = vadd.f32 %v953, %v1041
    %1043 = vmatmul.bf16.gmra.mxu0 %v548
    %v1044 = vpop.f32.mrf.mxu0
    %v1045 = vadd.f32 %v956, %v1044
    %v1046 = vpop.f32.mrf.mxu0
    %v1047 = vadd.f32 %v958, %v1046
    %1048 = vmatmul.bf16.gmra.mxu0 %v550
    %v1049 = vpop.f32.mrf.mxu0
    %v1050 = vadd.f32 %v961, %v1049
    %v1051 = vpop.f32.mrf.mxu0
    %v1052 = vadd.f32 %v963, %v1051
    %1053 = vmatmul.bf16.gmra.mxu0 %v552
    %v1054 = vpop.f32.mrf.mxu0
    %v1055 = vadd.f32 %v966, %v1054
    %v1056 = vpop.f32.mrf.mxu0
    %v1057 = vadd.f32 %v968, %v1056
    %1058 = vmatmul.bf16.gmra.mxu0 %v554
    %v1059 = vpop.f32.mrf.mxu0
    %v1060 = vadd.f32 %v971, %v1059
    %v1061 = vpop.f32.mrf.mxu0
    %v1062 = vadd.f32 %v973, %v1061
    %1063 = vmatmul.bf16.gmra.mxu0 %v556
    %v1064 = vpop.f32.mrf.mxu0
    %v1065 = vadd.f32 %v976, %v1064
    %v1066 = vpop.f32.mrf.mxu0
    %v1067 = vadd.f32 %v978, %v1066
    %1068 = vmatmul.bf16.gmra.mxu0 %v558
    %v1069 = vpop.f32.mrf.mxu0
    %v1070 = vadd.f32 %v981, %v1069
    %v1071 = vpop.f32.mrf.mxu0
    %v1072 = vadd.f32 %v983, %v1071
    %1073 = vmatmul.bf16.gmra.mxu0 %v560
    %v1074 = vpop.f32.mrf.mxu0
    %v1075 = vadd.f32 %v986, %v1074
    %v1076 = vpop.f32.mrf.mxu0
    %v1077 = vadd.f32 %v988, %v1076
    %1078 = vmatmul.bf16.gmra.mxu0 %v562
    %v1079 = vpop.f32.mrf.mxu0
    %v1080 = vadd.f32 %v991, %v1079
    %v1081 = vpop.f32.mrf.mxu0
    %v1082 = vadd.f32 %v993, %v1081
    %1083 = vmatmul.bf16.gmra.mxu0 %v564
    %v1084 = vpop.f32.mrf.mxu0
    %v1085 = vadd.f32 %v996, %v1084
    %v1086 = vpop.f32.mrf.mxu0
    %v1087 = vadd.f32 %v998, %v1086
    %1088 = vmatmul.bf16.gmra.mxu0 %v566
    %v1089 = vpop.f32.mrf.mxu0
    %v1090 = vadd.f32 %v1001, %v1089
    %v1091 = vpop.f32.mrf.mxu0
    %v1092 = vadd.f32 %v1003, %v1091
    %1093 = vmatmul.bf16.gmra.mxu0 %v568
    %v1094 = vpop.f32.mrf.mxu0
    %v1095 = vadd.f32 %v1006, %v1094
    %v1096 = vpop.f32.mrf.mxu0
    %v1097 = vadd.f32 %v1008, %v1096
    %1098 = vdwg.mxu0
    %1099 = vmatpush.bf16.msra.mxu0 %v822
    %1100 = vmatpush.bf16.msra.mxu0 %v818
    %1101 = vmatpush.bf16.msra.mxu0 %v814
    %1102 = vmatpush.bf16.msra.mxu0 %v810
    %1103 = vmatpush.bf16.msra.mxu0 %v806
    %1104 = vmatpush.bf16.msra.mxu0 %v802
    %1105 = vmatpush.bf16.msra.mxu0 %v798
    %1106 = vmatpush.bf16.msra.mxu0 %v794
    %1107 = vmatmul.bf16.gmra.mxu0 %v537
    %v1108 = vpop.f32.mrf.mxu0
    %v1109 = vadd.f32 0.0, %v1108
    %v1110 = vpop.f32.mrf.mxu0
    %v1111 = vadd.f32 0.0, %v1110
    %1112 = vmatmul.bf16.gmra.mxu0 %v539
    %v1113 = vpop.f32.mrf.mxu0
    %v1114 = vadd.f32 0.0, %v1113
    %v1115 = vpop.f32.mrf.mxu0
    %v1116 = vadd.f32 0.0, %v1115
    %1117 = vmatmul.bf16.gmra.mxu0 %v541
    %v1118 = vpop.f32.mrf.mxu0
    %v1119 = vadd.f32 0.0, %v1118
    %v1120 = vpop.f32.mrf.mxu0
    %v1121 = vadd.f32 0.0, %v1120
    %1122 = vmatmul.bf16.gmra.mxu0 %v543
    %v1123 = vpop.f32.mrf.mxu0
    %v1124 = vadd.f32 0.0, %v1123
    %v1125 = vpop.f32.mrf.mxu0
    %v1126 = vadd.f32 0.0, %v1125
    %1127 = vmatmul.bf16.gmra.mxu0 %v545
    %v1128 = vpop.f32.mrf.mxu0
    %v1129 = vadd.f32 0.0, %v1128
    %v1130 = vpop.f32.mrf.mxu0
    %v1131 = vadd.f32 0.0, %v1130
    %1132 = vmatmul.bf16.gmra.mxu0 %v547
    %v1133 = vpop.f32.mrf.mxu0
    %v1134 = vadd.f32 0.0, %v1133
    %v1135 = vpop.f32.mrf.mxu0
    %v1136 = vadd.f32 0.0, %v1135
    %1137 = vmatmul.bf16.gmra.mxu0 %v549
    %v1138 = vpop.f32.mrf.mxu0
    %v1139 = vadd.f32 0.0, %v1138
    %v1140 = vpop.f32.mrf.mxu0
    %v1141 = vadd.f32 0.0, %v1140
    %1142 = vmatmul.bf16.gmra.mxu0 %v551
    %v1143 = vpop.f32.mrf.mxu0
    %v1144 = vadd.f32 0.0, %v1143
    %v1145 = vpop.f32.mrf.mxu0
    %v1146 = vadd.f32 0.0, %v1145
    %1147 = vmatmul.bf16.gmra.mxu0 %v553
    %v1148 = vpop.f32.mrf.mxu0
    %v1149 = vadd.f32 0.0, %v1148
    %v1150 = vpop.f32.mrf.mxu0
    %v1151 = vadd.f32 0.0, %v1150
    %1152 = vmatmul.bf16.gmra.mxu0 %v555
    %v1153 = vpop.f32.mrf.mxu0
    %v1154 = vadd.f32 0.0, %v1153
    %v1155 = vpop.f32.mrf.mxu0
    %v1156 = vadd.f32 0.0, %v1155
    %1157 = vmatmul.bf16.gmra.mxu0 %v557
    %v1158 = vpop.f32.mrf.mxu0
    %v1159 = vadd.f32 0.0, %v1158
    %v1160 = vpop.f32.mrf.mxu0
    %v1161 = vadd.f32 0.0, %v1160
    %1162 = vmatmul.bf16.gmra.mxu0 %v559
    %v1163 = vpop.f32.mrf.mxu0
    %v1164 = vadd.f32 0.0, %v1163
    %v1165 = vpop.f32.mrf.mxu0
    %v1166 = vadd.f32 0.0, %v1165
    %1167 = vmatmul.bf16.gmra.mxu0 %v561
    %v1168 = vpop.f32.mrf.mxu0
    %v1169 = vadd.f32 0.0, %v1168
    %v1170 = vpop.f32.mrf.mxu0
    %v1171 = vadd.f32 0.0, %v1170
    %1172 = vmatmul.bf16.gmra.mxu0 %v563
    %v1173 = vpop.f32.mrf.mxu0
    %v1174 = vadd.f32 0.0, %v1173
    %v1175 = vpop.f32.mrf.mxu0
    %v1176 = vadd.f32 0.0, %v1175
    %1177 = vmatmul.bf16.gmra.mxu0 %v565
    %v1178 = vpop.f32.mrf.mxu0
    %v1179 = vadd.f32 0.0, %v1178
    %v1180 = vpop.f32.mrf.mxu0
    %v1181 = vadd.f32 0.0, %v1180
    %1182 = vmatmul.bf16.gmra.mxu0 %v567
    %v1183 = vpop.f32.mrf.mxu0
    %v1184 = vadd.f32 0.0, %v1183
    %v1185 = vpop.f32.mrf.mxu0
    %v1186 = vadd.f32 0.0, %v1185
    %1187 = vdwg.mxu0
    %1188 = vmatpush.bf16.msra.mxu0 %v854
    %1189 = vmatpush.bf16.msra.mxu0 %v850
    %1190 = vmatpush.bf16.msra.mxu0 %v846
    %1191 = vmatpush.bf16.msra.mxu0 %v842
    %1192 = vmatpush.bf16.msra.mxu0 %v838
    %1193 = vmatpush.bf16.msra.mxu0 %v834
    %1194 = vmatpush.bf16.msra.mxu0 %v830
    %1195 = vmatpush.bf16.msra.mxu0 %v826
    %1196 = vmatmul.bf16.gmra.mxu0 %v538
    %v1197 = vpop.f32.mrf.mxu0
    %v1198 = vadd.f32 %v1109, %v1197
    %v1199 = vpop.f32.mrf.mxu0
    %v1200 = vadd.f32 %v1111, %v1199
    %1201 = vmatmul.bf16.gmra.mxu0 %v540
    %v1202 = vpop.f32.mrf.mxu0
    %v1203 = vadd.f32 %v1114, %v1202
    %v1204 = vpop.f32.mrf.mxu0
    %v1205 = vadd.f32 %v1116, %v1204
    %1206 = vmatmul.bf16.gmra.mxu0 %v542
    %v1207 = vpop.f32.mrf.mxu0
    %v1208 = vadd.f32 %v1119, %v1207
    %v1209 = vpop.f32.mrf.mxu0
    %v1210 = vadd.f32 %v1121, %v1209
    %1211 = vmatmul.bf16.gmra.mxu0 %v544
    %v1212 = vpop.f32.mrf.mxu0
    %v1213 = vadd.f32 %v1124, %v1212
    %v1214 = vpop.f32.mrf.mxu0
    %v1215 = vadd.f32 %v1126, %v1214
    %1216 = vmatmul.bf16.gmra.mxu0 %v546
    %v1217 = vpop.f32.mrf.mxu0
    %v1218 = vadd.f32 %v1129, %v1217
    %v1219 = vpop.f32.mrf.mxu0
    %v1220 = vadd.f32 %v1131, %v1219
    %1221 = vmatmul.bf16.gmra.mxu0 %v548
    %v1222 = vpop.f32.mrf.mxu0
    %v1223 = vadd.f32 %v1134, %v1222
    %v1224 = vpop.f32.mrf.mxu0
    %v1225 = vadd.f32 %v1136, %v1224
    %1226 = vmatmul.bf16.gmra.mxu0 %v550
    %v1227 = vpop.f32.mrf.mxu0
    %v1228 = vadd.f32 %v1139, %v1227
    %v1229 = vpop.f32.mrf.mxu0
    %v1230 = vadd.f32 %v1141, %v1229
    %1231 = vmatmul.bf16.gmra.mxu0 %v552
    %v1232 = vpop.f32.mrf.mxu0
    %v1233 = vadd.f32 %v1144, %v1232
    %v1234 = vpop.f32.mrf.mxu0
    %v1235 = vadd.f32 %v1146, %v1234
    %1236 = vmatmul.bf16.gmra.mxu0 %v554
    %v1237 = vpop.f32.mrf.mxu0
    %v1238 = vadd.f32 %v1149, %v1237
    %v1239 = vpop.f32.mrf.mxu0
    %v1240 = vadd.f32 %v1151, %v1239
    %1241 = vmatmul.bf16.gmra.mxu0 %v556
    %v1242 = vpop.f32.mrf.mxu0
    %v1243 = vadd.f32 %v1154, %v1242
    %v1244 = vpop.f32.mrf.mxu0
    %v1245 = vadd.f32 %v1156, %v1244
    %1246 = vmatmul.bf16.gmra.mxu0 %v558
    %v1247 = vpop.f32.mrf.mxu0
    %v1248 = vadd.f32 %v1159, %v1247
    %v1249 = vpop.f32.mrf.mxu0
    %v1250 = vadd.f32 %v1161, %v1249
    %1251 = vmatmul.bf16.gmra.mxu0 %v560
    %v1252 = vpop.f32.mrf.mxu0
    %v1253 = vadd.f32 %v1164, %v1252
    %v1254 = vpop.f32.mrf.mxu0
    %v1255 = vadd.f32 %v1166, %v1254
    %1256 = vmatmul.bf16.gmra.mxu0 %v562
    %v1257 = vpop.f32.mrf.mxu0
    %v1258 = vadd.f32 %v1169, %v1257
    %v1259 = vpop.f32.mrf.mxu0
    %v1260 = vadd.f32 %v1171, %v1259
    %1261 = vmatmul.bf16.gmra.mxu0 %v564
    %v1262 = vpop.f32.mrf.mxu0
    %v1263 = vadd.f32 %v1174, %v1262
    %v1264 = vpop.f32.mrf.mxu0
    %v1265 = vadd.f32 %v1176, %v1264
    %1266 = vmatmul.bf16.gmra.mxu0 %v566
    %v1267 = vpop.f32.mrf.mxu0
    %v1268 = vadd.f32 %v1179, %v1267
    %v1269 = vpop.f32.mrf.mxu0
    %v1270 = vadd.f32 %v1181, %v1269
    %1271 = vmatmul.bf16.gmra.mxu0 %v568
    %v1272 = vpop.f32.mrf.mxu0
    %v1273 = vadd.f32 %v1184, %v1272
    %v1274 = vpop.f32.mrf.mxu0
    %v1275 = vadd.f32 %v1186, %v1274
    %1276 = vdwg.mxu0
    %1277 = vmatpush.bf16.msra.mxu0 %v823
    %1278 = vmatpush.bf16.msra.mxu0 %v819
    %1279 = vmatpush.bf16.msra.mxu0 %v815
    %1280 = vmatpush.bf16.msra.mxu0 %v811
    %1281 = vmatpush.bf16.msra.mxu0 %v807
    %1282 = vmatpush.bf16.msra.mxu0 %v803
    %1283 = vmatpush.bf16.msra.mxu0 %v799
    %1284 = vmatpush.bf16.msra.mxu0 %v795
    %1285 = vmatmul.bf16.gmra.mxu0 %v537
    %v1286 = vpop.f32.mrf.mxu0
    %v1287 = vadd.f32 0.0, %v1286
    %v1288 = vpop.f32.mrf.mxu0
    %v1289 = vadd.f32 0.0, %v1288
    %1290 = vmatmul.bf16.gmra.mxu0 %v539
    %v1291 = vpop.f32.mrf.mxu0
    %v1292 = vadd.f32 0.0, %v1291
    %v1293 = vpop.f32.mrf.mxu0
    %v1294 = vadd.f32 0.0, %v1293
    %1295 = vmatmul.bf16.gmra.mxu0 %v541
    %v1296 = vpop.f32.mrf.mxu0
    %v1297 = vadd.f32 0.0, %v1296
    %v1298 = vpop.f32.mrf.mxu0
    %v1299 = vadd.f32 0.0, %v1298
    %1300 = vmatmul.bf16.gmra.mxu0 %v543
    %v1301 = vpop.f32.mrf.mxu0
    %v1302 = vadd.f32 0.0, %v1301
    %v1303 = vpop.f32.mrf.mxu0
    %v1304 = vadd.f32 0.0, %v1303
    %1305 = vmatmul.bf16.gmra.mxu0 %v545
    %v1306 = vpop.f32.mrf.mxu0
    %v1307 = vadd.f32 0.0, %v1306
    %v1308 = vpop.f32.mrf.mxu0
    %v1309 = vadd.f32 0.0, %v1308
    %1310 = vmatmul.bf16.gmra.mxu0 %v547
    %v1311 = vpop.f32.mrf.mxu0
    %v1312 = vadd.f32 0.0, %v1311
    %v1313 = vpop.f32.mrf.mxu0
    %v1314 = vadd.f32 0.0, %v1313
    %1315 = vmatmul.bf16.gmra.mxu0 %v549
    %v1316 = vpop.f32.mrf.mxu0
    %v1317 = vadd.f32 0.0, %v1316
    %v1318 = vpop.f32.mrf.mxu0
    %v1319 = vadd.f32 0.0, %v1318
    %1320 = vmatmul.bf16.gmra.mxu0 %v551
    %v1321 = vpop.f32.mrf.mxu0
    %v1322 = vadd.f32 0.0, %v1321
    %v1323 = vpop.f32.mrf.mxu0
    %v1324 = vadd.f32 0.0, %v1323
    %1325 = vmatmul.bf16.gmra.mxu0 %v553
    %v1326 = vpop.f32.mrf.mxu0
    %v1327 = vadd.f32 0.0, %v1326
    %v1328 = vpop.f32.mrf.mxu0
    %v1329 = vadd.f32 0.0, %v1328
    %1330 = vmatmul.bf16.gmra.mxu0 %v555
    %v1331 = vpop.f32.mrf.mxu0
    %v1332 = vadd.f32 0.0, %v1331
    %v1333 = vpop.f32.mrf.mxu0
    %v1334 = vadd.f32 0.0, %v1333
    %1335 = vmatmul.bf16.gmra.mxu0 %v557
    %v1336 = vpop.f32.mrf.mxu0
    %v1337 = vadd.f32 0.0, %v1336
    %v1338 = vpop.f32.mrf.mxu0
    %v1339 = vadd.f32 0.0, %v1338
    %1340 = vmatmul.bf16.gmra.mxu0 %v559
    %v1341 = vpop.f32.mrf.mxu0
    %v1342 = vadd.f32 0.0, %v1341
    %v1343 = vpop.f32.mrf.mxu0
    %v1344 = vadd.f32 0.0, %v1343
    %1345 = vmatmul.bf16.gmra.mxu0 %v561
    %v1346 = vpop.f32.mrf.mxu0
    %v1347 = vadd.f32 0.0, %v1346
    %v1348 = vpop.f32.mrf.mxu0
    %v1349 = vadd.f32 0.0, %v1348
    %1350 = vmatmul.bf16.gmra.mxu0 %v563
    %v1351 = vpop.f32.mrf.mxu0
    %v1352 = vadd.f32 0.0, %v1351
    %v1353 = vpop.f32.mrf.mxu0
    %v1354 = vadd.f32 0.0, %v1353
    %1355 = vmatmul.bf16.gmra.mxu0 %v565
    %v1356 = vpop.f32.mrf.mxu0
    %v1357 = vadd.f32 0.0, %v1356
    %v1358 = vpop.f32.mrf.mxu0
    %v1359 = vadd.f32 0.0, %v1358
    %1360 = vmatmul.bf16.gmra.mxu0 %v567
    %v1361 = vpop.f32.mrf.mxu0
    %v1362 = vadd.f32 0.0, %v1361
    %v1363 = vpop.f32.mrf.mxu0
    %v1364 = vadd.f32 0.0, %v1363
    %1365 = vdwg.mxu0
    %1366 = vmatpush.bf16.msra.mxu0 %v855
    %1367 = vmatpush.bf16.msra.mxu0 %v851
    %1368 = vmatpush.bf16.msra.mxu0 %v847
    %1369 = vmatpush.bf16.msra.mxu0 %v843
    %1370 = vmatpush.bf16.msra.mxu0 %v839
    %1371 = vmatpush.bf16.msra.mxu0 %v835
    %1372 = vmatpush.bf16.msra.mxu0 %v831
    %1373 = vmatpush.bf16.msra.mxu0 %v827
    %1374 = vmatmul.bf16.gmra.mxu0 %v538
    %v1375 = vpop.f32.mrf.mxu0
    %v1376 = vadd.f32 %v1287, %v1375
    %v1377 = vpop.f32.mrf.mxu0
    %v1378 = vadd.f32 %v1289, %v1377
    %1379 = vmatmul.bf16.gmra.mxu0 %v540
    %v1380 = vpop.f32.mrf.mxu0
    %v1381 = vadd.f32 %v1292, %v1380
    %v1382 = vpop.f32.mrf.mxu0
    %v1383 = vadd.f32 %v1294, %v1382
    %1384 = vmatmul.bf16.gmra.mxu0 %v542
    %v1385 = vpop.f32.mrf.mxu0
    %v1386 = vadd.f32 %v1297, %v1385
    %v1387 = vpop.f32.mrf.mxu0
    %v1388 = vadd.f32 %v1299, %v1387
    %1389 = vmatmul.bf16.gmra.mxu0 %v544
    %v1390 = vpop.f32.mrf.mxu0
    %v1391 = vadd.f32 %v1302, %v1390
    %v1392 = vpop.f32.mrf.mxu0
    %v1393 = vadd.f32 %v1304, %v1392
    %1394 = vmatmul.bf16.gmra.mxu0 %v546
    %v1395 = vpop.f32.mrf.mxu0
    %v1396 = vadd.f32 %v1307, %v1395
    %v1397 = vpop.f32.mrf.mxu0
    %v1398 = vadd.f32 %v1309, %v1397
    %1399 = vmatmul.bf16.gmra.mxu0 %v548
    %v1400 = vpop.f32.mrf.mxu0
    %v1401 = vadd.f32 %v1312, %v1400
    %v1402 = vpop.f32.mrf.mxu0
    %v1403 = vadd.f32 %v1314, %v1402
    %1404 = vmatmul.bf16.gmra.mxu0 %v550
    %v1405 = vpop.f32.mrf.mxu0
    %v1406 = vadd.f32 %v1317, %v1405
    %v1407 = vpop.f32.mrf.mxu0
    %v1408 = vadd.f32 %v1319, %v1407
    %1409 = vmatmul.bf16.gmra.mxu0 %v552
    %v1410 = vpop.f32.mrf.mxu0
    %v1411 = vadd.f32 %v1322, %v1410
    %v1412 = vpop.f32.mrf.mxu0
    %v1413 = vadd.f32 %v1324, %v1412
    %1414 = vmatmul.bf16.gmra.mxu0 %v554
    %v1415 = vpop.f32.mrf.mxu0
    %v1416 = vadd.f32 %v1327, %v1415
    %v1417 = vpop.f32.mrf.mxu0
    %v1418 = vadd.f32 %v1329, %v1417
    %1419 = vmatmul.bf16.gmra.mxu0 %v556
    %v1420 = vpop.f32.mrf.mxu0
    %v1421 = vadd.f32 %v1332, %v1420
    %v1422 = vpop.f32.mrf.mxu0
    %v1423 = vadd.f32 %v1334, %v1422
    %1424 = vmatmul.bf16.gmra.mxu0 %v558
    %v1425 = vpop.f32.mrf.mxu0
    %v1426 = vadd.f32 %v1337, %v1425
    %v1427 = vpop.f32.mrf.mxu0
    %v1428 = vadd.f32 %v1339, %v1427
    %1429 = vmatmul.bf16.gmra.mxu0 %v560
    %v1430 = vpop.f32.mrf.mxu0
    %v1431 = vadd.f32 %v1342, %v1430
    %v1432 = vpop.f32.mrf.mxu0
    %v1433 = vadd.f32 %v1344, %v1432
    %1434 = vmatmul.bf16.gmra.mxu0 %v562
    %v1435 = vpop.f32.mrf.mxu0
    %v1436 = vadd.f32 %v1347, %v1435
    %v1437 = vpop.f32.mrf.mxu0
    %v1438 = vadd.f32 %v1349, %v1437
    %1439 = vmatmul.bf16.gmra.mxu0 %v564
    %v1440 = vpop.f32.mrf.mxu0
    %v1441 = vadd.f32 %v1352, %v1440
    %v1442 = vpop.f32.mrf.mxu0
    %v1443 = vadd.f32 %v1354, %v1442
    %1444 = vmatmul.bf16.gmra.mxu0 %v566
    %v1445 = vpop.f32.mrf.mxu0
    %v1446 = vadd.f32 %v1357, %v1445
    %v1447 = vpop.f32.mrf.mxu0
    %v1448 = vadd.f32 %v1359, %v1447
    %1449 = vmatmul.bf16.gmra.mxu0 %v568
    %v1450 = vpop.f32.mrf.mxu0
    %v1451 = vadd.f32 %v1362, %v1450
    %v1452 = vpop.f32.mrf.mxu0
    %v1453 = vadd.f32 %v1364, %v1452
    %1454 = vdwg.mxu0
    %1455 = vmatpush.bf16.msra.mxu0 %v824
    %1456 = vmatpush.bf16.msra.mxu0 %v820
    %1457 = vmatpush.bf16.msra.mxu0 %v816
    %1458 = vmatpush.bf16.msra.mxu0 %v812
    %1459 = vmatpush.bf16.msra.mxu0 %v808
    %1460 = vmatpush.bf16.msra.mxu0 %v804
    %1461 = vmatpush.bf16.msra.mxu0 %v800
    %1462 = vmatpush.bf16.msra.mxu0 %v796
    %1463 = vmatmul.bf16.gmra.mxu0 %v537
    %v1464 = vpop.f32.mrf.mxu0
    %v1465 = vadd.f32 0.0, %v1464
    %v1466 = vpop.f32.mrf.mxu0
    %v1467 = vadd.f32 0.0, %v1466
    %1468 = vmatmul.bf16.gmra.mxu0 %v539
    %v1469 = vpop.f32.mrf.mxu0
    %v1470 = vadd.f32 0.0, %v1469
    %v1471 = vpop.f32.mrf.mxu0
    %v1472 = vadd.f32 0.0, %v1471
    %1473 = vmatmul.bf16.gmra.mxu0 %v541
    %v1474 = vpop.f32.mrf.mxu0
    %v1475 = vadd.f32 0.0, %v1474
    %v1476 = vpop.f32.mrf.mxu0
    %v1477 = vadd.f32 0.0, %v1476
    %1478 = vmatmul.bf16.gmra.mxu0 %v543
    %v1479 = vpop.f32.mrf.mxu0
    %v1480 = vadd.f32 0.0, %v1479
    %v1481 = vpop.f32.mrf.mxu0
    %v1482 = vadd.f32 0.0, %v1481
    %1483 = vmatmul.bf16.gmra.mxu0 %v545
    %v1484 = vpop.f32.mrf.mxu0
    %v1485 = vadd.f32 0.0, %v1484
    %v1486 = vpop.f32.mrf.mxu0
    %v1487 = vadd.f32 0.0, %v1486
    %1488 = vmatmul.bf16.gmra.mxu0 %v547
    %v1489 = vpop.f32.mrf.mxu0
    %v1490 = vadd.f32 0.0, %v1489
    %v1491 = vpop.f32.mrf.mxu0
    %v1492 = vadd.f32 0.0, %v1491
    %1493 = vmatmul.bf16.gmra.mxu0 %v549
    %v1494 = vpop.f32.mrf.mxu0
    %v1495 = vadd.f32 0.0, %v1494
    %v1496 = vpop.f32.mrf.mxu0
    %v1497 = vadd.f32 0.0, %v1496
    %1498 = vmatmul.bf16.gmra.mxu0 %v551
    %v1499 = vpop.f32.mrf.mxu0
    %v1500 = vadd.f32 0.0, %v1499
    %v1501 = vpop.f32.mrf.mxu0
    %v1502 = vadd.f32 0.0, %v1501
    %1503 = vmatmul.bf16.gmra.mxu0 %v553
    %v1504 = vpop.f32.mrf.mxu0
    %v1505 = vadd.f32 0.0, %v1504
    %v1506 = vpop.f32.mrf.mxu0
    %v1507 = vadd.f32 0.0, %v1506
    %1508 = vmatmul.bf16.gmra.mxu0 %v555
    %v1509 = vpop.f32.mrf.mxu0
    %v1510 = vadd.f32 0.0, %v1509
    %v1511 = vpop.f32.mrf.mxu0
    %v1512 = vadd.f32 0.0, %v1511
    %1513 = vmatmul.bf16.gmra.mxu0 %v557
    %v1514 = vpop.f32.mrf.mxu0
    %v1515 = vadd.f32 0.0, %v1514
    %v1516 = vpop.f32.mrf.mxu0
    %v1517 = vadd.f32 0.0, %v1516
    %1518 = vmatmul.bf16.gmra.mxu0 %v559
    %v1519 = vpop.f32.mrf.mxu0
    %v1520 = vadd.f32 0.0, %v1519
    %v1521 = vpop.f32.mrf.mxu0
    %v1522 = vadd.f32 0.0, %v1521
    %1523 = vmatmul.bf16.gmra.mxu0 %v561
    %v1524 = vpop.f32.mrf.mxu0
    %v1525 = vadd.f32 0.0, %v1524
    %v1526 = vpop.f32.mrf.mxu0
    %v1527 = vadd.f32 0.0, %v1526
    %1528 = vmatmul.bf16.gmra.mxu0 %v563
    %v1529 = vpop.f32.mrf.mxu0
    %v1530 = vadd.f32 0.0, %v1529
    %v1531 = vpop.f32.mrf.mxu0
    %v1532 = vadd.f32 0.0, %v1531
    %1533 = vmatmul.bf16.gmra.mxu0 %v565
    %v1534 = vpop.f32.mrf.mxu0
    %v1535 = vadd.f32 0.0, %v1534
    %v1536 = vpop.f32.mrf.mxu0
    %v1537 = vadd.f32 0.0, %v1536
    %1538 = vmatmul.bf16.gmra.mxu0 %v567
    %v1539 = vpop.f32.mrf.mxu0
    %v1540 = vadd.f32 0.0, %v1539
    %v1541 = vpop.f32.mrf.mxu0
    %v1542 = vadd.f32 0.0, %v1541
    %1543 = vdwg.mxu0
    %1544 = vmatpush.bf16.msra.mxu0 %v856
    %1545 = vmatpush.bf16.msra.mxu0 %v852
    %1546 = vmatpush.bf16.msra.mxu0 %v848
    %1547 = vmatpush.bf16.msra.mxu0 %v844
    %1548 = vmatpush.bf16.msra.mxu0 %v840
    %1549 = vmatpush.bf16.msra.mxu0 %v836
    %1550 = vmatpush.bf16.msra.mxu0 %v832
    %1551 = vmatpush.bf16.msra.mxu0 %v828
    %1552 = vmatmul.bf16.gmra.mxu0 %v538
    %v1553 = vpop.f32.mrf.mxu0
    %v1554 = vadd.f32 %v1465, %v1553
    %v1555 = vpop.f32.mrf.mxu0
    %v1556 = vadd.f32 %v1467, %v1555
    %1557 = vmatmul.bf16.gmra.mxu0 %v540
    %v1558 = vpop.f32.mrf.mxu0
    %v1559 = vadd.f32 %v1470, %v1558
    %v1560 = vpop.f32.mrf.mxu0
    %v1561 = vadd.f32 %v1472, %v1560
    %1562 = vmatmul.bf16.gmra.mxu0 %v542
    %v1563 = vpop.f32.mrf.mxu0
    %v1564 = vadd.f32 %v1475, %v1563
    %v1565 = vpop.f32.mrf.mxu0
    %v1566 = vadd.f32 %v1477, %v1565
    %1567 = vmatmul.bf16.gmra.mxu0 %v544
    %v1568 = vpop.f32.mrf.mxu0
    %v1569 = vadd.f32 %v1480, %v1568
    %v1570 = vpop.f32.mrf.mxu0
    %v1571 = vadd.f32 %v1482, %v1570
    %1572 = vmatmul.bf16.gmra.mxu0 %v546
    %v1573 = vpop.f32.mrf.mxu0
    %v1574 = vadd.f32 %v1485, %v1573
    %v1575 = vpop.f32.mrf.mxu0
    %v1576 = vadd.f32 %v1487, %v1575
    %1577 = vmatmul.bf16.gmra.mxu0 %v548
    %v1578 = vpop.f32.mrf.mxu0
    %v1579 = vadd.f32 %v1490, %v1578
    %v1580 = vpop.f32.mrf.mxu0
    %v1581 = vadd.f32 %v1492, %v1580
    %1582 = vmatmul.bf16.gmra.mxu0 %v550
    %v1583 = vpop.f32.mrf.mxu0
    %v1584 = vadd.f32 %v1495, %v1583
    %v1585 = vpop.f32.mrf.mxu0
    %v1586 = vadd.f32 %v1497, %v1585
    %1587 = vmatmul.bf16.gmra.mxu0 %v552
    %v1588 = vpop.f32.mrf.mxu0
    %v1589 = vadd.f32 %v1500, %v1588
    %v1590 = vpop.f32.mrf.mxu0
    %v1591 = vadd.f32 %v1502, %v1590
    %1592 = vmatmul.bf16.gmra.mxu0 %v554
    %v1593 = vpop.f32.mrf.mxu0
    %v1594 = vadd.f32 %v1505, %v1593
    %v1595 = vpop.f32.mrf.mxu0
    %v1596 = vadd.f32 %v1507, %v1595
    %1597 = vmatmul.bf16.gmra.mxu0 %v556
    %v1598 = vpop.f32.mrf.mxu0
    %v1599 = vadd.f32 %v1510, %v1598
    %v1600 = vpop.f32.mrf.mxu0
    %v1601 = vadd.f32 %v1512, %v1600
    %1602 = vmatmul.bf16.gmra.mxu0 %v558
    %v1603 = vpop.f32.mrf.mxu0
    %v1604 = vadd.f32 %v1515, %v1603
    %v1605 = vpop.f32.mrf.mxu0
    %v1606 = vadd.f32 %v1517, %v1605
    %1607 = vmatmul.bf16.gmra.mxu0 %v560
    %v1608 = vpop.f32.mrf.mxu0
    %v1609 = vadd.f32 %v1520, %v1608
    %v1610 = vpop.f32.mrf.mxu0
    %v1611 = vadd.f32 %v1522, %v1610
    %1612 = vmatmul.bf16.gmra.mxu0 %v562
    %v1613 = vpop.f32.mrf.mxu0
    %v1614 = vadd.f32 %v1525, %v1613
    %v1615 = vpop.f32.mrf.mxu0
    %v1616 = vadd.f32 %v1527, %v1615
    %1617 = vmatmul.bf16.gmra.mxu0 %v564
    %v1618 = vpop.f32.mrf.mxu0
    %v1619 = vadd.f32 %v1530, %v1618
    %v1620 = vpop.f32.mrf.mxu0
    %v1621 = vadd.f32 %v1532, %v1620
    %1622 = vmatmul.bf16.gmra.mxu0 %v566
    %v1623 = vpop.f32.mrf.mxu0
    %v1624 = vadd.f32 %v1535, %v1623
    %v1625 = vpop.f32.mrf.mxu0
    %v1626 = vadd.f32 %v1537, %v1625
    %1627 = vmatmul.bf16.gmra.mxu0 %v568
    %v1628 = vpop.f32.mrf.mxu0
    %v1629 = vadd.f32 %v1540, %v1628
    %v1630 = vpop.f32.mrf.mxu0
    %v1631 = vadd.f32 %v1542, %v1630
    %1632 = vdwg.mxu0
    %v1633 = vadd.f32 %v217, %v1020
    %v1634 = vadd.f32 %v218, %v1198
    %v1635 = vadd.f32 %v219, %v1376
    %v1636 = vadd.f32 %v220, %v1554
    %v1637 = vadd.f32 %v221, %v1022
    %v1638 = vadd.f32 %v222, %v1200
    %v1639 = vadd.f32 %v223, %v1378
    %v1640 = vadd.f32 %v224, %v1556
    %v1641 = vadd.f32 %v225, %v1025
    %v1642 = vadd.f32 %v226, %v1203
    %v1643 = vadd.f32 %v227, %v1381
    %v1644 = vadd.f32 %v228, %v1559
    %v1645 = vadd.f32 %v229, %v1027
    %v1646 = vadd.f32 %v230, %v1205
    %v1647 = vadd.f32 %v231, %v1383
    %v1648 = vadd.f32 %v232, %v1561
    %v1649 = vadd.f32 %v233, %v1030
    %v1650 = vadd.f32 %v234, %v1208
    %v1651 = vadd.f32 %v235, %v1386
    %v1652 = vadd.f32 %v236, %v1564
    %v1653 = vadd.f32 %v237, %v1032
    %v1654 = vadd.f32 %v238, %v1210
    %v1655 = vadd.f32 %v239, %v1388
    %v1656 = vadd.f32 %v240, %v1566
    %v1657 = vadd.f32 %v241, %v1035
    %v1658 = vadd.f32 %v242, %v1213
    %v1659 = vadd.f32 %v243, %v1391
    %v1660 = vadd.f32 %v244, %v1569
    %v1661 = vadd.f32 %v245, %v1037
    %v1662 = vadd.f32 %v246, %v1215
    %v1663 = vadd.f32 %v247, %v1393
    %v1664 = vadd.f32 %v248, %v1571
    %v1665 = vadd.f32 %v249, %v1040
    %v1666 = vadd.f32 %v250, %v1218
    %v1667 = vadd.f32 %v251, %v1396
    %v1668 = vadd.f32 %v252, %v1574
    %v1669 = vadd.f32 %v253, %v1042
    %v1670 = vadd.f32 %v254, %v1220
    %v1671 = vadd.f32 %v255, %v1398
    %v1672 = vadd.f32 %v256, %v1576
    %v1673 = vadd.f32 %v257, %v1045
    %v1674 = vadd.f32 %v258, %v1223
    %v1675 = vadd.f32 %v259, %v1401
    %v1676 = vadd.f32 %v260, %v1579
    %v1677 = vadd.f32 %v261, %v1047
    %v1678 = vadd.f32 %v262, %v1225
    %v1679 = vadd.f32 %v263, %v1403
    %v1680 = vadd.f32 %v264, %v1581
    %v1681 = vadd.f32 %v265, %v1050
    %v1682 = vadd.f32 %v266, %v1228
    %v1683 = vadd.f32 %v267, %v1406
    %v1684 = vadd.f32 %v268, %v1584
    %v1685 = vadd.f32 %v269, %v1052
    %v1686 = vadd.f32 %v270, %v1230
    %v1687 = vadd.f32 %v271, %v1408
    %v1688 = vadd.f32 %v272, %v1586
    %v1689 = vadd.f32 %v273, %v1055
    %v1690 = vadd.f32 %v274, %v1233
    %v1691 = vadd.f32 %v275, %v1411
    %v1692 = vadd.f32 %v276, %v1589
    %v1693 = vadd.f32 %v277, %v1057
    %v1694 = vadd.f32 %v278, %v1235
    %v1695 = vadd.f32 %v279, %v1413
    %v1696 = vadd.f32 %v280, %v1591
    %v1697 = vadd.f32 %v281, %v1060
    %v1698 = vadd.f32 %v282, %v1238
    %v1699 = vadd.f32 %v283, %v1416
    %v1700 = vadd.f32 %v284, %v1594
    %v1701 = vadd.f32 %v285, %v1062
    %v1702 = vadd.f32 %v286, %v1240
    %v1703 = vadd.f32 %v287, %v1418
    %v1704 = vadd.f32 %v288, %v1596
    %v1705 = vadd.f32 %v289, %v1065
    %v1706 = vadd.f32 %v290, %v1243
    %v1707 = vadd.f32 %v291, %v1421
    %v1708 = vadd.f32 %v292, %v1599
    %v1709 = vadd.f32 %v293, %v1067
    %v1710 = vadd.f32 %v294, %v1245
    %v1711 = vadd.f32 %v295, %v1423
    %v1712 = vadd.f32 %v296, %v1601
    %v1713 = vadd.f32 %v297, %v1070
    %v1714 = vadd.f32 %v298, %v1248
    %v1715 = vadd.f32 %v299, %v1426
    %v1716 = vadd.f32 %v300, %v1604
    %v1717 = vadd.f32 %v301, %v1072
    %v1718 = vadd.f32 %v302, %v1250
    %v1719 = vadd.f32 %v303, %v1428
    %v1720 = vadd.f32 %v304, %v1606
    %v1721 = vadd.f32 %v305, %v1075
    %v1722 = vadd.f32 %v306, %v1253
    %v1723 = vadd.f32 %v307, %v1431
    %v1724 = vadd.f32 %v308, %v1609
    %v1725 = vadd.f32 %v309, %v1077
    %v1726 = vadd.f32 %v310, %v1255
    %v1727 = vadd.f32 %v311, %v1433
    %v1728 = vadd.f32 %v312, %v1611
    %v1729 = vadd.f32 %v313, %v1080
    %v1730 = vadd.f32 %v314, %v1258
    %v1731 = vadd.f32 %v315, %v1436
    %v1732 = vadd.f32 %v316, %v1614
    %v1733 = vadd.f32 %v317, %v1082
    %v1734 = vadd.f32 %v318, %v1260
    %v1735 = vadd.f32 %v319, %v1438
    %v1736 = vadd.f32 %v320, %v1616
    %v1737 = vadd.f32 %v321, %v1085
    %v1738 = vadd.f32 %v322, %v1263
    %v1739 = vadd.f32 %v323, %v1441
    %v1740 = vadd.f32 %v324, %v1619
    %v1741 = vadd.f32 %v325, %v1087
    %v1742 = vadd.f32 %v326, %v1265
    %v1743 = vadd.f32 %v327, %v1443
    %v1744 = vadd.f32 %v328, %v1621
    %v1745 = vadd.f32 %v329, %v1090
    %v1746 = vadd.f32 %v330, %v1268
    %v1747 = vadd.f32 %v331, %v1446
    %v1748 = vadd.f32 %v332, %v1624
    %v1749 = vadd.f32 %v333, %v1092
    %v1750 = vadd.f32 %v334, %v1270
    %v1751 = vadd.f32 %v335, %v1448
    %v1752 = vadd.f32 %v336, %v1626
    %v1753 = vadd.f32 %v337, %v1095
    %v1754 = vadd.f32 %v338, %v1273
    %v1755 = vadd.f32 %v339, %v1451
    %v1756 = vadd.f32 %v340, %v1629
    %v1757 = vadd.f32 %v341, %v1097
    %v1758 = vadd.f32 %v342, %v1275
    %v1759 = vadd.f32 %v343, %v1453
    %v1760 = vadd.f32 %v344, %v1631
    %1761 = vst [vmem:[#allocation2] sm:$0xff] %v1633
    %1762 = vst [vmem:[#allocation2 + $0x8] sm:$0xff] %v1634
    %1763 = vst [vmem:[#allocation2 + $0x10] sm:$0xff] %v1635
    %1764 = vst [vmem:[#allocation2 + $0x18] sm:$0xff] %v1636
    %1765 = vst [vmem:[#allocation2 + $0x20] sm:$0xff] %v1637
    %1766 = vst [vmem:[#allocation2 + $0x28] sm:$0xff] %v1638
    %1767 = vst [vmem:[#allocation2 + $0x30] sm:$0xff] %v1639
    %1768 = vst [vmem:[#allocation2 + $0x38] sm:$0xff] %v1640
    %1769 = vst [vmem:[#allocation2 + $0x40] sm:$0xff] %v1641
    %1770 = vst [vmem:[#allocation2 + $0x48] sm:$0xff] %v1642
    %1771 = vst [vmem:[#allocation2 + $0x50] sm:$0xff] %v1643
    %1772 = vst [vmem:[#allocation2 + $0x58] sm:$0xff] %v1644
    %1773 = vst [vmem:[#allocation2 + $0x60] sm:$0xff] %v1645
    %1774 = vst [vmem:[#allocation2 + $0x68] sm:$0xff] %v1646
    %1775 = vst [vmem:[#allocation2 + $0x70] sm:$0xff] %v1647
    %1776 = vst [vmem:[#allocation2 + $0x78] sm:$0xff] %v1648
    %1777 = vst [vmem:[#allocation2 + $0x80] sm:$0xff] %v1649
    %1778 = vst [vmem:[#allocation2 + $0x88] sm:$0xff] %v1650
    %1779 = vst [vmem:[#allocation2 + $0x90] sm:$0xff] %v1651
    %1780 = vst [vmem:[#allocation2 + $0x98] sm:$0xff] %v1652
    %1781 = vst [vmem:[#allocation2 + $0xa0] sm:$0xff] %v1653
    %1782 = vst [vmem:[#allocation2 + $0xa8] sm:$0xff] %v1654
    %1783 = vst [vmem:[#allocation2 + $0xb0] sm:$0xff] %v1655
    %1784 = vst [vmem:[#allocation2 + $0xb8] sm:$0xff] %v1656
    %1785 = vst [vmem:[#allocation2 + $0xc0] sm:$0xff] %v1657
    %1786 = vst [vmem:[#allocation2 + $0xc8] sm:$0xff] %v1658
    %1787 = vst [vmem:[#allocation2 + $0xd0] sm:$0xff] %v1659
    %1788 = vst [vmem:[#allocation2 + $0xd8] sm:$0xff] %v1660
    %1789 = vst [vmem:[#allocation2 + $0xe0] sm:$0xff] %v1661
    %1790 = vst [vmem:[#allocation2 + $0xe8] sm:$0xff] %v1662
    %1791 = vst [vmem:[#allocation2 + $0xf0] sm:$0xff] %v1663
    %1792 = vst [vmem:[#allocation2 + $0xf8] sm:$0xff] %v1664
    %1793 = vst [vmem:[#allocation2 + $0x100] sm:$0xff] %v1665
    %1794 = vst [vmem:[#allocation2 + $0x108] sm:$0xff] %v1666
    %1795 = vst [vmem:[#allocation2 + $0x110] sm:$0xff] %v1667
    %1796 = vst [vmem:[#allocation2 + $0x118] sm:$0xff] %v1668
    %1797 = vst [vmem:[#allocation2 + $0x120] sm:$0xff] %v1669
    %1798 = vst [vmem:[#allocation2 + $0x128] sm:$0xff] %v1670
    %1799 = vst [vmem:[#allocation2 + $0x130] sm:$0xff] %v1671
    %1800 = vst [vmem:[#allocation2 + $0x138] sm:$0xff] %v1672
    %1801 = vst [vmem:[#allocation2 + $0x140] sm:$0xff] %v1673
    %1802 = vst [vmem:[#allocation2 + $0x148] sm:$0xff] %v1674
    %1803 = vst [vmem:[#allocation2 + $0x150] sm:$0xff] %v1675
    %1804 = vst [vmem:[#allocation2 + $0x158] sm:$0xff] %v1676
    %1805 = vst [vmem:[#allocation2 + $0x160] sm:$0xff] %v1677
    %1806 = vst [vmem:[#allocation2 + $0x168] sm:$0xff] %v1678
    %1807 = vst [vmem:[#allocation2 + $0x170] sm:$0xff] %v1679
    %1808 = vst [vmem:[#allocation2 + $0x178] sm:$0xff] %v1680
    %1809 = vst [vmem:[#allocation2 + $0x180] sm:$0xff] %v1681
    %1810 = vst [vmem:[#allocation2 + $0x188] sm:$0xff] %v1682
    %1811 = vst [vmem:[#allocation2 + $0x190] sm:$0xff] %v1683
    %1812 = vst [vmem:[#allocation2 + $0x198] sm:$0xff] %v1684
    %1813 = vst [vmem:[#allocation2 + $0x1a0] sm:$0xff] %v1685
    %1814 = vst [vmem:[#allocation2 + $0x1a8] sm:$0xff] %v1686
    %1815 = vst [vmem:[#allocation2 + $0x1b0] sm:$0xff] %v1687
    %1816 = vst [vmem:[#allocation2 + $0x1b8] sm:$0xff] %v1688
    %1817 = vst [vmem:[#allocation2 + $0x1c0] sm:$0xff] %v1689
    %1818 = vst [vmem:[#allocation2 + $0x1c8] sm:$0xff] %v1690
    %1819 = vst [vmem:[#allocation2 + $0x1d0] sm:$0xff] %v1691
    %1820 = vst [vmem:[#allocation2 + $0x1d8] sm:$0xff] %v1692
    %1821 = vst [vmem:[#allocation2 + $0x1e0] sm:$0xff] %v1693
    %1822 = vst [vmem:[#allocation2 + $0x1e8] sm:$0xff] %v1694
    %1823 = vst [vmem:[#allocation2 + $0x1f0] sm:$0xff] %v1695
    %1824 = vst [vmem:[#allocation2 + $0x1f8] sm:$0xff] %v1696
    %1825 = vst [vmem:[#allocation2 + $0x200] sm:$0xff] %v1697
    %1826 = vst [vmem:[#allocation2 + $0x208] sm:$0xff] %v1698
    %1827 = vst [vmem:[#allocation2 + $0x210] sm:$0xff] %v1699
    %1828 = vst [vmem:[#allocation2 + $0x218] sm:$0xff] %v1700
    %1829 = vst [vmem:[#allocation2 + $0x220] sm:$0xff] %v1701
    %1830 = vst [vmem:[#allocation2 + $0x228] sm:$0xff] %v1702
    %1831 = vst [vmem:[#allocation2 + $0x230] sm:$0xff] %v1703
    %1832 = vst [vmem:[#allocation2 + $0x238] sm:$0xff] %v1704
    %1833 = vst [vmem:[#allocation2 + $0x240] sm:$0xff] %v1705
    %1834 = vst [vmem:[#allocation2 + $0x248] sm:$0xff] %v1706
    %1835 = vst [vmem:[#allocation2 + $0x250] sm:$0xff] %v1707
    %1836 = vst [vmem:[#allocation2 + $0x258] sm:$0xff] %v1708
    %1837 = vst [vmem:[#allocation2 + $0x260] sm:$0xff] %v1709
    %1838 = vst [vmem:[#allocation2 + $0x268] sm:$0xff] %v1710
    %1839 = vst [vmem:[#allocation2 + $0x270] sm:$0xff] %v1711
    %1840 = vst [vmem:[#allocation2 + $0x278] sm:$0xff] %v1712
    %1841 = vst [vmem:[#allocation2 + $0x280] sm:$0xff] %v1713
    %1842 = vst [vmem:[#allocation2 + $0x288] sm:$0xff] %v1714
    %1843 = vst [vmem:[#allocation2 + $0x290] sm:$0xff] %v1715
    %1844 = vst [vmem:[#allocation2 + $0x298] sm:$0xff] %v1716
    %1845 = vst [vmem:[#allocation2 + $0x2a0] sm:$0xff] %v1717
    %1846 = vst [vmem:[#allocation2 + $0x2a8] sm:$0xff] %v1718
    %1847 = vst [vmem:[#allocation2 + $0x2b0] sm:$0xff] %v1719
    %1848 = vst [vmem:[#allocation2 + $0x2b8] sm:$0xff] %v1720
    %1849 = vst [vmem:[#allocation2 + $0x2c0] sm:$0xff] %v1721
    %1850 = vst [vmem:[#allocation2 + $0x2c8] sm:$0xff] %v1722
    %1851 = vst [vmem:[#allocation2 + $0x2d0] sm:$0xff] %v1723
    %1852 = vst [vmem:[#allocation2 + $0x2d8] sm:$0xff] %v1724
    %1853 = vst [vmem:[#allocation2 + $0x2e0] sm:$0xff] %v1725
    %1854 = vst [vmem:[#allocation2 + $0x2e8] sm:$0xff] %v1726
    %1855 = vst [vmem:[#allocation2 + $0x2f0] sm:$0xff] %v1727
    %1856 = vst [vmem:[#allocation2 + $0x2f8] sm:$0xff] %v1728
    %1857 = vst [vmem:[#allocation2 + $0x300] sm:$0xff] %v1729
    %1858 = vst [vmem:[#allocation2 + $0x308] sm:$0xff] %v1730
    %1859 = vst [vmem:[#allocation2 + $0x310] sm:$0xff] %v1731
    %1860 = vst [vmem:[#allocation2 + $0x318] sm:$0xff] %v1732
    %1861 = vst [vmem:[#allocation2 + $0x320] sm:$0xff] %v1733
    %1862 = vst [vmem:[#allocation2 + $0x328] sm:$0xff] %v1734
    %1863 = vst [vmem:[#allocation2 + $0x330] sm:$0xff] %v1735
    %1864 = vst [vmem:[#allocation2 + $0x338] sm:$0xff] %v1736
    %1865 = vst [vmem:[#allocation2 + $0x340] sm:$0xff] %v1737
    %1866 = vst [vmem:[#allocation2 + $0x348] sm:$0xff] %v1738
    %1867 = vst [vmem:[#allocation2 + $0x350] sm:$0xff] %v1739
    %1868 = vst [vmem:[#allocation2 + $0x358] sm:$0xff] %v1740
    %1869 = vst [vmem:[#allocation2 + $0x360] sm:$0xff] %v1741
    %1870 = vst [vmem:[#allocation2 + $0x368] sm:$0xff] %v1742
    %1871 = vst [vmem:[#allocation2 + $0x370] sm:$0xff] %v1743
    %1872 = vst [vmem:[#allocation2 + $0x378] sm:$0xff] %v1744
    %1873 = vst [vmem:[#allocation2 + $0x380] sm:$0xff] %v1745
    %1874 = vst [vmem:[#allocation2 + $0x388] sm:$0xff] %v1746
    %1875 = vst [vmem:[#allocation2 + $0x390] sm:$0xff] %v1747
    %1876 = vst [vmem:[#allocation2 + $0x398] sm:$0xff] %v1748
    %1877 = vst [vmem:[#allocation2 + $0x3a0] sm:$0xff] %v1749
    %1878 = vst [vmem:[#allocation2 + $0x3a8] sm:$0xff] %v1750
    %1879 = vst [vmem:[#allocation2 + $0x3b0] sm:$0xff] %v1751
    %1880 = vst [vmem:[#allocation2 + $0x3b8] sm:$0xff] %v1752
    %1881 = vst [vmem:[#allocation2 + $0x3c0] sm:$0xff] %v1753
    %1882 = vst [vmem:[#allocation2 + $0x3c8] sm:$0xff] %v1754
    %1883 = vst [vmem:[#allocation2 + $0x3d0] sm:$0xff] %v1755
    %1884 = vst [vmem:[#allocation2 + $0x3d8] sm:$0xff] %v1756
    %1885 = vst [vmem:[#allocation2 + $0x3e0] sm:$0xff] %v1757
    %1886 = vst [vmem:[#allocation2 + $0x3e8] sm:$0xff] %v1758
    %1887 = vst [vmem:[#allocation2 + $0x3f0] sm:$0xff] %v1759
    %1888 = vst [vmem:[#allocation2 + $0x3f8] sm:$0xff] %v1760
    // Predicated region
    $region38: #{tpu_custom_call.1} parent=1 // pred_check
      %p1889 = pneg %p85
    $region39: #{tpu_custom_call.1} parent=1 // pred_check_branch
      %1891 = sbr.rel (%p1889) target = $region41
    $region40: #{tpu_custom_call.1} parent=1 // pred_region
      %v1892 = vld [vmem:[#allocation8] sm:$0xff]
      %v1893 = vld [vmem:[#allocation8 + $0x8] sm:$0xff]
      %v1894 = vld [vmem:[#allocation8 + $0x10] sm:$0xff]
      %v1895 = vld [vmem:[#allocation8 + $0x18] sm:$0xff]
      %v1896 = vld [vmem:[#allocation8 + $0x20] sm:$0xff]
      %v1897 = vld [vmem:[#allocation8 + $0x28] sm:$0xff]
      %v1898 = vld [vmem:[#allocation8 + $0x30] sm:$0xff]
      %v1899 = vld [vmem:[#allocation8 + $0x38] sm:$0xff]
      %v1900 = vld [vmem:[#allocation8 + $0x40] sm:$0xff]
      %v1901 = vld [vmem:[#allocation8 + $0x48] sm:$0xff]
      %v1902 = vld [vmem:[#allocation8 + $0x50] sm:$0xff]
      %v1903 = vld [vmem:[#allocation8 + $0x58] sm:$0xff]
      %v1904 = vld [vmem:[#allocation8 + $0x60] sm:$0xff]
      %v1905 = vld [vmem:[#allocation8 + $0x68] sm:$0xff]
      %v1906 = vld [vmem:[#allocation8 + $0x70] sm:$0xff]
      %v1907 = vld [vmem:[#allocation8 + $0x78] sm:$0xff]
      %v1908 = vld [vmem:[#allocation8 + $0x80] sm:$0xff]
      %v1909 = vld [vmem:[#allocation8 + $0x88] sm:$0xff]
      %v1910 = vld [vmem:[#allocation8 + $0x90] sm:$0xff]
      %v1911 = vld [vmem:[#allocation8 + $0x98] sm:$0xff]
      %v1912 = vld [vmem:[#allocation8 + $0xa0] sm:$0xff]
      %v1913 = vld [vmem:[#allocation8 + $0xa8] sm:$0xff]
      %v1914 = vld [vmem:[#allocation8 + $0xb0] sm:$0xff]
      %v1915 = vld [vmem:[#allocation8 + $0xb8] sm:$0xff]
      %v1916 = vld [vmem:[#allocation8 + $0xc0] sm:$0xff]
      %v1917 = vld [vmem:[#allocation8 + $0xc8] sm:$0xff]
      %v1918 = vld [vmem:[#allocation8 + $0xd0] sm:$0xff]
      %v1919 = vld [vmem:[#allocation8 + $0xd8] sm:$0xff]
      %v1920 = vld [vmem:[#allocation8 + $0xe0] sm:$0xff]
      %v1921 = vld [vmem:[#allocation8 + $0xe8] sm:$0xff]
      %v1922 = vld [vmem:[#allocation8 + $0xf0] sm:$0xff]
      %v1923 = vld [vmem:[#allocation8 + $0xf8] sm:$0xff]
      %v1924 = vld [vmem:[#allocation9] sm:$0xff]
      %v1925 = vld [vmem:[#allocation9 + $0x8] sm:$0xff]
      %v1926 = vld [vmem:[#allocation9 + $0x10] sm:$0xff]
      %v1927 = vld [vmem:[#allocation9 + $0x18] sm:$0xff]
      %v1928 = vld [vmem:[#allocation9 + $0x20] sm:$0xff]
      %v1929 = vld [vmem:[#allocation9 + $0x28] sm:$0xff]
      %v1930 = vld [vmem:[#allocation9 + $0x30] sm:$0xff]
      %v1931 = vld [vmem:[#allocation9 + $0x38] sm:$0xff]
      %v1932 = vld [vmem:[#allocation9 + $0x40] sm:$0xff]
      %v1933 = vld [vmem:[#allocation9 + $0x48] sm:$0xff]
      %v1934 = vld [vmem:[#allocation9 + $0x50] sm:$0xff]
      %v1935 = vld [vmem:[#allocation9 + $0x58] sm:$0xff]
      %v1936 = vld [vmem:[#allocation9 + $0x60] sm:$0xff]
      %v1937 = vld [vmem:[#allocation9 + $0x68] sm:$0xff]
      %v1938 = vld [vmem:[#allocation9 + $0x70] sm:$0xff]
      %v1939 = vld [vmem:[#allocation9 + $0x78] sm:$0xff]
      %v1940 = vld [vmem:[#allocation9 + $0x80] sm:$0xff]
      %v1941 = vld [vmem:[#allocation9 + $0x88] sm:$0xff]
      %v1942 = vld [vmem:[#allocation9 + $0x90] sm:$0xff]
      %v1943 = vld [vmem:[#allocation9 + $0x98] sm:$0xff]
      %v1944 = vld [vmem:[#allocation9 + $0xa0] sm:$0xff]
      %v1945 = vld [vmem:[#allocation9 + $0xa8] sm:$0xff]
      %v1946 = vld [vmem:[#allocation9 + $0xb0] sm:$0xff]
      %v1947 = vld [vmem:[#allocation9 + $0xb8] sm:$0xff]
      %v1948 = vld [vmem:[#allocation9 + $0xc0] sm:$0xff]
      %v1949 = vld [vmem:[#allocation9 + $0xc8] sm:$0xff]
      %v1950 = vld [vmem:[#allocation9 + $0xd0] sm:$0xff]
      %v1951 = vld [vmem:[#allocation9 + $0xd8] sm:$0xff]
      %v1952 = vld [vmem:[#allocation9 + $0xe0] sm:$0xff]
      %v1953 = vld [vmem:[#allocation9 + $0xe8] sm:$0xff]
      %v1954 = vld [vmem:[#allocation9 + $0xf0] sm:$0xff]
      %v1955 = vld [vmem:[#allocation9 + $0xf8] sm:$0xff]
      %v1956 = vld [vmem:[#allocation2] sm:$0xff]
      %v1957 = vld [vmem:[#allocation2 + $0x8] sm:$0xff]
      %v1958 = vld [vmem:[#allocation2 + $0x10] sm:$0xff]
      %v1959 = vld [vmem:[#allocation2 + $0x18] sm:$0xff]
      %v1960 = vld [vmem:[#allocation2 + $0x20] sm:$0xff]
      %v1961 = vld [vmem:[#allocation2 + $0x28] sm:$0xff]
      %v1962 = vld [vmem:[#allocation2 + $0x30] sm:$0xff]
      %v1963 = vld [vmem:[#allocation2 + $0x38] sm:$0xff]
      %v1964 = vld [vmem:[#allocation2 + $0x40] sm:$0xff]
      %v1965 = vld [vmem:[#allocation2 + $0x48] sm:$0xff]
      %v1966 = vld [vmem:[#allocation2 + $0x50] sm:$0xff]
      %v1967 = vld [vmem:[#allocation2 + $0x58] sm:$0xff]
      %v1968 = vld [vmem:[#allocation2 + $0x60] sm:$0xff]
      %v1969 = vld [vmem:[#allocation2 + $0x68] sm:$0xff]
      %v1970 = vld [vmem:[#allocation2 + $0x70] sm:$0xff]
      %v1971 = vld [vmem:[#allocation2 + $0x78] sm:$0xff]
      %v1972 = vld [vmem:[#allocation2 + $0x80] sm:$0xff]
      %v1973 = vld [vmem:[#allocation2 + $0x88] sm:$0xff]
      %v1974 = vld [vmem:[#allocation2 + $0x90] sm:$0xff]
      %v1975 = vld [vmem:[#allocation2 + $0x98] sm:$0xff]
      %v1976 = vld [vmem:[#allocation2 + $0xa0] sm:$0xff]
      %v1977 = vld [vmem:[#allocation2 + $0xa8] sm:$0xff]
      %v1978 = vld [vmem:[#allocation2 + $0xb0] sm:$0xff]
      %v1979 = vld [vmem:[#allocation2 + $0xb8] sm:$0xff]
      %v1980 = vld [vmem:[#allocation2 + $0xc0] sm:$0xff]
      %v1981 = vld [vmem:[#allocation2 + $0xc8] sm:$0xff]
      %v1982 = vld [vmem:[#allocation2 + $0xd0] sm:$0xff]
      %v1983 = vld [vmem:[#allocation2 + $0xd8] sm:$0xff]
      %v1984 = vld [vmem:[#allocation2 + $0xe0] sm:$0xff]
      %v1985 = vld [vmem:[#allocation2 + $0xe8] sm:$0xff]
      %v1986 = vld [vmem:[#allocation2 + $0xf0] sm:$0xff]
      %v1987 = vld [vmem:[#allocation2 + $0xf8] sm:$0xff]
      %v1988 = vld [vmem:[#allocation2 + $0x100] sm:$0xff]
      %v1989 = vld [vmem:[#allocation2 + $0x108] sm:$0xff]
      %v1990 = vld [vmem:[#allocation2 + $0x110] sm:$0xff]
      %v1991 = vld [vmem:[#allocation2 + $0x118] sm:$0xff]
      %v1992 = vld [vmem:[#allocation2 + $0x120] sm:$0xff]
      %v1993 = vld [vmem:[#allocation2 + $0x128] sm:$0xff]
      %v1994 = vld [vmem:[#allocation2 + $0x130] sm:$0xff]
      %v1995 = vld [vmem:[#allocation2 + $0x138] sm:$0xff]
      %v1996 = vld [vmem:[#allocation2 + $0x140] sm:$0xff]
      %v1997 = vld [vmem:[#allocation2 + $0x148] sm:$0xff]
      %v1998 = vld [vmem:[#allocation2 + $0x150] sm:$0xff]
      %v1999 = vld [vmem:[#allocation2 + $0x158] sm:$0xff]
      %v2000 = vld [vmem:[#allocation2 + $0x160] sm:$0xff]
      %v2001 = vld [vmem:[#allocation2 + $0x168] sm:$0xff]
      %v2002 = vld [vmem:[#allocation2 + $0x170] sm:$0xff]
      %v2003 = vld [vmem:[#allocation2 + $0x178] sm:$0xff]
      %v2004 = vld [vmem:[#allocation2 + $0x180] sm:$0xff]
      %v2005 = vld [vmem:[#allocation2 + $0x188] sm:$0xff]
      %v2006 = vld [vmem:[#allocation2 + $0x190] sm:$0xff]
      %v2007 = vld [vmem:[#allocation2 + $0x198] sm:$0xff]
      %v2008 = vld [vmem:[#allocation2 + $0x1a0] sm:$0xff]
      %v2009 = vld [vmem:[#allocation2 + $0x1a8] sm:$0xff]
      %v2010 = vld [vmem:[#allocation2 + $0x1b0] sm:$0xff]
      %v2011 = vld [vmem:[#allocation2 + $0x1b8] sm:$0xff]
      %v2012 = vld [vmem:[#allocation2 + $0x1c0] sm:$0xff]
      %v2013 = vld [vmem:[#allocation2 + $0x1c8] sm:$0xff]
      %v2014 = vld [vmem:[#allocation2 + $0x1d0] sm:$0xff]
      %v2015 = vld [vmem:[#allocation2 + $0x1d8] sm:$0xff]
      %v2016 = vld [vmem:[#allocation2 + $0x1e0] sm:$0xff]
      %v2017 = vld [vmem:[#allocation2 + $0x1e8] sm:$0xff]
      %v2018 = vld [vmem:[#allocation2 + $0x1f0] sm:$0xff]
      %v2019 = vld [vmem:[#allocation2 + $0x1f8] sm:$0xff]
      %v2020 = vld [vmem:[#allocation2 + $0x200] sm:$0xff]
      %v2021 = vld [vmem:[#allocation2 + $0x208] sm:$0xff]
      %v2022 = vld [vmem:[#allocation2 + $0x210] sm:$0xff]
      %v2023 = vld [vmem:[#allocation2 + $0x218] sm:$0xff]
      %v2024 = vld [vmem:[#allocation2 + $0x220] sm:$0xff]
      %v2025 = vld [vmem:[#allocation2 + $0x228] sm:$0xff]
      %v2026 = vld [vmem:[#allocation2 + $0x230] sm:$0xff]
      %v2027 = vld [vmem:[#allocation2 + $0x238] sm:$0xff]
      %v2028 = vld [vmem:[#allocation2 + $0x240] sm:$0xff]
      %v2029 = vld [vmem:[#allocation2 + $0x248] sm:$0xff]
      %v2030 = vld [vmem:[#allocation2 + $0x250] sm:$0xff]
      %v2031 = vld [vmem:[#allocation2 + $0x258] sm:$0xff]
      %v2032 = vld [vmem:[#allocation2 + $0x260] sm:$0xff]
      %v2033 = vld [vmem:[#allocation2 + $0x268] sm:$0xff]
      %v2034 = vld [vmem:[#allocation2 + $0x270] sm:$0xff]
      %v2035 = vld [vmem:[#allocation2 + $0x278] sm:$0xff]
      %v2036 = vld [vmem:[#allocation2 + $0x280] sm:$0xff]
      %v2037 = vld [vmem:[#allocation2 + $0x288] sm:$0xff]
      %v2038 = vld [vmem:[#allocation2 + $0x290] sm:$0xff]
      %v2039 = vld [vmem:[#allocation2 + $0x298] sm:$0xff]
      %v2040 = vld [vmem:[#allocation2 + $0x2a0] sm:$0xff]
      %v2041 = vld [vmem:[#allocation2 + $0x2a8] sm:$0xff]
      %v2042 = vld [vmem:[#allocation2 + $0x2b0] sm:$0xff]
      %v2043 = vld [vmem:[#allocation2 + $0x2b8] sm:$0xff]
      %v2044 = vld [vmem:[#allocation2 + $0x2c0] sm:$0xff]
      %v2045 = vld [vmem:[#allocation2 + $0x2c8] sm:$0xff]
      %v2046 = vld [vmem:[#allocation2 + $0x2d0] sm:$0xff]
      %v2047 = vld [vmem:[#allocation2 + $0x2d8] sm:$0xff]
      %v2048 = vld [vmem:[#allocation2 + $0x2e0] sm:$0xff]
      %v2049 = vld [vmem:[#allocation2 + $0x2e8] sm:$0xff]
      %v2050 = vld [vmem:[#allocation2 + $0x2f0] sm:$0xff]
      %v2051 = vld [vmem:[#allocation2 + $0x2f8] sm:$0xff]
      %v2052 = vld [vmem:[#allocation2 + $0x300] sm:$0xff]
      %v2053 = vld [vmem:[#allocation2 + $0x308] sm:$0xff]
      %v2054 = vld [vmem:[#allocation2 + $0x310] sm:$0xff]
      %v2055 = vld [vmem:[#allocation2 + $0x318] sm:$0xff]
      %v2056 = vld [vmem:[#allocation2 + $0x320] sm:$0xff]
      %v2057 = vld [vmem:[#allocation2 + $0x328] sm:$0xff]
      %v2058 = vld [vmem:[#allocation2 + $0x330] sm:$0xff]
      %v2059 = vld [vmem:[#allocation2 + $0x338] sm:$0xff]
      %v2060 = vld [vmem:[#allocation2 + $0x340] sm:$0xff]
      %v2061 = vld [vmem:[#allocation2 + $0x348] sm:$0xff]
      %v2062 = vld [vmem:[#allocation2 + $0x350] sm:$0xff]
      %v2063 = vld [vmem:[#allocation2 + $0x358] sm:$0xff]
      %v2064 = vld [vmem:[#allocation2 + $0x360] sm:$0xff]
      %v2065 = vld [vmem:[#allocation2 + $0x368] sm:$0xff]
      %v2066 = vld [vmem:[#allocation2 + $0x370] sm:$0xff]
      %v2067 = vld [vmem:[#allocation2 + $0x378] sm:$0xff]
      %v2068 = vld [vmem:[#allocation2 + $0x380] sm:$0xff]
      %v2069 = vld [vmem:[#allocation2 + $0x388] sm:$0xff]
      %v2070 = vld [vmem:[#allocation2 + $0x390] sm:$0xff]
      %v2071 = vld [vmem:[#allocation2 + $0x398] sm:$0xff]
      %v2072 = vld [vmem:[#allocation2 + $0x3a0] sm:$0xff]
      %v2073 = vld [vmem:[#allocation2 + $0x3a8] sm:$0xff]
      %v2074 = vld [vmem:[#allocation2 + $0x3b0] sm:$0xff]
      %v2075 = vld [vmem:[#allocation2 + $0x3b8] sm:$0xff]
      %v2076 = vld [vmem:[#allocation2 + $0x3c0] sm:$0xff]
      %v2077 = vld [vmem:[#allocation2 + $0x3c8] sm:$0xff]
      %v2078 = vld [vmem:[#allocation2 + $0x3d0] sm:$0xff]
      %v2079 = vld [vmem:[#allocation2 + $0x3d8] sm:$0xff]
      %v2080 = vld [vmem:[#allocation2 + $0x3e0] sm:$0xff]
      %v2081 = vld [vmem:[#allocation2 + $0x3e8] sm:$0xff]
      %v2082 = vld [vmem:[#allocation2 + $0x3f0] sm:$0xff]
      %v2083 = vld [vmem:[#allocation2 + $0x3f8] sm:$0xff]
      %v2084 = vmul.f32 %v1956, %v1892
      %v2085 = vmul.f32 %v1960, %v1893
      %v2086 = vmul.f32 %v1964, %v1894
      %v2087 = vmul.f32 %v1968, %v1895
      %v2088 = vmul.f32 %v1972, %v1896
      %v2089 = vmul.f32 %v1976, %v1897
      %v2090 = vmul.f32 %v1980, %v1898
      %v2091 = vmul.f32 %v1984, %v1899
      %v2092 = vmul.f32 %v1988, %v1900
      %v2093 = vmul.f32 %v1992, %v1901
      %v2094 = vmul.f32 %v1996, %v1902
      %v2095 = vmul.f32 %v2000, %v1903
      %v2096 = vmul.f32 %v2004, %v1904
      %v2097 = vmul.f32 %v2008, %v1905
      %v2098 = vmul.f32 %v2012, %v1906
      %v2099 = vmul.f32 %v2016, %v1907
      %v2100 = vmul.f32 %v2020, %v1908
      %v2101 = vmul.f32 %v2024, %v1909
      %v2102 = vmul.f32 %v2028, %v1910
      %v2103 = vmul.f32 %v2032, %v1911
      %v2104 = vmul.f32 %v2036, %v1912
      %v2105 = vmul.f32 %v2040, %v1913
      %v2106 = vmul.f32 %v2044, %v1914
      %v2107 = vmul.f32 %v2048, %v1915
      %v2108 = vmul.f32 %v2052, %v1916
      %v2109 = vmul.f32 %v2056, %v1917
      %v2110 = vmul.f32 %v2060, %v1918
      %v2111 = vmul.f32 %v2064, %v1919
      %v2112 = vmul.f32 %v2068, %v1920
      %v2113 = vmul.f32 %v2072, %v1921
      %v2114 = vmul.f32 %v2076, %v1922
      %v2115 = vmul.f32 %v2080, %v1923
      %2116 = vrot.lane.b32.xlu0 %v1956, 64
      %v2117 = vpop.permute.xlu0 %2116
      %2118 = vrot.lane.b32.xlu0 %v1960, 64
      %v2119 = vpop.permute.xlu0 %2118
      %2120 = vrot.lane.b32.xlu0 %v1964, 64
      %v2121 = vpop.permute.xlu0 %2120
      %2122 = vrot.lane.b32.xlu0 %v1968, 64
      %v2123 = vpop.permute.xlu0 %2122
      %2124 = vrot.lane.b32.xlu0 %v1972, 64
      %v2125 = vpop.permute.xlu0 %2124
      %2126 = vrot.lane.b32.xlu0 %v1976, 64
      %v2127 = vpop.permute.xlu0 %2126
      %2128 = vrot.lane.b32.xlu0 %v1980, 64
      %v2129 = vpop.permute.xlu0 %2128
      %2130 = vrot.lane.b32.xlu0 %v1984, 64
      %v2131 = vpop.permute.xlu0 %2130
      %2132 = vrot.lane.b32.xlu0 %v1988, 64
      %v2133 = vpop.permute.xlu0 %2132
      %2134 = vrot.lane.b32.xlu0 %v1992, 64
      %v2135 = vpop.permute.xlu0 %2134
      %2136 = vrot.lane.b32.xlu0 %v1996, 64
      %v2137 = vpop.permute.xlu0 %2136
      %2138 = vrot.lane.b32.xlu0 %v2000, 64
      %v2139 = vpop.permute.xlu0 %2138
      %2140 = vrot.lane.b32.xlu0 %v2004, 64
      %v2141 = vpop.permute.xlu0 %2140
      %2142 = vrot.lane.b32.xlu0 %v2008, 64
      %v2143 = vpop.permute.xlu0 %2142
      %2144 = vrot.lane.b32.xlu0 %v2012, 64
      %v2145 = vpop.permute.xlu0 %2144
      %2146 = vrot.lane.b32.xlu0 %v2016, 64
      %v2147 = vpop.permute.xlu0 %2146
      %2148 = vrot.lane.b32.xlu0 %v2020, 64
      %v2149 = vpop.permute.xlu0 %2148
      %2150 = vrot.lane.b32.xlu0 %v2024, 64
      %v2151 = vpop.permute.xlu0 %2150
      %2152 = vrot.lane.b32.xlu0 %v2028, 64
      %v2153 = vpop.permute.xlu0 %2152
      %2154 = vrot.lane.b32.xlu0 %v2032, 64
      %v2155 = vpop.permute.xlu0 %2154
      %2156 = vrot.lane.b32.xlu0 %v2036, 64
      %v2157 = vpop.permute.xlu0 %2156
      %2158 = vrot.lane.b32.xlu0 %v2040, 64
      %v2159 = vpop.permute.xlu0 %2158
      %2160 = vrot.lane.b32.xlu0 %v2044, 64
      %v2161 = vpop.permute.xlu0 %2160
      %2162 = vrot.lane.b32.xlu0 %v2048, 64
      %v2163 = vpop.permute.xlu0 %2162
      %2164 = vrot.lane.b32.xlu0 %v2052, 64
      %v2165 = vpop.permute.xlu0 %2164
      %2166 = vrot.lane.b32.xlu0 %v2056, 64
      %v2167 = vpop.permute.xlu0 %2166
      %2168 = vrot.lane.b32.xlu0 %v2060, 64
      %v2169 = vpop.permute.xlu0 %2168
      %2170 = vrot.lane.b32.xlu0 %v2064, 64
      %v2171 = vpop.permute.xlu0 %2170
      %2172 = vrot.lane.b32.xlu0 %v2068, 64
      %v2173 = vpop.permute.xlu0 %2172
      %2174 = vrot.lane.b32.xlu0 %v2072, 64
      %v2175 = vpop.permute.xlu0 %2174
      %2176 = vrot.lane.b32.xlu0 %v2076, 64
      %v2177 = vpop.permute.xlu0 %2176
      %2178 = vrot.lane.b32.xlu0 %v2080, 64
      %v2179 = vpop.permute.xlu0 %2178
      %v2180 = vmul.f32 %v2117, %v1924
      %v2181 = vmul.f32 %v2119, %v1925
      %v2182 = vmul.f32 %v2121, %v1926
      %v2183 = vmul.f32 %v2123, %v1927
      %v2184 = vmul.f32 %v2125, %v1928
      %v2185 = vmul.f32 %v2127, %v1929
      %v2186 = vmul.f32 %v2129, %v1930
      %v2187 = vmul.f32 %v2131, %v1931
      %v2188 = vmul.f32 %v2133, %v1932
      %v2189 = vmul.f32 %v2135, %v1933
      %v2190 = vmul.f32 %v2137, %v1934
      %v2191 = vmul.f32 %v2139, %v1935
      %v2192 = vmul.f32 %v2141, %v1936
      %v2193 = vmul.f32 %v2143, %v1937
      %v2194 = vmul.f32 %v2145, %v1938
      %v2195 = vmul.f32 %v2147, %v1939
      %v2196 = vmul.f32 %v2149, %v1940
      %v2197 = vmul.f32 %v2151, %v1941
      %v2198 = vmul.f32 %v2153, %v1942
      %v2199 = vmul.f32 %v2155, %v1943
      %v2200 = vmul.f32 %v2157, %v1944
      %v2201 = vmul.f32 %v2159, %v1945
      %v2202 = vmul.f32 %v2161, %v1946
      %v2203 = vmul.f32 %v2163, %v1947
      %v2204 = vmul.f32 %v2165, %v1948
      %v2205 = vmul.f32 %v2167, %v1949
      %v2206 = vmul.f32 %v2169, %v1950
      %v2207 = vmul.f32 %v2171, %v1951
      %v2208 = vmul.f32 %v2173, %v1952
      %v2209 = vmul.f32 %v2175, %v1953
      %v2210 = vmul.f32 %v2177, %v1954
      %v2211 = vmul.f32 %v2179, %v1955
      %v2212 = vadd.f32 %v2084, %v2180
      %v2213 = vadd.f32 %v2085, %v2181
      %v2214 = vadd.f32 %v2086, %v2182
      %v2215 = vadd.f32 %v2087, %v2183
      %v2216 = vadd.f32 %v2088, %v2184
      %v2217 = vadd.f32 %v2089, %v2185
      %v2218 = vadd.f32 %v2090, %v2186
      %v2219 = vadd.f32 %v2091, %v2187
      %v2220 = vadd.f32 %v2092, %v2188
      %v2221 = vadd.f32 %v2093, %v2189
      %v2222 = vadd.f32 %v2094, %v2190
      %v2223 = vadd.f32 %v2095, %v2191
      %v2224 = vadd.f32 %v2096, %v2192
      %v2225 = vadd.f32 %v2097, %v2193
      %v2226 = vadd.f32 %v2098, %v2194
      %v2227 = vadd.f32 %v2099, %v2195
      %v2228 = vadd.f32 %v2100, %v2196
      %v2229 = vadd.f32 %v2101, %v2197
      %v2230 = vadd.f32 %v2102, %v2198
      %v2231 = vadd.f32 %v2103, %v2199
      %v2232 = vadd.f32 %v2104, %v2200
      %v2233 = vadd.f32 %v2105, %v2201
      %v2234 = vadd.f32 %v2106, %v2202
      %v2235 = vadd.f32 %v2107, %v2203
      %v2236 = vadd.f32 %v2108, %v2204
      %v2237 = vadd.f32 %v2109, %v2205
      %v2238 = vadd.f32 %v2110, %v2206
      %v2239 = vadd.f32 %v2111, %v2207
      %v2240 = vadd.f32 %v2112, %v2208
      %v2241 = vadd.f32 %v2113, %v2209
      %v2242 = vadd.f32 %v2114, %v2210
      %v2243 = vadd.f32 %v2115, %v2211
      %v2244 = vmul.f32 %v2212, 0.088388346
      %v2245 = vmul.f32 %v2213, 0.088388346
      %v2246 = vmul.f32 %v2214, 0.088388346
      %v2247 = vmul.f32 %v2215, 0.088388346
      %v2248 = vmul.f32 %v2216, 0.088388346
      %v2249 = vmul.f32 %v2217, 0.088388346
      %v2250 = vmul.f32 %v2218, 0.088388346
      %v2251 = vmul.f32 %v2219, 0.088388346
      %v2252 = vmul.f32 %v2220, 0.088388346
      %v2253 = vmul.f32 %v2221, 0.088388346
      %v2254 = vmul.f32 %v2222, 0.088388346
      %v2255 = vmul.f32 %v2223, 0.088388346
      %v2256 = vmul.f32 %v2224, 0.088388346
      %v2257 = vmul.f32 %v2225, 0.088388346
      %v2258 = vmul.f32 %v2226, 0.088388346
      %v2259 = vmul.f32 %v2227, 0.088388346
      %v2260 = vmul.f32 %v2228, 0.088388346
      %v2261 = vmul.f32 %v2229, 0.088388346
      %v2262 = vmul.f32 %v2230, 0.088388346
      %v2263 = vmul.f32 %v2231, 0.088388346
      %v2264 = vmul.f32 %v2232, 0.088388346
      %v2265 = vmul.f32 %v2233, 0.088388346
      %v2266 = vmul.f32 %v2234, 0.088388346
      %v2267 = vmul.f32 %v2235, 0.088388346
      %v2268 = vmul.f32 %v2236, 0.088388346
      %v2269 = vmul.f32 %v2237, 0.088388346
      %v2270 = vmul.f32 %v2238, 0.088388346
      %v2271 = vmul.f32 %v2239, 0.088388346
      %v2272 = vmul.f32 %v2240, 0.088388346
      %v2273 = vmul.f32 %v2241, 0.088388346
      %v2274 = vmul.f32 %v2242, 0.088388346
      %v2275 = vmul.f32 %v2243, 0.088388346
      %v2276 = vpack.c.bf16 %v2244, %v2244
      %v2277 = vpack.c.bf16 %v2245, %v2245
      %v2278 = vpack.c.bf16 %v2246, %v2246
      %v2279 = vpack.c.bf16 %v2247, %v2247
      %v2280 = vpack.c.bf16 %v2248, %v2248
      %v2281 = vpack.c.bf16 %v2249, %v2249
      %v2282 = vpack.c.bf16 %v2250, %v2250
      %v2283 = vpack.c.bf16 %v2251, %v2251
      %v2284 = vpack.c.bf16 %v2252, %v2252
      %v2285 = vpack.c.bf16 %v2253, %v2253
      %v2286 = vpack.c.bf16 %v2254, %v2254
      %v2287 = vpack.c.bf16 %v2255, %v2255
      %v2288 = vpack.c.bf16 %v2256, %v2256
      %v2289 = vpack.c.bf16 %v2257, %v2257
      %v2290 = vpack.c.bf16 %v2258, %v2258
      %v2291 = vpack.c.bf16 %v2259, %v2259
      %v2292 = vpack.c.bf16 %v2260, %v2260
      %v2293 = vpack.c.bf16 %v2261, %v2261
      %v2294 = vpack.c.bf16 %v2262, %v2262
      %v2295 = vpack.c.bf16 %v2263, %v2263
      %v2296 = vpack.c.bf16 %v2264, %v2264
      %v2297 = vpack.c.bf16 %v2265, %v2265
      %v2298 = vpack.c.bf16 %v2266, %v2266
      %v2299 = vpack.c.bf16 %v2267, %v2267
      %v2300 = vpack.c.bf16 %v2268, %v2268
      %v2301 = vpack.c.bf16 %v2269, %v2269
      %v2302 = vpack.c.bf16 %v2270, %v2270
      %v2303 = vpack.c.bf16 %v2271, %v2271
      %v2304 = vpack.c.bf16 %v2272, %v2272
      %v2305 = vpack.c.bf16 %v2273, %v2273
      %v2306 = vpack.c.bf16 %v2274, %v2274
      %v2307 = vpack.c.bf16 %v2275, %v2275
      %2308 = vst [vmem:[#allocation11] sm:$0xf] %v2276
      %2309 = vst [vmem:[#allocation11 + $0x8] sm:$0xf] %v2277
      %2310 = vst [vmem:[#allocation11 + $0x10] sm:$0xf] %v2278
      %2311 = vst [vmem:[#allocation11 + $0x18] sm:$0xf] %v2279
      %2312 = vst [vmem:[#allocation11 + $0x20] sm:$0xf] %v2280
      %2313 = vst [vmem:[#allocation11 + $0x28] sm:$0xf] %v2281
      %2314 = vst [vmem:[#allocation11 + $0x30] sm:$0xf] %v2282
      %2315 = vst [vmem:[#allocation11 + $0x38] sm:$0xf] %v2283
      %2316 = vst [vmem:[#allocation11 + $0x40] sm:$0xf] %v2284
      %2317 = vst [vmem:[#allocation11 + $0x48] sm:$0xf] %v2285
      %2318 = vst [vmem:[#allocation11 + $0x50] sm:$0xf] %v2286
      %2319 = vst [vmem:[#allocation11 + $0x58] sm:$0xf] %v2287
      %2320 = vst [vmem:[#allocation11 + $0x60] sm:$0xf] %v2288
      %2321 = vst [vmem:[#allocation11 + $0x68] sm:$0xf] %v2289
      %2322 = vst [vmem:[#allocation11 + $0x70] sm:$0xf] %v2290
      %2323 = vst [vmem:[#allocation11 + $0x78] sm:$0xf] %v2291
      %2324 = vst [vmem:[#allocation11 + $0x80] sm:$0xf] %v2292
      %2325 = vst [vmem:[#allocation11 + $0x88] sm:$0xf] %v2293
      %2326 = vst [vmem:[#allocation11 + $0x90] sm:$0xf] %v2294
      %2327 = vst [vmem:[#allocation11 + $0x98] sm:$0xf] %v2295
      %2328 = vst [vmem:[#allocation11 + $0xa0] sm:$0xf] %v2296
      %2329 = vst [vmem:[#allocation11 + $0xa8] sm:$0xf] %v2297
      %2330 = vst [vmem:[#allocation11 + $0xb0] sm:$0xf] %v2298
      %2331 = vst [vmem:[#allocation11 + $0xb8] sm:$0xf] %v2299
      %2332 = vst [vmem:[#allocation11 + $0xc0] sm:$0xf] %v2300
      %2333 = vst [vmem:[#allocation11 + $0xc8] sm:$0xf] %v2301
      %2334 = vst [vmem:[#allocation11 + $0xd0] sm:$0xf] %v2302
      %2335 = vst [vmem:[#allocation11 + $0xd8] sm:$0xf] %v2303
      %2336 = vst [vmem:[#allocation11 + $0xe0] sm:$0xf] %v2304
      %2337 = vst [vmem:[#allocation11 + $0xe8] sm:$0xf] %v2305
      %2338 = vst [vmem:[#allocation11 + $0xf0] sm:$0xf] %v2306
      %2339 = vst [vmem:[#allocation11 + $0xf8] sm:$0xf] %v2307
      %v2340 = vmul.f32 %v1957, %v1892
      %v2341 = vmul.f32 %v1961, %v1893
      %v2342 = vmul.f32 %v1965, %v1894
      %v2343 = vmul.f32 %v1969, %v1895
      %v2344 = vmul.f32 %v1973, %v1896
      %v2345 = vmul.f32 %v1977, %v1897
      %v2346 = vmul.f32 %v1981, %v1898
      %v2347 = vmul.f32 %v1985, %v1899
      %v2348 = vmul.f32 %v1989, %v1900
      %v2349 = vmul.f32 %v1993, %v1901
      %v2350 = vmul.f32 %v1997, %v1902
      %v2351 = vmul.f32 %v2001, %v1903
      %v2352 = vmul.f32 %v2005, %v1904
      %v2353 = vmul.f32 %v2009, %v1905
      %v2354 = vmul.f32 %v2013, %v1906
      %v2355 = vmul.f32 %v2017, %v1907
      %v2356 = vmul.f32 %v2021, %v1908
      %v2357 = vmul.f32 %v2025, %v1909
      %v2358 = vmul.f32 %v2029, %v1910
      %v2359 = vmul.f32 %v2033, %v1911
      %v2360 = vmul.f32 %v2037, %v1912
      %v2361 = vmul.f32 %v2041, %v1913
      %v2362 = vmul.f32 %v2045, %v1914
      %v2363 = vmul.f32 %v2049, %v1915
      %v2364 = vmul.f32 %v2053, %v1916
      %v2365 = vmul.f32 %v2057, %v1917
      %v2366 = vmul.f32 %v2061, %v1918
      %v2367 = vmul.f32 %v2065, %v1919
      %v2368 = vmul.f32 %v2069, %v1920
      %v2369 = vmul.f32 %v2073, %v1921
      %v2370 = vmul.f32 %v2077, %v1922
      %v2371 = vmul.f32 %v2081, %v1923
      %2372 = vrot.lane.b32.xlu0 %v1957, 64
      %v2373 = vpop.permute.xlu0 %2372
      %2374 = vrot.lane.b32.xlu0 %v1961, 64
      %v2375 = vpop.permute.xlu0 %2374
      %2376 = vrot.lane.b32.xlu0 %v1965, 64
      %v2377 = vpop.permute.xlu0 %2376
      %2378 = vrot.lane.b32.xlu0 %v1969, 64
      %v2379 = vpop.permute.xlu0 %2378
      %2380 = vrot.lane.b32.xlu0 %v1973, 64
      %v2381 = vpop.permute.xlu0 %2380
      %2382 = vrot.lane.b32.xlu0 %v1977, 64
      %v2383 = vpop.permute.xlu0 %2382
      %2384 = vrot.lane.b32.xlu0 %v1981, 64
      %v2385 = vpop.permute.xlu0 %2384
      %2386 = vrot.lane.b32.xlu0 %v1985, 64
      %v2387 = vpop.permute.xlu0 %2386
      %2388 = vrot.lane.b32.xlu0 %v1989, 64
      %v2389 = vpop.permute.xlu0 %2388
      %2390 = vrot.lane.b32.xlu0 %v1993, 64
      %v2391 = vpop.permute.xlu0 %2390
      %2392 = vrot.lane.b32.xlu0 %v1997, 64
      %v2393 = vpop.permute.xlu0 %2392
      %2394 = vrot.lane.b32.xlu0 %v2001, 64
      %v2395 = vpop.permute.xlu0 %2394
      %2396 = vrot.lane.b32.xlu0 %v2005, 64
      %v2397 = vpop.permute.xlu0 %2396
      %2398 = vrot.lane.b32.xlu0 %v2009, 64
      %v2399 = vpop.permute.xlu0 %2398
      %2400 = vrot.lane.b32.xlu0 %v2013, 64
      %v2401 = vpop.permute.xlu0 %2400
      %2402 = vrot.lane.b32.xlu0 %v2017, 64
      %v2403 = vpop.permute.xlu0 %2402
      %2404 = vrot.lane.b32.xlu0 %v2021, 64
      %v2405 = vpop.permute.xlu0 %2404
      %2406 = vrot.lane.b32.xlu0 %v2025, 64
      %v2407 = vpop.permute.xlu0 %2406
      %2408 = vrot.lane.b32.xlu0 %v2029, 64
      %v2409 = vpop.permute.xlu0 %2408
      %2410 = vrot.lane.b32.xlu0 %v2033, 64
      %v2411 = vpop.permute.xlu0 %2410
      %2412 = vrot.lane.b32.xlu0 %v2037, 64
      %v2413 = vpop.permute.xlu0 %2412
      %2414 = vrot.lane.b32.xlu0 %v2041, 64
      %v2415 = vpop.permute.xlu0 %2414
      %2416 = vrot.lane.b32.xlu0 %v2045, 64
      %v2417 = vpop.permute.xlu0 %2416
      %2418 = vrot.lane.b32.xlu0 %v2049, 64
      %v2419 = vpop.permute.xlu0 %2418
      %2420 = vrot.lane.b32.xlu0 %v2053, 64
      %v2421 = vpop.permute.xlu0 %2420
      %2422 = vrot.lane.b32.xlu0 %v2057, 64
      %v2423 = vpop.permute.xlu0 %2422
      %2424 = vrot.lane.b32.xlu0 %v2061, 64
      %v2425 = vpop.permute.xlu0 %2424
      %2426 = vrot.lane.b32.xlu0 %v2065, 64
      %v2427 = vpop.permute.xlu0 %2426
      %2428 = vrot.lane.b32.xlu0 %v2069, 64
      %v2429 = vpop.permute.xlu0 %2428
      %2430 = vrot.lane.b32.xlu0 %v2073, 64
      %v2431 = vpop.permute.xlu0 %2430
      %2432 = vrot.lane.b32.xlu0 %v2077, 64
      %v2433 = vpop.permute.xlu0 %2432
      %2434 = vrot.lane.b32.xlu0 %v2081, 64
      %v2435 = vpop.permute.xlu0 %2434
      %v2436 = vmul.f32 %v2373, %v1924
      %v2437 = vmul.f32 %v2375, %v1925
      %v2438 = vmul.f32 %v2377, %v1926
      %v2439 = vmul.f32 %v2379, %v1927
      %v2440 = vmul.f32 %v2381, %v1928
      %v2441 = vmul.f32 %v2383, %v1929
      %v2442 = vmul.f32 %v2385, %v1930
      %v2443 = vmul.f32 %v2387, %v1931
      %v2444 = vmul.f32 %v2389, %v1932
      %v2445 = vmul.f32 %v2391, %v1933
      %v2446 = vmul.f32 %v2393, %v1934
      %v2447 = vmul.f32 %v2395, %v1935
      %v2448 = vmul.f32 %v2397, %v1936
      %v2449 = vmul.f32 %v2399, %v1937
      %v2450 = vmul.f32 %v2401, %v1938
      %v2451 = vmul.f32 %v2403, %v1939
      %v2452 = vmul.f32 %v2405, %v1940
      %v2453 = vmul.f32 %v2407, %v1941
      %v2454 = vmul.f32 %v2409, %v1942
      %v2455 = vmul.f32 %v2411, %v1943
      %v2456 = vmul.f32 %v2413, %v1944
      %v2457 = vmul.f32 %v2415, %v1945
      %v2458 = vmul.f32 %v2417, %v1946
      %v2459 = vmul.f32 %v2419, %v1947
      %v2460 = vmul.f32 %v2421, %v1948
      %v2461 = vmul.f32 %v2423, %v1949
      %v2462 = vmul.f32 %v2425, %v1950
      %v2463 = vmul.f32 %v2427, %v1951
      %v2464 = vmul.f32 %v2429, %v1952
      %v2465 = vmul.f32 %v2431, %v1953
      %v2466 = vmul.f32 %v2433, %v1954
      %v2467 = vmul.f32 %v2435, %v1955
      %v2468 = vadd.f32 %v2340, %v2436
      %v2469 = vadd.f32 %v2341, %v2437
      %v2470 = vadd.f32 %v2342, %v2438
      %v2471 = vadd.f32 %v2343, %v2439
      %v2472 = vadd.f32 %v2344, %v2440
      %v2473 = vadd.f32 %v2345, %v2441
      %v2474 = vadd.f32 %v2346, %v2442
      %v2475 = vadd.f32 %v2347, %v2443
      %v2476 = vadd.f32 %v2348, %v2444
      %v2477 = vadd.f32 %v2349, %v2445
      %v2478 = vadd.f32 %v2350, %v2446
      %v2479 = vadd.f32 %v2351, %v2447
      %v2480 = vadd.f32 %v2352, %v2448
      %v2481 = vadd.f32 %v2353, %v2449
      %v2482 = vadd.f32 %v2354, %v2450
      %v2483 = vadd.f32 %v2355, %v2451
      %v2484 = vadd.f32 %v2356, %v2452
      %v2485 = vadd.f32 %v2357, %v2453
      %v2486 = vadd.f32 %v2358, %v2454
      %v2487 = vadd.f32 %v2359, %v2455
      %v2488 = vadd.f32 %v2360, %v2456
      %v2489 = vadd.f32 %v2361, %v2457
      %v2490 = vadd.f32 %v2362, %v2458
      %v2491 = vadd.f32 %v2363, %v2459
      %v2492 = vadd.f32 %v2364, %v2460
      %v2493 = vadd.f32 %v2365, %v2461
      %v2494 = vadd.f32 %v2366, %v2462
      %v2495 = vadd.f32 %v2367, %v2463
      %v2496 = vadd.f32 %v2368, %v2464
      %v2497 = vadd.f32 %v2369, %v2465
      %v2498 = vadd.f32 %v2370, %v2466
      %v2499 = vadd.f32 %v2371, %v2467
      %v2500 = vmul.f32 %v2468, 0.088388346
      %v2501 = vmul.f32 %v2469, 0.088388346
      %v2502 = vmul.f32 %v2470, 0.088388346
      %v2503 = vmul.f32 %v2471, 0.088388346
      %v2504 = vmul.f32 %v2472, 0.088388346
      %v2505 = vmul.f32 %v2473, 0.088388346
      %v2506 = vmul.f32 %v2474, 0.088388346
      %v2507 = vmul.f32 %v2475, 0.088388346
      %v2508 = vmul.f32 %v2476, 0.088388346
      %v2509 = vmul.f32 %v2477, 0.088388346
      %v2510 = vmul.f32 %v2478, 0.088388346
      %v2511 = vmul.f32 %v2479, 0.088388346
      %v2512 = vmul.f32 %v2480, 0.088388346
      %v2513 = vmul.f32 %v2481, 0.088388346
      %v2514 = vmul.f32 %v2482, 0.088388346
      %v2515 = vmul.f32 %v2483, 0.088388346
      %v2516 = vmul.f32 %v2484, 0.088388346
      %v2517 = vmul.f32 %v2485, 0.088388346
      %v2518 = vmul.f32 %v2486, 0.088388346
      %v2519 = vmul.f32 %v2487, 0.088388346
      %v2520 = vmul.f32 %v2488, 0.088388346
      %v2521 = vmul.f32 %v2489, 0.088388346
      %v2522 = vmul.f32 %v2490, 0.088388346
      %v2523 = vmul.f32 %v2491, 0.088388346
      %v2524 = vmul.f32 %v2492, 0.088388346
      %v2525 = vmul.f32 %v2493, 0.088388346
      %v2526 = vmul.f32 %v2494, 0.088388346
      %v2527 = vmul.f32 %v2495, 0.088388346
      %v2528 = vmul.f32 %v2496, 0.088388346
      %v2529 = vmul.f32 %v2497, 0.088388346
      %v2530 = vmul.f32 %v2498, 0.088388346
      %v2531 = vmul.f32 %v2499, 0.088388346
      %v2532 = vpack.c.bf16 %v2500, %v2500
      %v2533 = vpack.c.bf16 %v2501, %v2501
      %v2534 = vpack.c.bf16 %v2502, %v2502
      %v2535 = vpack.c.bf16 %v2503, %v2503
      %v2536 = vpack.c.bf16 %v2504, %v2504
      %v2537 = vpack.c.bf16 %v2505, %v2505
      %v2538 = vpack.c.bf16 %v2506, %v2506
      %v2539 = vpack.c.bf16 %v2507, %v2507
      %v2540 = vpack.c.bf16 %v2508, %v2508
      %v2541 = vpack.c.bf16 %v2509, %v2509
      %v2542 = vpack.c.bf16 %v2510, %v2510
      %v2543 = vpack.c.bf16 %v2511, %v2511
      %v2544 = vpack.c.bf16 %v2512, %v2512
      %v2545 = vpack.c.bf16 %v2513, %v2513
      %v2546 = vpack.c.bf16 %v2514, %v2514
      %v2547 = vpack.c.bf16 %v2515, %v2515
      %v2548 = vpack.c.bf16 %v2516, %v2516
      %v2549 = vpack.c.bf16 %v2517, %v2517
      %v2550 = vpack.c.bf16 %v2518, %v2518
      %v2551 = vpack.c.bf16 %v2519, %v2519
      %v2552 = vpack.c.bf16 %v2520, %v2520
      %v2553 = vpack.c.bf16 %v2521, %v2521
      %v2554 = vpack.c.bf16 %v2522, %v2522
      %v2555 = vpack.c.bf16 %v2523, %v2523
      %v2556 = vpack.c.bf16 %v2524, %v2524
      %v2557 = vpack.c.bf16 %v2525, %v2525
      %v2558 = vpack.c.bf16 %v2526, %v2526
      %v2559 = vpack.c.bf16 %v2527, %v2527
      %v2560 = vpack.c.bf16 %v2528, %v2528
      %v2561 = vpack.c.bf16 %v2529, %v2529
      %v2562 = vpack.c.bf16 %v2530, %v2530
      %v2563 = vpack.c.bf16 %v2531, %v2531
      %2564 = vst [vmem:[#allocation11 + $0x4] sm:$0xf] %v2532
      %2565 = vst [vmem:[#allocation11 + $0xc] sm:$0xf] %v2533
      %2566 = vst [vmem:[#allocation11 + $0x14] sm:$0xf] %v2534
      %2567 = vst [vmem:[#allocation11 + $0x1c] sm:$0xf] %v2535
      %2568 = vst [vmem:[#allocation11 + $0x24] sm:$0xf] %v2536
      %2569 = vst [vmem:[#allocation11 + $0x2c] sm:$0xf] %v2537
      %2570 = vst [vmem:[#allocation11 + $0x34] sm:$0xf] %v2538
      %2571 = vst [vmem:[#allocation11 + $0x3c] sm:$0xf] %v2539
      %2572 = vst [vmem:[#allocation11 + $0x44] sm:$0xf] %v2540
      %2573 = vst [vmem:[#allocation11 + $0x4c] sm:$0xf] %v2541
      %2574 = vst [vmem:[#allocation11 + $0x54] sm:$0xf] %v2542
      %2575 = vst [vmem:[#allocation11 + $0x5c] sm:$0xf] %v2543
      %2576 = vst [vmem:[#allocation11 + $0x64] sm:$0xf] %v2544
      %2577 = vst [vmem:[#allocation11 + $0x6c] sm:$0xf] %v2545
      %2578 = vst [vmem:[#allocation11 + $0x74] sm:$0xf] %v2546
      %2579 = vst [vmem:[#allocation11 + $0x7c] sm:$0xf] %v2547
      %2580 = vst [vmem:[#allocation11 + $0x84] sm:$0xf] %v2548
      %2581 = vst [vmem:[#allocation11 + $0x8c] sm:$0xf] %v2549
      %2582 = vst [vmem:[#allocation11 + $0x94] sm:$0xf] %v2550
      %2583 = vst [vmem:[#allocation11 + $0x9c] sm:$0xf] %v2551
      %2584 = vst [vmem:[#allocation11 + $0xa4] sm:$0xf] %v2552
      %2585 = vst [vmem:[#allocation11 + $0xac] sm:$0xf] %v2553
      %2586 = vst [vmem:[#allocation11 + $0xb4] sm:$0xf] %v2554
      %2587 = vst [vmem:[#allocation11 + $0xbc] sm:$0xf] %v2555
      %2588 = vst [vmem:[#allocation11 + $0xc4] sm:$0xf] %v2556
      %2589 = vst [vmem:[#allocation11 + $0xcc] sm:$0xf] %v2557
      %2590 = vst [vmem:[#allocation11 + $0xd4] sm:$0xf] %v2558
      %2591 = vst [vmem:[#allocation11 + $0xdc] sm:$0xf] %v2559
      %2592 = vst [vmem:[#allocation11 + $0xe4] sm:$0xf] %v2560
      %2593 = vst [vmem:[#allocation11 + $0xec] sm:$0xf] %v2561
      %2594 = vst [vmem:[#allocation11 + $0xf4] sm:$0xf] %v2562
      %2595 = vst [vmem:[#allocation11 + $0xfc] sm:$0xf] %v2563
      %v2596 = vmul.f32 %v1958, %v1892
      %v2597 = vmul.f32 %v1962, %v1893
      %v2598 = vmul.f32 %v1966, %v1894
      %v2599 = vmul.f32 %v1970, %v1895
      %v2600 = vmul.f32 %v1974, %v1896
      %v2601 = vmul.f32 %v1978, %v1897
      %v2602 = vmul.f32 %v1982, %v1898
      %v2603 = vmul.f32 %v1986, %v1899
      %v2604 = vmul.f32 %v1990, %v1900
      %v2605 = vmul.f32 %v1994, %v1901
      %v2606 = vmul.f32 %v1998, %v1902
      %v2607 = vmul.f32 %v2002, %v1903
      %v2608 = vmul.f32 %v2006, %v1904
      %v2609 = vmul.f32 %v2010, %v1905
      %v2610 = vmul.f32 %v2014, %v1906
      %v2611 = vmul.f32 %v2018, %v1907
      %v2612 = vmul.f32 %v2022, %v1908
      %v2613 = vmul.f32 %v2026, %v1909
      %v2614 = vmul.f32 %v2030, %v1910
      %v2615 = vmul.f32 %v2034, %v1911
      %v2616 = vmul.f32 %v2038, %v1912
      %v2617 = vmul.f32 %v2042, %v1913
      %v2618 = vmul.f32 %v2046, %v1914
      %v2619 = vmul.f32 %v2050, %v1915
      %v2620 = vmul.f32 %v2054, %v1916
      %v2621 = vmul.f32 %v2058, %v1917
      %v2622 = vmul.f32 %v2062, %v1918
      %v2623 = vmul.f32 %v2066, %v1919
      %v2624 = vmul.f32 %v2070, %v1920
      %v2625 = vmul.f32 %v2074, %v1921
      %v2626 = vmul.f32 %v2078, %v1922
      %v2627 = vmul.f32 %v2082, %v1923
      %2628 = vrot.lane.b32.xlu0 %v1958, 64
      %v2629 = vpop.permute.xlu0 %2628
      %2630 = vrot.lane.b32.xlu0 %v1962, 64
      %v2631 = vpop.permute.xlu0 %2630
      %2632 = vrot.lane.b32.xlu0 %v1966, 64
      %v2633 = vpop.permute.xlu0 %2632
      %2634 = vrot.lane.b32.xlu0 %v1970, 64
      %v2635 = vpop.permute.xlu0 %2634
      %2636 = vrot.lane.b32.xlu0 %v1974, 64
      %v2637 = vpop.permute.xlu0 %2636
      %2638 = vrot.lane.b32.xlu0 %v1978, 64
      %v2639 = vpop.permute.xlu0 %2638
      %2640 = vrot.lane.b32.xlu0 %v1982, 64
      %v2641 = vpop.permute.xlu0 %2640
      %2642 = vrot.lane.b32.xlu0 %v1986, 64
      %v2643 = vpop.permute.xlu0 %2642
      %2644 = vrot.lane.b32.xlu0 %v1990, 64
      %v2645 = vpop.permute.xlu0 %2644
      %2646 = vrot.lane.b32.xlu0 %v1994, 64
      %v2647 = vpop.permute.xlu0 %2646
      %2648 = vrot.lane.b32.xlu0 %v1998, 64
      %v2649 = vpop.permute.xlu0 %2648
      %2650 = vrot.lane.b32.xlu0 %v2002, 64
      %v2651 = vpop.permute.xlu0 %2650
      %2652 = vrot.lane.b32.xlu0 %v2006, 64
      %v2653 = vpop.permute.xlu0 %2652
      %2654 = vrot.lane.b32.xlu0 %v2010, 64
      %v2655 = vpop.permute.xlu0 %2654
      %2656 = vrot.lane.b32.xlu0 %v2014, 64
      %v2657 = vpop.permute.xlu0 %2656
      %2658 = vrot.lane.b32.xlu0 %v2018, 64
      %v2659 = vpop.permute.xlu0 %2658
      %2660 = vrot.lane.b32.xlu0 %v2022, 64
      %v2661 = vpop.permute.xlu0 %2660
      %2662 = vrot.lane.b32.xlu0 %v2026, 64
      %v2663 = vpop.permute.xlu0 %2662
      %2664 = vrot.lane.b32.xlu0 %v2030, 64
      %v2665 = vpop.permute.xlu0 %2664
      %2666 = vrot.lane.b32.xlu0 %v2034, 64
      %v2667 = vpop.permute.xlu0 %2666
      %2668 = vrot.lane.b32.xlu0 %v2038, 64
      %v2669 = vpop.permute.xlu0 %2668
      %2670 = vrot.lane.b32.xlu0 %v2042, 64
      %v2671 = vpop.permute.xlu0 %2670
      %2672 = vrot.lane.b32.xlu0 %v2046, 64
      %v2673 = vpop.permute.xlu0 %2672
      %2674 = vrot.lane.b32.xlu0 %v2050, 64
      %v2675 = vpop.permute.xlu0 %2674
      %2676 = vrot.lane.b32.xlu0 %v2054, 64
      %v2677 = vpop.permute.xlu0 %2676
      %2678 = vrot.lane.b32.xlu0 %v2058, 64
      %v2679 = vpop.permute.xlu0 %2678
      %2680 = vrot.lane.b32.xlu0 %v2062, 64
      %v2681 = vpop.permute.xlu0 %2680
      %2682 = vrot.lane.b32.xlu0 %v2066, 64
      %v2683 = vpop.permute.xlu0 %2682
      %2684 = vrot.lane.b32.xlu0 %v2070, 64
      %v2685 = vpop.permute.xlu0 %2684
      %2686 = vrot.lane.b32.xlu0 %v2074, 64
      %v2687 = vpop.permute.xlu0 %2686
      %2688 = vrot.lane.b32.xlu0 %v2078, 64
      %v2689 = vpop.permute.xlu0 %2688
      %2690 = vrot.lane.b32.xlu0 %v2082, 64
      %v2691 = vpop.permute.xlu0 %2690
      %v2692 = vmul.f32 %v2629, %v1924
      %v2693 = vmul.f32 %v2631, %v1925
      %v2694 = vmul.f32 %v2633, %v1926
      %v2695 = vmul.f32 %v2635, %v1927
      %v2696 = vmul.f32 %v2637, %v1928
      %v2697 = vmul.f32 %v2639, %v1929
      %v2698 = vmul.f32 %v2641, %v1930
      %v2699 = vmul.f32 %v2643, %v1931
      %v2700 = vmul.f32 %v2645, %v1932
      %v2701 = vmul.f32 %v2647, %v1933
      %v2702 = vmul.f32 %v2649, %v1934
      %v2703 = vmul.f32 %v2651, %v1935
      %v2704 = vmul.f32 %v2653, %v1936
      %v2705 = vmul.f32 %v2655, %v1937
      %v2706 = vmul.f32 %v2657, %v1938
      %v2707 = vmul.f32 %v2659, %v1939
      %v2708 = vmul.f32 %v2661, %v1940
      %v2709 = vmul.f32 %v2663, %v1941
      %v2710 = vmul.f32 %v2665, %v1942
      %v2711 = vmul.f32 %v2667, %v1943
      %v2712 = vmul.f32 %v2669, %v1944
      %v2713 = vmul.f32 %v2671, %v1945
      %v2714 = vmul.f32 %v2673, %v1946
      %v2715 = vmul.f32 %v2675, %v1947
      %v2716 = vmul.f32 %v2677, %v1948
      %v2717 = vmul.f32 %v2679, %v1949
      %v2718 = vmul.f32 %v2681, %v1950
      %v2719 = vmul.f32 %v2683, %v1951
      %v2720 = vmul.f32 %v2685, %v1952
      %v2721 = vmul.f32 %v2687, %v1953
      %v2722 = vmul.f32 %v2689, %v1954
      %v2723 = vmul.f32 %v2691, %v1955
      %v2724 = vadd.f32 %v2596, %v2692
      %v2725 = vadd.f32 %v2597, %v2693
      %v2726 = vadd.f32 %v2598, %v2694
      %v2727 = vadd.f32 %v2599, %v2695
      %v2728 = vadd.f32 %v2600, %v2696
      %v2729 = vadd.f32 %v2601, %v2697
      %v2730 = vadd.f32 %v2602, %v2698
      %v2731 = vadd.f32 %v2603, %v2699
      %v2732 = vadd.f32 %v2604, %v2700
      %v2733 = vadd.f32 %v2605, %v2701
      %v2734 = vadd.f32 %v2606, %v2702
      %v2735 = vadd.f32 %v2607, %v2703
      %v2736 = vadd.f32 %v2608, %v2704
      %v2737 = vadd.f32 %v2609, %v2705
      %v2738 = vadd.f32 %v2610, %v2706
      %v2739 = vadd.f32 %v2611, %v2707
      %v2740 = vadd.f32 %v2612, %v2708
      %v2741 = vadd.f32 %v2613, %v2709
      %v2742 = vadd.f32 %v2614, %v2710
      %v2743 = vadd.f32 %v2615, %v2711
      %v2744 = vadd.f32 %v2616, %v2712
      %v2745 = vadd.f32 %v2617, %v2713
      %v2746 = vadd.f32 %v2618, %v2714
      %v2747 = vadd.f32 %v2619, %v2715
      %v2748 = vadd.f32 %v2620, %v2716
      %v2749 = vadd.f32 %v2621, %v2717
      %v2750 = vadd.f32 %v2622, %v2718
      %v2751 = vadd.f32 %v2623, %v2719
      %v2752 = vadd.f32 %v2624, %v2720
      %v2753 = vadd.f32 %v2625, %v2721
      %v2754 = vadd.f32 %v2626, %v2722
      %v2755 = vadd.f32 %v2627, %v2723
      %v2756 = vpack.c.bf16 %v2724, %v2724
      %v2757 = vpack.c.bf16 %v2725, %v2725
      %v2758 = vpack.c.bf16 %v2726, %v2726
      %v2759 = vpack.c.bf16 %v2727, %v2727
      %v2760 = vpack.c.bf16 %v2728, %v2728
      %v2761 = vpack.c.bf16 %v2729, %v2729
      %v2762 = vpack.c.bf16 %v2730, %v2730
      %v2763 = vpack.c.bf16 %v2731, %v2731
      %v2764 = vpack.c.bf16 %v2732, %v2732
      %v2765 = vpack.c.bf16 %v2733, %v2733
      %v2766 = vpack.c.bf16 %v2734, %v2734
      %v2767 = vpack.c.bf16 %v2735, %v2735
      %v2768 = vpack.c.bf16 %v2736, %v2736
      %v2769 = vpack.c.bf16 %v2737, %v2737
      %v2770 = vpack.c.bf16 %v2738, %v2738
      %v2771 = vpack.c.bf16 %v2739, %v2739
      %v2772 = vpack.c.bf16 %v2740, %v2740
      %v2773 = vpack.c.bf16 %v2741, %v2741
      %v2774 = vpack.c.bf16 %v2742, %v2742
      %v2775 = vpack.c.bf16 %v2743, %v2743
      %v2776 = vpack.c.bf16 %v2744, %v2744
      %v2777 = vpack.c.bf16 %v2745, %v2745
      %v2778 = vpack.c.bf16 %v2746, %v2746
      %v2779 = vpack.c.bf16 %v2747, %v2747
      %v2780 = vpack.c.bf16 %v2748, %v2748
      %v2781 = vpack.c.bf16 %v2749, %v2749
      %v2782 = vpack.c.bf16 %v2750, %v2750
      %v2783 = vpack.c.bf16 %v2751, %v2751
      %v2784 = vpack.c.bf16 %v2752, %v2752
      %v2785 = vpack.c.bf16 %v2753, %v2753
      %v2786 = vpack.c.bf16 %v2754, %v2754
      %v2787 = vpack.c.bf16 %v2755, %v2755
      %2788 = vst [vmem:[#allocation12] sm:$0xf] %v2756
      %2789 = vst [vmem:[#allocation12 + $0x4] sm:$0xf] %v2757
      %2790 = vst [vmem:[#allocation12 + $0x8] sm:$0xf] %v2758
      %2791 = vst [vmem:[#allocation12 + $0xc] sm:$0xf] %v2759
      %2792 = vst [vmem:[#allocation12 + $0x10] sm:$0xf] %v2760
      %2793 = vst [vmem:[#allocation12 + $0x14] sm:$0xf] %v2761
      %2794 = vst [vmem:[#allocation12 + $0x18] sm:$0xf] %v2762
      %2795 = vst [vmem:[#allocation12 + $0x1c] sm:$0xf] %v2763
      %2796 = vst [vmem:[#allocation12 + $0x20] sm:$0xf] %v2764
      %2797 = vst [vmem:[#allocation12 + $0x24] sm:$0xf] %v2765
      %2798 = vst [vmem:[#allocation12 + $0x28] sm:$0xf] %v2766
      %2799 = vst [vmem:[#allocation12 + $0x2c] sm:$0xf] %v2767
      %2800 = vst [vmem:[#allocation12 + $0x30] sm:$0xf] %v2768
      %2801 = vst [vmem:[#allocation12 + $0x34] sm:$0xf] %v2769
      %2802 = vst [vmem:[#allocation12 + $0x38] sm:$0xf] %v2770
      %2803 = vst [vmem:[#allocation12 + $0x3c] sm:$0xf] %v2771
      %2804 = vst [vmem:[#allocation12 + $0x40] sm:$0xf] %v2772
      %2805 = vst [vmem:[#allocation12 + $0x44] sm:$0xf] %v2773
      %2806 = vst [vmem:[#allocation12 + $0x48] sm:$0xf] %v2774
      %2807 = vst [vmem:[#allocation12 + $0x4c] sm:$0xf] %v2775
      %2808 = vst [vmem:[#allocation12 + $0x50] sm:$0xf] %v2776
      %2809 = vst [vmem:[#allocation12 + $0x54] sm:$0xf] %v2777
      %2810 = vst [vmem:[#allocation12 + $0x58] sm:$0xf] %v2778
      %2811 = vst [vmem:[#allocation12 + $0x5c] sm:$0xf] %v2779
      %2812 = vst [vmem:[#allocation12 + $0x60] sm:$0xf] %v2780
      %2813 = vst [vmem:[#allocation12 + $0x64] sm:$0xf] %v2781
      %2814 = vst [vmem:[#allocation12 + $0x68] sm:$0xf] %v2782
      %2815 = vst [vmem:[#allocation12 + $0x6c] sm:$0xf] %v2783
      %2816 = vst [vmem:[#allocation12 + $0x70] sm:$0xf] %v2784
      %2817 = vst [vmem:[#allocation12 + $0x74] sm:$0xf] %v2785
      %2818 = vst [vmem:[#allocation12 + $0x78] sm:$0xf] %v2786
      %2819 = vst [vmem:[#allocation12 + $0x7c] sm:$0xf] %v2787
      %v2820 = vpack.c.bf16 %v1959, %v1959
      %v2821 = vpack.c.bf16 %v1963, %v1963
      %v2822 = vpack.c.bf16 %v1967, %v1967
      %v2823 = vpack.c.bf16 %v1971, %v1971
      %v2824 = vpack.c.bf16 %v1975, %v1975
      %v2825 = vpack.c.bf16 %v1979, %v1979
      %v2826 = vpack.c.bf16 %v1983, %v1983
      %v2827 = vpack.c.bf16 %v1987, %v1987
      %v2828 = vpack.c.bf16 %v1991, %v1991
      %v2829 = vpack.c.bf16 %v1995, %v1995
      %v2830 = vpack.c.bf16 %v1999, %v1999
      %v2831 = vpack.c.bf16 %v2003, %v2003
      %v2832 = vpack.c.bf16 %v2007, %v2007
      %v2833 = vpack.c.bf16 %v2011, %v2011
      %v2834 = vpack.c.bf16 %v2015, %v2015
      %v2835 = vpack.c.bf16 %v2019, %v2019
      %v2836 = vpack.c.bf16 %v2023, %v2023
      %v2837 = vpack.c.bf16 %v2027, %v2027
      %v2838 = vpack.c.bf16 %v2031, %v2031
      %v2839 = vpack.c.bf16 %v2035, %v2035
      %v2840 = vpack.c.bf16 %v2039, %v2039
      %v2841 = vpack.c.bf16 %v2043, %v2043
      %v2842 = vpack.c.bf16 %v2047, %v2047
      %v2843 = vpack.c.bf16 %v2051, %v2051
      %v2844 = vpack.c.bf16 %v2055, %v2055
      %v2845 = vpack.c.bf16 %v2059, %v2059
      %v2846 = vpack.c.bf16 %v2063, %v2063
      %v2847 = vpack.c.bf16 %v2067, %v2067
      %v2848 = vpack.c.bf16 %v2071, %v2071
      %v2849 = vpack.c.bf16 %v2075, %v2075
      %v2850 = vpack.c.bf16 %v2079, %v2079
      %v2851 = vpack.c.bf16 %v2083, %v2083
      %2852 = vst [vmem:[#allocation14] sm:$0xf] %v2820
      %2853 = vst [vmem:[#allocation14 + $0x4] sm:$0xf] %v2821
      %2854 = vst [vmem:[#allocation14 + $0x8] sm:$0xf] %v2822
      %2855 = vst [vmem:[#allocation14 + $0xc] sm:$0xf] %v2823
      %2856 = vst [vmem:[#allocation14 + $0x10] sm:$0xf] %v2824
      %2857 = vst [vmem:[#allocation14 + $0x14] sm:$0xf] %v2825
      %2858 = vst [vmem:[#allocation14 + $0x18] sm:$0xf] %v2826
      %2859 = vst [vmem:[#allocation14 + $0x1c] sm:$0xf] %v2827
      %2860 = vst [vmem:[#allocation14 + $0x20] sm:$0xf] %v2828
      %2861 = vst [vmem:[#allocation14 + $0x24] sm:$0xf] %v2829
      %2862 = vst [vmem:[#allocation14 + $0x28] sm:$0xf] %v2830
      %2863 = vst [vmem:[#allocation14 + $0x2c] sm:$0xf] %v2831
      %2864 = vst [vmem:[#allocation14 + $0x30] sm:$0xf] %v2832
      %2865 = vst [vmem:[#allocation14 + $0x34] sm:$0xf] %v2833
      %2866 = vst [vmem:[#allocation14 + $0x38] sm:$0xf] %v2834
      %2867 = vst [vmem:[#allocation14 + $0x3c] sm:$0xf] %v2835
      %2868 = vst [vmem:[#allocation14 + $0x40] sm:$0xf] %v2836
      %2869 = vst [vmem:[#allocation14 + $0x44] sm:$0xf] %v2837
      %2870 = vst [vmem:[#allocation14 + $0x48] sm:$0xf] %v2838
      %2871 = vst [vmem:[#allocation14 + $0x4c] sm:$0xf] %v2839
      %2872 = vst [vmem:[#allocation14 + $0x50] sm:$0xf] %v2840
      %2873 = vst [vmem:[#allocation14 + $0x54] sm:$0xf] %v2841
      %2874 = vst [vmem:[#allocation14 + $0x58] sm:$0xf] %v2842
      %2875 = vst [vmem:[#allocation14 + $0x5c] sm:$0xf] %v2843
      %2876 = vst [vmem:[#allocation14 + $0x60] sm:$0xf] %v2844
      %2877 = vst [vmem:[#allocation14 + $0x64] sm:$0xf] %v2845
      %2878 = vst [vmem:[#allocation14 + $0x68] sm:$0xf] %v2846
      %2879 = vst [vmem:[#allocation14 + $0x6c] sm:$0xf] %v2847
      %2880 = vst [vmem:[#allocation14 + $0x70] sm:$0xf] %v2848
      %2881 = vst [vmem:[#allocation14 + $0x74] sm:$0xf] %v2849
      %2882 = vst [vmem:[#allocation14 + $0x78] sm:$0xf] %v2850
      %2883 = vst [vmem:[#allocation14 + $0x7c] sm:$0xf] %v2851
    $region41: #{tpu_custom_call.1} parent=1 // pred_fallthru
      _
    // Predicated region
    $region42: #{tpu_custom_call.1} parent=1 // pred_check
      _
    $region43: #{tpu_custom_call.1} parent=1 // pred_check_branch
      %2885 = sbr.rel (0) target = $region45
    $region44: #{tpu_custom_call.1} parent=1 // pred_region
      %2887 = vsyncadd [#allocation5], 0
      %s2888 = sshll.u32 [#allocation11], 4
      %s2889 = int_to_ptr.vmem [resolvable:$true] %s2888
      %s2890 = sshll.u32 %s4, 4
      %s2891 = int_to_ptr.hbm [resolvable:$true] %s2890
      %2896 = dma.vmem_to_hbm [thread:$0]  %s2889, 4096, %s2891, [#allocation5], 128, 128, 8
    $region45: #{tpu_custom_call.1} parent=1 // pred_fallthru
      _
    // Predicated region
    $region46: #{tpu_custom_call.1} parent=1 // pred_check
      _
    $region47: #{tpu_custom_call.1} parent=1 // pred_check_branch
      %2898 = sbr.rel (0) target = $region49
    $region48: #{tpu_custom_call.1} parent=1 // pred_region
      %2900 = vsyncadd [#allocation13], 0
      %s2901 = sshll.u32 [#allocation12], 4
      %s2902 = int_to_ptr.vmem [resolvable:$true] %s2901
      %s2903 = sshll.u32 %s5, 4
      %s2904 = int_to_ptr.hbm [resolvable:$true] %s2903
      %2909 = dma.vmem_to_hbm [thread:$0]  %s2902, 2048, %s2904, [#allocation13], 64, 64, 4
    $region49: #{tpu_custom_call.1} parent=1 // pred_fallthru
      _
    // Predicated region
    $region50: #{tpu_custom_call.1} parent=1 // pred_check
      _
    $region51: #{tpu_custom_call.1} parent=1 // pred_check_branch
      %2911 = sbr.rel (0) target = $region53
    $region52: #{tpu_custom_call.1} parent=1 // pred_region
      %2913 = vsyncadd [#allocation13], 0
      %s2914 = sshll.u32 [#allocation14], 4
      %s2915 = int_to_ptr.vmem [resolvable:$true] %s2914
      %s2916 = sshll.u32 %s6, 4
      %s2917 = int_to_ptr.hbm [resolvable:$true] %s2916
      %2922 = dma.vmem_to_hbm [thread:$0]  %s2915, 2048, %s2917, [#allocation13], 64, 64, 4
    $region53: #{tpu_custom_call.1} parent=1 // pred_fallthru
      _
    // Predicated region
    $region54: #{tpu_custom_call.1} parent=1 // pred_check
      _
    $region55: #{tpu_custom_call.1} parent=1 // pred_check_branch
      %2924 = sbr.rel (0) target = $region57
    $region56: #{tpu_custom_call.1} parent=1 // pred_region
      %2926 = dma.done [#allocation5], 4096
    $region57: #{tpu_custom_call.1} parent=1 // pred_fallthru
      _
    // Predicated region
    $region58: #{tpu_custom_call.1} parent=1 // pred_check
      _
    $region59: #{tpu_custom_call.1} parent=1 // pred_check_branch
      %2928 = sbr.rel (0) target = $region61
    $region60: #{tpu_custom_call.1} parent=1 // pred_region
      %2930 = dma.done [#allocation13], 2048
    $region61: #{tpu_custom_call.1} parent=1 // pred_fallthru
      _
    // Predicated region
    $region62: #{tpu_custom_call.1} parent=1 // pred_check
      _
    $region63: #{tpu_custom_call.1} parent=1 // pred_check_branch
      %2932 = sbr.rel (0) target = $region65
    $region64: #{tpu_custom_call.1} parent=1 // pred_region
      %2934 = dma.done [#allocation13], 2048
    $region65: #{tpu_custom_call.1} parent=1 // pred_fallthru
      _
    %2935 = vsyncpa [#allocation4], 1
    %2936 = vsyncpa [#allocation7], 1
    %2937 = vsyncpa [#allocation10], 1
    %2938 = vsyncpa [#allocation5], 1
    %2939 = vsyncpa [#allocation13], 1

</llo_original>
